<compile_context>
chip_gen: v6e
topology: v6e:2x2x1
jax: 0.10.0
libtpu: 0.0.40
codegen_flags: <defaults>
</compile_context>

<pallas_src>
import numpy as np
import jax
import jax.numpy as jnp
from jax import lax
from jax.experimental import pallas as pl
from jax.experimental.pallas import tpu as pltpu

# ---- static model configuration (args of the PyTorch module) ----
DIM = 32            # args.dim
LAYER_GNN = 3       # args.layer_gnn
LAYER_CNN = 3       # args.layer_cnn
LAYER_OUT = 2       # args.layer_output
WINDOW = 2          # args.window
KSIZE = 2 * WINDOW + 1
N_FINGERPRINT = 50
N_WORD_VOCAB = 60

# ---- example sizes / batching ----
N_ATOMS = 16
N_WORDS = 24
BATCH = 8
SAMPLES_PER_STEP = 4        # S samples folded into each grid step; grid = BATCH // S = 2
S_PAD = 8                   # sublane-aligned row count for the per-sample vectors

assert DIM % 8 == 0
assert BATCH % SAMPLES_PER_STEP == 0
assert (SAMPLES_PER_STEP * N_ATOMS) % 8 == 0
assert (SAMPLES_PER_STEP * N_WORDS) % 8 == 0
assert SAMPLES_PER_STEP <= S_PAD and LAYER_OUT >= 2


def cpi_kernel(fp_ref, adj_ref, wv_ref,
               w_gnn_ref, b_gnn_ref,
               t_conv_ref, b_conv_ref,
               w_att_ref, b_att_ref,
               gather_ref, seg_avg_ref, avg_atoms_ref,
               w_out0c_ref, w_out0p_ref, b_out0_ref,
               w_outr_ref, b_outr_ref,
               w_int_ref, b_int_ref,
               out_ref,
               x_ref, lhs_ref):
    D, Na, Nw = DIM, N_ATOMS, N_WORDS
    S, W, K = SAMPLES_PER_STEP, WINDOW, KSIZE

    # -------- GNN over S samples at once (block-diagonal adjacency => 1 matmul/layer) -----
    xs = fp_ref[...]                                        # [S*Na, D]
    A = adj_ref[...]                                        # [S*Na, S*Na] block-diagonal
    for l in range(LAYER_GNN):
        hs = jnp.maximum(
            jnp.dot(xs, w_gnn_ref[l], preferred_element_type=jnp.float32) + b_gnn_ref[l],
            0.0)
        xs = xs + jnp.dot(A, hs, preferred_element_type=jnp.float32)
    # per-sample mean over atoms as a tiny matmul; rows >= S are exactly zero
    compound = jnp.dot(avg_atoms_ref[...], xs, preferred_element_type=jnp.float32)   # [8, D]

    # -------- protein CNN: one lane-stacked matmul per layer (contraction K*D = 160) ------
    x_ref[...] = wv_ref[...]                                # current activation [S*Nw, D]

    # zero only the fixed halo rows of the lane-stacked LHS, once per grid step
    for di in range(K):
        o = di - W
        if o == 0:
            continue
        for s in range(S):
            if o > 0:
                lhs_ref[s * Nw + Nw - o: s * Nw + Nw, di * D:(di + 1) * D] = \
                    jnp.zeros((o, D), jnp.float32)
            else:
                lhs_ref[s * Nw: s * Nw - o, di * D:(di + 1) * D] = \
                    jnp.zeros((-o, D), jnp.float32)

    for l in range(LAYER_CNN):
        # center slab (no shift) covers all samples at once
        lhs_ref[:, W * D:(W + 1) * D] = x_ref[...]
        # shifted slabs, per sample (keeps samples independent across the row shift)
        for di in range(K):
            o = di - W
            if o == 0:
                continue
            lo_d, hi_d = max(0, -o), Nw - max(0, o)
            lo_s, hi_s = max(0, o), Nw + min(0, o)
            for s in range(S):
                lhs_ref[s * Nw + lo_d: s * Nw + hi_d, di * D:(di + 1) * D] = \
                    x_ref[s * Nw + lo_s: s * Nw + hi_s, :]
        y = jnp.maximum(
            jnp.dot(lhs_ref[...], t_conv_ref[l], preferred_element_type=jnp.float32)
            + b_conv_ref[l],                                # bias folded into the ReLU step
            0.0)                                            # [S*Nw, D]
        x_ref[...] = y
    xs_conv = x_ref[...]                                    # [S*Nw, D]

    # -------- attention (per-sample broadcast / mean as tiny matmuls) ----------------------
    hs_a = jnp.maximum(
        jnp.dot(xs_conv, w_att_ref[...], preferred_element_type=jnp.float32) + b_att_ref[...],
        0.0)                                                # [S*Nw, D]
    h_c = jnp.maximum(
        jnp.dot(compound, w_att_ref[...], preferred_element_type=jnp.float32) + b_att_ref[...],
        0.0)                                                # [8, D]
    h_rows = jnp.dot(gather_ref[...], h_c, preferred_element_type=jnp.float32)   # [S*Nw, D]
    # weights^T = tanh(hs . h) as a lane reduction (no transposes)
    wts = jnp.tanh(jnp.sum(hs_a * h_rows, axis=1, keepdims=True))                # [S*Nw, 1]
    protein = jnp.dot(seg_avg_ref[...], wts * hs_a,
                      preferred_element_type=jnp.float32)   # [8, D], rows >= S are zero

    # -------- output MLP (W_out[0] split => no lane concat / cat scratch) ------------------
    cur = jnp.maximum(
        jnp.dot(compound, w_out0c_ref[...], preferred_element_type=jnp.float32)
        + jnp.dot(protein, w_out0p_ref[...], preferred_element_type=jnp.float32)
        + b_out0_ref[...], 0.0)                             # [8, 2D]
    for j in range(LAYER_OUT - 1):
        cur = jnp.maximum(
            jnp.dot(cur, w_outr_ref[j], preferred_element_type=jnp.float32) + b_outr_ref[j],
            0.0)
    # W_interaction padded to 128 lanes host-side -> one unmasked [8,128] store
    out_ref[...] = (jnp.dot(cur, w_int_ref[...], preferred_element_type=jnp.float32)
                    + b_int_ref[...])


def build_conv_bands(w_conv):
    """Lane-stacked Toeplitz bands for the 1-channel KxK same-padded conv.

    T[l, di, c, j] = w_conv[l, di*K + (c - j + WINDOW)] if |c - j| <= WINDOW else 0, so
    out[i, :] = sum_di x_row_padded[i + di, :] @ T[l, di].  Bands are stacked along the
    contraction axis: returns [LAYER_CNN, KSIZE*DIM, DIM] so that the whole per-layer conv
    is one matmul against the [rows, KSIZE*DIM] lane-stacked LHS.
    """
    w3 = w_conv.reshape(LAYER_CNN, KSIZE, KSIZE).astype(jnp.float32)
    c = jnp.arange(DIM)[:, None]           # input-column index  (band row)
    j = jnp.arange(DIM)[None, :]           # output-column index (band col)
    dj = c - j + WINDOW
    valid = ((dj >= 0) & (dj < KSIZE)).astype(jnp.float32)
    dj_c = jnp.clip(dj, 0, KSIZE - 1)
    bands = w3[:, :, dj_c] * valid[None, None]              # [L, K, D, D]
    return bands.reshape(LAYER_CNN, KSIZE * DIM, DIM)


def cpi_forward(fingerprints, adjacency, words, params):
    """Batched forward. fingerprints: [B, N_ATOMS] int32, adjacency: [B, N_ATOMS, N_ATOMS],
    words: [B, N_WORDS] int32. Returns [B, 2]."""
    B = fingerprints.shape[0]
    S = SAMPLES_PER_STEP
    G = B // S
    D = DIM

    # Embedding gathers are glue (data-dependent gather kept in plain JAX), stacked row-wise.
    fp_vec = jnp.take(params["embed_fp"], fingerprints, axis=0).reshape(B * N_ATOMS, D)
    wv = jnp.take(params["embed_word"], words, axis=0).reshape(B * N_WORDS, D)

    # Block-diagonal adjacency per grid step: [G, S*Na, S*Na]
    eye_s = jnp.eye(S, dtype=jnp.float32)
    adj_bd = jnp.einsum('gsij,st->gsitj',
                        adjacency.reshape(G, S, N_ATOMS, N_ATOMS).astype(jnp.float32),
                        eye_s).reshape(G, S * N_ATOMS, S * N_ATOMS)

    t_conv = build_conv_bands(params["w_conv"])                    # [L, K*D, D]
    b_conv = jnp.broadcast_to(params["b_conv"].reshape(LAYER_CNN, 1, 1),
                              (LAYER_CNN, 1, D)).astype(jnp.float32)

    # Fixed per-step selection / averaging matrices (rows >= S are zero).
    avg_atoms = np.zeros((S_PAD, S * N_ATOMS), np.float32)
    seg_avg = np.zeros((S_PAD, S * N_WORDS), np.float32)
    gather = np.zeros((S * N_WORDS, S_PAD), np.float32)
    for s in range(S):
        avg_atoms[s, s * N_ATOMS:(s + 1) * N_ATOMS] = 1.0 / N_ATOMS
        seg_avg[s, s * N_WORDS:(s + 1) * N_WORDS] = 1.0 / N_WORDS
        gather[s * N_WORDS:(s + 1) * N_WORDS, s] = 1.0
    avg_atoms = jnp.asarray(avg_atoms)
    seg_avg = jnp.asarray(seg_avg)
    gather = jnp.asarray(gather)

    # Split W_out[0] into compound / protein halves (concat-free first output layer).
    w_out0c = params["w_out"][0][:D]
    w_out0p = params["w_out"][0][D:]
    b_out0 = params["b_out"][0]
    w_outr = params["w_out"][1:]
    b_outr = params["b_out"][1:]

    # Lane-dense interaction head: pad [2D, 2] -> [2D, 128] with zeros.
    w_int_pad = jnp.zeros((2 * D, 128), jnp.float32).at[:, :2].set(params["w_int"])
    b_int_pad = jnp.zeros((1, 128), jnp.float32).at[:, :2].set(params["b_int"])

    def resident(shape):
        zeros = (0,) * len(shape)
        return pl.BlockSpec(shape, lambda g, zeros=zeros: zeros)

    out = pl.pallas_call(
        cpi_kernel,
        out_shape=jax.ShapeDtypeStruct((G, S_PAD, 128), jnp.float32),
        grid=(G,),
        in_specs=[
            pl.BlockSpec((S * N_ATOMS, D), lambda g: (g, 0)),               # fp_vec (stacked)
            pl.BlockSpec((None, S * N_ATOMS, S * N_ATOMS),
                         lambda g: (g, 0, 0)),                              # block-diag adjacency
            pl.BlockSpec((S * N_WORDS, D), lambda g: (g, 0)),               # word vectors (stacked)
            resident((LAYER_GNN, D, D)),                                    # w_gnn
            resident((LAYER_GNN, 1, D)),                                    # b_gnn
            resident((LAYER_CNN, KSIZE * D, D)),                            # stacked conv bands
            resident((LAYER_CNN, 1, D)),                                    # conv bias (lane-repl.)
            resident((D, D)),                                               # w_att
            resident((1, D)),                                               # b_att
            resident((S * N_WORDS, S_PAD)),                                 # per-sample one-hot gather
            resident((S_PAD, S * N_WORDS)),                                 # per-sample word mean
            resident((S_PAD, S * N_ATOMS)),                                 # per-sample atom mean
            resident((D, 2 * D)),                                           # w_out[0] compound half
            resident((D, 2 * D)),                                           # w_out[0] protein half
            resident((1, 2 * D)),                                           # b_out[0]
            resident((LAYER_OUT - 1, 2 * D, 2 * D)),                        # remaining w_out
            resident((LAYER_OUT - 1, 1, 2 * D)),                            # remaining b_out
            resident((2 * D, 128)),                                         # w_interaction (padded)
            resident((1, 128)),                                             # b_interaction (padded)
        ],
        out_specs=pl.BlockSpec((None, S_PAD, 128), lambda g: (g, 0, 0)),
        scratch_shapes=[
            pltpu.VMEM((S * N_WORDS, D), jnp.float32),          # current CNN activation
            pltpu.VMEM((S * N_WORDS, KSIZE * D), jnp.float32),  # lane-stacked conv LHS
        ],
        compiler_params=pltpu.CompilerParams(
            dimension_semantics=("parallel",)),                 # v7x: 2 grid steps / 2 TCs
    )(fp_vec, adj_bd, wv,
      params["w_gnn"], params["b_gnn"],
      t_conv, b_conv,
      params["w_att"], params["b_att"],
      gather, seg_avg, avg_atoms,
      w_out0c, w_out0p, b_out0,
      w_outr, b_outr,
      w_int_pad, b_int_pad)

    return out[:, :S, :2].reshape(B, 2)


def reference_forward_single(fingerprints, adjacency, words, params):
    """Pure-JAX per-sample reference mirroring the PyTorch forward (for validation)."""
    w = WINDOW
    xs = params["embed_fp"][fingerprints]
    for l in range(LAYER_GNN):
        hs = jax.nn.relu(xs @ params["w_gnn"][l] + params["b_gnn"][l][0])
        xs = xs + adjacency @ hs
    compound = jnp.mean(xs, axis=0, keepdims=True)

    x = params["embed_word"][words][None, None]          # NCHW = [1,1,Nw,D]
    for l in range(LAYER_CNN):
        ker = params["w_conv"][l].reshape(1, 1, KSIZE, KSIZE)
        x = lax.conv_general_dilated(
            x, ker, window_strides=(1, 1), padding=[(w, w), (w, w)],
            dimension_numbers=("NCHW", "OIHW", "NCHW"))
        x = jax.nn.relu(x + params["b_conv"][l, 0])
    xs_c = x[0, 0]

    h = jax.nn.relu(compound @ params["w_att"] + params["b_att"])
    hs = jax.nn.relu(xs_c @ params["w_att"] + params["b_att"])
    weights = jnp.tanh(h @ hs.T)
    ys = weights.T * hs
    protein = jnp.mean(ys, axis=0, keepdims=True)

    cat = jnp.concatenate([compound, protein], axis=1)
    for j in range(LAYER_OUT):
        cat = jax.nn.relu(cat @ params["w_out"][j] + params["b_out"][j][0])
    return cat @ params["w_int"] + params["b_int"]


def init_params(key):
    ks = jax.random.split(key, 12)
    D, s = DIM, 0.1
    p = dict(
        embed_fp=jax.random.normal(ks[0], (N_FINGERPRINT, D)) * s,
        embed_word=jax.random.normal(ks[1], (N_WORD_VOCAB, D)) * s,
        w_gnn=jax.random.normal(ks[2], (LAYER_GNN, D, D)) * s,
        b_gnn=jax.random.normal(ks[3], (LAYER_GNN, 1, D)) * s,
        w_conv=jax.random.normal(ks[4], (LAYER_CNN, KSIZE * KSIZE)) * s,
        b_conv=jax.random.normal(ks[5], (LAYER_CNN, 1)) * s,
        w_att=jax.random.normal(ks[6], (D, D)) * s,
        b_att=jax.random.normal(ks[7], (1, D)) * s,
        w_out=jax.random.normal(ks[8], (LAYER_OUT, 2 * D, 2 * D)) * s,
        b_out=jax.random.normal(ks[9], (LAYER_OUT, 1, 2 * D)) * s,
        w_int=jax.random.normal(ks[10], (2 * D, 2)) * s,
        b_int=jax.random.normal(ks[11], (1, 2)) * s,
    )
    return {k: v.astype(jnp.float32) for k, v in p.items()}


if __name__ == "__main__":
    key = jax.random.PRNGKey(0)
    k1, k2, k3, kp = jax.random.split(key, 4)

    fingerprints = jax.random.randint(k1, (BATCH, N_ATOMS), 0, N_FINGERPRINT, dtype=jnp.int32)
    words = jax.random.randint(k2, (BATCH, N_WORDS), 0, N_WORD_VOCAB, dtype=jnp.int32)
    adjacency = (jax.random.uniform(k3, (BATCH, N_ATOMS, N_ATOMS)) < 0.3).astype(jnp.float32)
    adjacency = jnp.maximum(adjacency, jnp.swapaxes(adjacency, -1, -2))

    params = init_params(kp)

    # TODO(synk): the module's __call__ train/eval heads (cross_entropy / softmax + argmax)
    # are host-side glue and are not part of the kernelized forward.

    out = cpi_forward(fingerprints, adjacency, words, params)
    out = jax.block_until_ready(out)
    assert out.shape == (BATCH, 2)

    ref = jnp.concatenate(
        [reference_forward_single(fingerprints[i], adjacency[i], words[i], params)
         for i in range(BATCH)], axis=0)
    np.testing.assert_allclose(np.asarray(out), np.asarray(ref), rtol=1e-4, atol=1e-4)
    print("KERNEL_OK")
</pallas_src>

<mosaic_0001>
module attributes {stable_mosaic.version = 11 : i64} {
  func.func @cpi_kernel(%arg0: i32, %arg1: memref<64x32xf32, #tpu.memory_space<vmem>>, %arg2: memref<1x64x64xf32, #tpu.memory_space<vmem>>, %arg3: memref<96x32xf32, #tpu.memory_space<vmem>>, %arg4: memref<3x32x32xf32, #tpu.memory_space<vmem>>, %arg5: memref<3x1x32xf32, #tpu.memory_space<vmem>>, %arg6: memref<3x160x32xf32, #tpu.memory_space<vmem>>, %arg7: memref<3x1x32xf32, #tpu.memory_space<vmem>>, %arg8: memref<32x32xf32, #tpu.memory_space<vmem>>, %arg9: memref<1x32xf32, #tpu.memory_space<vmem>>, %arg10: memref<96x8xf32, #tpu.memory_space<vmem>>, %arg11: memref<8x96xf32, #tpu.memory_space<vmem>>, %arg12: memref<8x64xf32, #tpu.memory_space<vmem>>, %arg13: memref<32x64xf32, #tpu.memory_space<vmem>>, %arg14: memref<32x64xf32, #tpu.memory_space<vmem>>, %arg15: memref<1x64xf32, #tpu.memory_space<vmem>>, %arg16: memref<1x64x64xf32, #tpu.memory_space<vmem>>, %arg17: memref<1x1x64xf32, #tpu.memory_space<vmem>>, %arg18: memref<64x128xf32, #tpu.memory_space<vmem>>, %arg19: memref<1x128xf32, #tpu.memory_space<vmem>>, %arg20: memref<1x8x128xf32, #tpu.memory_space<vmem>>, %arg21: memref<96x32xf32, #tpu.memory_space<vmem>>, %arg22: memref<96x160xf32, #tpu.memory_space<vmem>>) attributes {dimension_semantics = [#tpu.dimension_semantics<parallel>], iteration_bounds = array<i64: 2>, scalar_prefetch = 0 : i64, scratch_operands = 2 : i64, tpu.core_type = #tpu.core_type<tc>, window_params = [{transform_indices = @transform_0, window_bounds = array<i64: 64, 32>}, {transform_indices = @transform_1, window_bounds = array<i64: 1, 64, 64>}, {transform_indices = @transform_2, window_bounds = array<i64: 96, 32>}, {pipeline_mode = #tpu.pipeline_mode<synchronous>, transform_indices = @transform_3, window_bounds = array<i64: 3, 32, 32>}, {pipeline_mode = #tpu.pipeline_mode<synchronous>, transform_indices = @transform_4, window_bounds = array<i64: 3, 1, 32>}, {pipeline_mode = #tpu.pipeline_mode<synchronous>, transform_indices = @transform_5, window_bounds = array<i64: 3, 160, 32>}, {pipeline_mode = #tpu.pipeline_mode<synchronous>, transform_indices = @transform_6, window_bounds = array<i64: 3, 1, 32>}, {pipeline_mode = #tpu.pipeline_mode<synchronous>, transform_indices = @transform_7, window_bounds = array<i64: 32, 32>}, {pipeline_mode = #tpu.pipeline_mode<synchronous>, transform_indices = @transform_8, window_bounds = array<i64: 1, 32>}, {pipeline_mode = #tpu.pipeline_mode<synchronous>, transform_indices = @transform_9, window_bounds = array<i64: 96, 8>}, {pipeline_mode = #tpu.pipeline_mode<synchronous>, transform_indices = @transform_10, window_bounds = array<i64: 8, 96>}, {pipeline_mode = #tpu.pipeline_mode<synchronous>, transform_indices = @transform_11, window_bounds = array<i64: 8, 64>}, {pipeline_mode = #tpu.pipeline_mode<synchronous>, transform_indices = @transform_12, window_bounds = array<i64: 32, 64>}, {pipeline_mode = #tpu.pipeline_mode<synchronous>, transform_indices = @transform_13, window_bounds = array<i64: 32, 64>}, {pipeline_mode = #tpu.pipeline_mode<synchronous>, transform_indices = @transform_14, window_bounds = array<i64: 1, 64>}, {pipeline_mode = #tpu.pipeline_mode<synchronous>, transform_indices = @transform_15, window_bounds = array<i64: 1, 64, 64>}, {pipeline_mode = #tpu.pipeline_mode<synchronous>, transform_indices = @transform_16, window_bounds = array<i64: 1, 1, 64>}, {pipeline_mode = #tpu.pipeline_mode<synchronous>, transform_indices = @transform_17, window_bounds = array<i64: 64, 128>}, {pipeline_mode = #tpu.pipeline_mode<synchronous>, transform_indices = @transform_18, window_bounds = array<i64: 1, 128>}, {transform_indices = @transform_19, window_bounds = array<i64: 1, 8, 128>}]} {
    %c0 = arith.constant 0 : index
    %c0_0 = arith.constant 0 : index
    %0 = vector.load %arg1[%c0, %c0_0] : memref<64x32xf32, #tpu.memory_space<vmem>>, vector<64x32xf32>
    %c0_1 = arith.constant 0 : index
    %c0_2 = arith.constant 0 : index
    %c0_3 = arith.constant 0 : index
    %1 = vector.load %arg2[%c0_1, %c0_2, %c0_3] : memref<1x64x64xf32, #tpu.memory_space<vmem>>, vector<1x64x64xf32>
    %2 = vector.shape_cast %1 : vector<1x64x64xf32> to vector<64x64xf32>
    %c0_4 = arith.constant 0 : index
    %c0_5 = arith.constant 0 : index
    %c0_6 = arith.constant 0 : index
    %3 = vector.load %arg4[%c0_4, %c0_5, %c0_6] : memref<3x32x32xf32, #tpu.memory_space<vmem>>, vector<1x32x32xf32>
    %4 = vector.shape_cast %3 : vector<1x32x32xf32> to vector<32x32xf32>
    %cst = arith.constant dense<0.000000e+00> : vector<64x32xf32>
    %5 = tpu.matmul %0, %4, %cst {dimension_numbers = #tpu.dot_dimension_numbers<[1], [0], [0], [1], [0, 0, 1, 1], [], []>} : vector<64x32xf32>, vector<32x32xf32>, vector<64x32xf32> -> vector<64x32xf32>
    %c0_7 = arith.constant 0 : index
    %c0_8 = arith.constant 0 : index
    %c0_9 = arith.constant 0 : index
    %6 = vector.load %arg5[%c0_7, %c0_8, %c0_9] : memref<3x1x32xf32, #tpu.memory_space<vmem>>, vector<1x1x32xf32>
    %7 = vector.shape_cast %6 : vector<1x1x32xf32> to vector<1x32xf32>
    %8 = vector.broadcast %7 : vector<1x32xf32> to vector<64x32xf32>
    %9 = arith.addf %5, %8 : vector<64x32xf32>
    %cst_10 = arith.constant 0.000000e+00 : f32
    %10 = vector.broadcast %cst_10 : f32 to vector<64x32xf32>
    %11 = arith.maximumf %9, %10 : vector<64x32xf32>
    %cst_11 = arith.constant dense<0.000000e+00> : vector<64x32xf32>
    %12 = tpu.matmul %2, %11, %cst_11 {dimension_numbers = #tpu.dot_dimension_numbers<[1], [0], [0], [1], [0, 0, 1, 1], [], []>} : vector<64x64xf32>, vector<64x32xf32>, vector<64x32xf32> -> vector<64x32xf32>
    %13 = arith.addf %0, %12 : vector<64x32xf32>
    %c1 = arith.constant 1 : index
    %c0_12 = arith.constant 0 : index
    %c0_13 = arith.constant 0 : index
    %14 = vector.load %arg4[%c1, %c0_12, %c0_13] : memref<3x32x32xf32, #tpu.memory_space<vmem>>, vector<1x32x32xf32>
    %15 = vector.shape_cast %14 : vector<1x32x32xf32> to vector<32x32xf32>
    %cst_14 = arith.constant dense<0.000000e+00> : vector<64x32xf32>
    %16 = tpu.matmul %13, %15, %cst_14 {dimension_numbers = #tpu.dot_dimension_numbers<[1], [0], [0], [1], [0, 0, 1, 1], [], []>} : vector<64x32xf32>, vector<32x32xf32>, vector<64x32xf32> -> vector<64x32xf32>
    %c1_15 = arith.constant 1 : index
    %c0_16 = arith.constant 0 : index
    %c0_17 = arith.constant 0 : index
    %17 = vector.load %arg5[%c1_15, %c0_16, %c0_17] : memref<3x1x32xf32, #tpu.memory_space<vmem>>, vector<1x1x32xf32>
    %18 = vector.shape_cast %17 : vector<1x1x32xf32> to vector<1x32xf32>
    %19 = vector.broadcast %18 : vector<1x32xf32> to vector<64x32xf32>
    %20 = arith.addf %16, %19 : vector<64x32xf32>
    %cst_18 = arith.constant 0.000000e+00 : f32
    %21 = vector.broadcast %cst_18 : f32 to vector<64x32xf32>
    %22 = arith.maximumf %20, %21 : vector<64x32xf32>
    %cst_19 = arith.constant dense<0.000000e+00> : vector<64x32xf32>
    %23 = tpu.matmul %2, %22, %cst_19 {dimension_numbers = #tpu.dot_dimension_numbers<[1], [0], [0], [1], [0, 0, 1, 1], [], []>} : vector<64x64xf32>, vector<64x32xf32>, vector<64x32xf32> -> vector<64x32xf32>
    %24 = arith.addf %13, %23 : vector<64x32xf32>
    %c2 = arith.constant 2 : index
    %c0_20 = arith.constant 0 : index
    %c0_21 = arith.constant 0 : index
    %25 = vector.load %arg4[%c2, %c0_20, %c0_21] : memref<3x32x32xf32, #tpu.memory_space<vmem>>, vector<1x32x32xf32>
    %26 = vector.shape_cast %25 : vector<1x32x32xf32> to vector<32x32xf32>
    %cst_22 = arith.constant dense<0.000000e+00> : vector<64x32xf32>
    %27 = tpu.matmul %24, %26, %cst_22 {dimension_numbers = #tpu.dot_dimension_numbers<[1], [0], [0], [1], [0, 0, 1, 1], [], []>} : vector<64x32xf32>, vector<32x32xf32>, vector<64x32xf32> -> vector<64x32xf32>
    %c2_23 = arith.constant 2 : index
    %c0_24 = arith.constant 0 : index
    %c0_25 = arith.constant 0 : index
    %28 = vector.load %arg5[%c2_23, %c0_24, %c0_25] : memref<3x1x32xf32, #tpu.memory_space<vmem>>, vector<1x1x32xf32>
    %29 = vector.shape_cast %28 : vector<1x1x32xf32> to vector<1x32xf32>
    %30 = vector.broadcast %29 : vector<1x32xf32> to vector<64x32xf32>
    %31 = arith.addf %27, %30 : vector<64x32xf32>
    %cst_26 = arith.constant 0.000000e+00 : f32
    %32 = vector.broadcast %cst_26 : f32 to vector<64x32xf32>
    %33 = arith.maximumf %31, %32 : vector<64x32xf32>
    %cst_27 = arith.constant dense<0.000000e+00> : vector<64x32xf32>
    %34 = tpu.matmul %2, %33, %cst_27 {dimension_numbers = #tpu.dot_dimension_numbers<[1], [0], [0], [1], [0, 0, 1, 1], [], []>} : vector<64x64xf32>, vector<64x32xf32>, vector<64x32xf32> -> vector<64x32xf32>
    %35 = arith.addf %24, %34 : vector<64x32xf32>
    %c0_28 = arith.constant 0 : index
    %c0_29 = arith.constant 0 : index
    %36 = vector.load %arg12[%c0_28, %c0_29] : memref<8x64xf32, #tpu.memory_space<vmem>>, vector<8x64xf32>
    %cst_30 = arith.constant dense<0.000000e+00> : vector<8x32xf32>
    %37 = tpu.matmul %36, %35, %cst_30 {dimension_numbers = #tpu.dot_dimension_numbers<[1], [0], [0], [1], [0, 0, 1, 1], [], []>} : vector<8x64xf32>, vector<64x32xf32>, vector<8x32xf32> -> vector<8x32xf32>
    %c0_31 = arith.constant 0 : index
    %c0_32 = arith.constant 0 : index
    %38 = vector.load %arg3[%c0_31, %c0_32] : memref<96x32xf32, #tpu.memory_space<vmem>>, vector<96x32xf32>
    %c0_33 = arith.constant 0 : index
    %c0_34 = arith.constant 0 : index
    %39 = vector.load %arg21[%c0_33, %c0_34] : memref<96x32xf32, #tpu.memory_space<vmem>>, vector<96x32xf32>
    tpu.vector_store %arg21[%c0_33, %c0_34], %38 {strides = array<i32>} : memref<96x32xf32, #tpu.memory_space<vmem>>, vector<96x32xf32>,
    %cst_35 = arith.constant 0.000000e+00 : f32
    %40 = vector.broadcast %cst_35 : f32 to vector<2x32xf32>
    %c0_36 = arith.constant 0 : index
    %c0_37 = arith.constant 0 : index
    %41 = vector.load %arg22[%c0_36, %c0_37] : memref<96x160xf32, #tpu.memory_space<vmem>>, vector<2x32xf32>
    tpu.vector_store %arg22[%c0_36, %c0_37], %40 {strides = array<i32>} : memref<96x160xf32, #tpu.memory_space<vmem>>, vector<2x32xf32>,
    %cst_38 = arith.constant 0.000000e+00 : f32
    %42 = vector.broadcast %cst_38 : f32 to vector<2x32xf32>
    %c24 = arith.constant 24 : index
    %c0_39 = arith.constant 0 : index
    %43 = vector.load %arg22[%c24, %c0_39] : memref<96x160xf32, #tpu.memory_space<vmem>>, vector<2x32xf32>
    tpu.vector_store %arg22[%c24, %c0_39], %42 {strides = array<i32>} : memref<96x160xf32, #tpu.memory_space<vmem>>, vector<2x32xf32>,
    %cst_40 = arith.constant 0.000000e+00 : f32
    %44 = vector.broadcast %cst_40 : f32 to vector<2x32xf32>
    %c48 = arith.constant 48 : index
    %c0_41 = arith.constant 0 : index
    %45 = vector.load %arg22[%c48, %c0_41] : memref<96x160xf32, #tpu.memory_space<vmem>>, vector<2x32xf32>
    tpu.vector_store %arg22[%c48, %c0_41], %44 {strides = array<i32>} : memref<96x160xf32, #tpu.memory_space<vmem>>, vector<2x32xf32>,
    %cst_42 = arith.constant 0.000000e+00 : f32
    %46 = vector.broadcast %cst_42 : f32 to vector<2x32xf32>
    %c72 = arith.constant 72 : index
    %c0_43 = arith.constant 0 : index
    %47 = vector.load %arg22[%c72, %c0_43] : memref<96x160xf32, #tpu.memory_space<vmem>>, vector<2x32xf32>
    tpu.vector_store %arg22[%c72, %c0_43], %46 {strides = array<i32>} : memref<96x160xf32, #tpu.memory_space<vmem>>, vector<2x32xf32>,
    %cst_44 = arith.constant 0.000000e+00 : f32
    %48 = vector.broadcast %cst_44 : f32 to vector<1x32xf32>
    %c0_45 = arith.constant 0 : index
    %c32 = arith.constant 32 : index
    %49 = vector.load %arg22[%c0_45, %c32] : memref<96x160xf32, #tpu.memory_space<vmem>>, vector<1x32xf32>
    tpu.vector_store %arg22[%c0_45, %c32], %48 {strides = array<i32>} : memref<96x160xf32, #tpu.memory_space<vmem>>, vector<1x32xf32>,
    %cst_46 = arith.constant 0.000000e+00 : f32
    %50 = vector.broadcast %cst_46 : f32 to vector<1x32xf32>
    %c24_47 = arith.constant 24 : index
    %c32_48 = arith.constant 32 : index
    %51 = vector.load %arg22[%c24_47, %c32_48] : memref<96x160xf32, #tpu.memory_space<vmem>>, vector<1x32xf32>
    tpu.vector_store %arg22[%c24_47, %c32_48], %50 {strides = array<i32>} : memref<96x160xf32, #tpu.memory_space<vmem>>, vector<1x32xf32>,
    %cst_49 = arith.constant 0.000000e+00 : f32
    %52 = vector.broadcast %cst_49 : f32 to vector<1x32xf32>
    %c48_50 = arith.constant 48 : index
    %c32_51 = arith.constant 32 : index
    %53 = vector.load %arg22[%c48_50, %c32_51] : memref<96x160xf32, #tpu.memory_space<vmem>>, vector<1x32xf32>
    tpu.vector_store %arg22[%c48_50, %c32_51], %52 {strides = array<i32>} : memref<96x160xf32, #tpu.memory_space<vmem>>, vector<1x32xf32>,
    %cst_52 = arith.constant 0.000000e+00 : f32
    %54 = vector.broadcast %cst_52 : f32 to vector<1x32xf32>
    %c72_53 = arith.constant 72 : index
    %c32_54 = arith.constant 32 : index
    %55 = vector.load %arg22[%c72_53, %c32_54] : memref<96x160xf32, #tpu.memory_space<vmem>>, vector<1x32xf32>
    tpu.vector_store %arg22[%c72_53, %c32_54], %54 {strides = array<i32>} : memref<96x160xf32, #tpu.memory_space<vmem>>, vector<1x32xf32>,
    %cst_55 = arith.constant 0.000000e+00 : f32
    %56 = vector.broadcast %cst_55 : f32 to vector<1x32xf32>
    %c23 = arith.constant 23 : index
    %c96 = arith.constant 96 : index
    %57 = vector.load %arg22[%c23, %c96] : memref<96x160xf32, #tpu.memory_space<vmem>>, vector<1x32xf32>
    tpu.vector_store %arg22[%c23, %c96], %56 {strides = array<i32>} : memref<96x160xf32, #tpu.memory_space<vmem>>, vector<1x32xf32>,
    %cst_56 = arith.constant 0.000000e+00 : f32
    %58 = vector.broadcast %cst_56 : f32 to vector<1x32xf32>
    %c47 = arith.constant 47 : index
    %c96_57 = arith.constant 96 : index
    %59 = vector.load %arg22[%c47, %c96_57] : memref<96x160xf32, #tpu.memory_space<vmem>>, vector<1x32xf32>
    tpu.vector_store %arg22[%c47, %c96_57], %58 {strides = array<i32>} : memref<96x160xf32, #tpu.memory_space<vmem>>, vector<1x32xf32>,
    %cst_58 = arith.constant 0.000000e+00 : f32
    %60 = vector.broadcast %cst_58 : f32 to vector<1x32xf32>
    %c71 = arith.constant 71 : index
    %c96_59 = arith.constant 96 : index
    %61 = vector.load %arg22[%c71, %c96_59] : memref<96x160xf32, #tpu.memory_space<vmem>>, vector<1x32xf32>
    tpu.vector_store %arg22[%c71, %c96_59], %60 {strides = array<i32>} : memref<96x160xf32, #tpu.memory_space<vmem>>, vector<1x32xf32>,
    %cst_60 = arith.constant 0.000000e+00 : f32
    %62 = vector.broadcast %cst_60 : f32 to vector<1x32xf32>
    %c95 = arith.constant 95 : index
    %c96_61 = arith.constant 96 : index
    %63 = vector.load %arg22[%c95, %c96_61] : memref<96x160xf32, #tpu.memory_space<vmem>>, vector<1x32xf32>
    tpu.vector_store %arg22[%c95, %c96_61], %62 {strides = array<i32>} : memref<96x160xf32, #tpu.memory_space<vmem>>, vector<1x32xf32>,
    %cst_62 = arith.constant 0.000000e+00 : f32
    %64 = vector.broadcast %cst_62 : f32 to vector<2x32xf32>
    %c22 = arith.constant 22 : index
    %c128 = arith.constant 128 : index
    %65 = vector.load %arg22[%c22, %c128] : memref<96x160xf32, #tpu.memory_space<vmem>>, vector<2x32xf32>
    tpu.vector_store %arg22[%c22, %c128], %64 {strides = array<i32>} : memref<96x160xf32, #tpu.memory_space<vmem>>, vector<2x32xf32>,
    %cst_63 = arith.constant 0.000000e+00 : f32
    %66 = vector.broadcast %cst_63 : f32 to vector<2x32xf32>
    %c46 = arith.constant 46 : index
    %c128_64 = arith.constant 128 : index
    %67 = vector.load %arg22[%c46, %c128_64] : memref<96x160xf32, #tpu.memory_space<vmem>>, vector<2x32xf32>
    tpu.vector_store %arg22[%c46, %c128_64], %66 {strides = array<i32>} : memref<96x160xf32, #tpu.memory_space<vmem>>, vector<2x32xf32>,
    %cst_65 = arith.constant 0.000000e+00 : f32
    %68 = vector.broadcast %cst_65 : f32 to vector<2x32xf32>
    %c70 = arith.constant 70 : index
    %c128_66 = arith.constant 128 : index
    %69 = vector.load %arg22[%c70, %c128_66] : memref<96x160xf32, #tpu.memory_space<vmem>>, vector<2x32xf32>
    tpu.vector_store %arg22[%c70, %c128_66], %68 {strides = array<i32>} : memref<96x160xf32, #tpu.memory_space<vmem>>, vector<2x32xf32>,
    %cst_67 = arith.constant 0.000000e+00 : f32
    %70 = vector.broadcast %cst_67 : f32 to vector<2x32xf32>
    %c94 = arith.constant 94 : index
    %c128_68 = arith.constant 128 : index
    %71 = vector.load %arg22[%c94, %c128_68] : memref<96x160xf32, #tpu.memory_space<vmem>>, vector<2x32xf32>
    tpu.vector_store %arg22[%c94, %c128_68], %70 {strides = array<i32>} : memref<96x160xf32, #tpu.memory_space<vmem>>, vector<2x32xf32>,
    %c0_69 = arith.constant 0 : index
    %c0_70 = arith.constant 0 : index
    %72 = vector.load %arg21[%c0_69, %c0_70] : memref<96x32xf32, #tpu.memory_space<vmem>>, vector<96x32xf32>
    %c0_71 = arith.constant 0 : index
    %c64 = arith.constant 64 : index
    %73 = vector.load %arg22[%c0_71, %c64] : memref<96x160xf32, #tpu.memory_space<vmem>>, vector<96x32xf32>
    tpu.vector_store %arg22[%c0_71, %c64], %72 {strides = array<i32>} : memref<96x160xf32, #tpu.memory_space<vmem>>, vector<96x32xf32>,
    %c0_72 = arith.constant 0 : index
    %c0_73 = arith.constant 0 : index
    %74 = vector.load %arg21[%c0_72, %c0_73] : memref<96x32xf32, #tpu.memory_space<vmem>>, vector<22x32xf32>
    %c2_74 = arith.constant 2 : index
    %c0_75 = arith.constant 0 : index
    %75 = vector.load %arg22[%c2_74, %c0_75] : memref<96x160xf32, #tpu.memory_space<vmem>>, vector<22x32xf32>
    tpu.vector_store %arg22[%c2_74, %c0_75], %74 {strides = array<i32>} : memref<96x160xf32, #tpu.memory_space<vmem>>, vector<22x32xf32>,
    %c24_76 = arith.constant 24 : index
    %c0_77 = arith.constant 0 : index
    %76 = vector.load %arg21[%c24_76, %c0_77] : memref<96x32xf32, #tpu.memory_space<vmem>>, vector<22x32xf32>
    %c26 = arith.constant 26 : index
    %c0_78 = arith.constant 0 : index
    %77 = vector.load %arg22[%c26, %c0_78] : memref<96x160xf32, #tpu.memory_space<vmem>>, vector<22x32xf32>
    tpu.vector_store %arg22[%c26, %c0_78], %76 {strides = array<i32>} : memref<96x160xf32, #tpu.memory_space<vmem>>, vector<22x32xf32>,
    %c48_79 = arith.constant 48 : index
    %c0_80 = arith.constant 0 : index
    %78 = vector.load %arg21[%c48_79, %c0_80] : memref<96x32xf32, #tpu.memory_space<vmem>>, vector<22x32xf32>
    %c50 = arith.constant 50 : index
    %c0_81 = arith.constant 0 : index
    %79 = vector.load %arg22[%c50, %c0_81] : memref<96x160xf32, #tpu.memory_space<vmem>>, vector<22x32xf32>
    tpu.vector_store %arg22[%c50, %c0_81], %78 {strides = array<i32>} : memref<96x160xf32, #tpu.memory_space<vmem>>, vector<22x32xf32>,
    %c72_82 = arith.constant 72 : index
    %c0_83 = arith.constant 0 : index
    %80 = vector.load %arg21[%c72_82, %c0_83] : memref<96x32xf32, #tpu.memory_space<vmem>>, vector<22x32xf32>
    %c74 = arith.constant 74 : index
    %c0_84 = arith.constant 0 : index
    %81 = vector.load %arg22[%c74, %c0_84] : memref<96x160xf32, #tpu.memory_space<vmem>>, vector<22x32xf32>
    tpu.vector_store %arg22[%c74, %c0_84], %80 {strides = array<i32>} : memref<96x160xf32, #tpu.memory_space<vmem>>, vector<22x32xf32>,
    %c0_85 = arith.constant 0 : index
    %c0_86 = arith.constant 0 : index
    %82 = vector.load %arg21[%c0_85, %c0_86] : memref<96x32xf32, #tpu.memory_space<vmem>>, vector<23x32xf32>
    %c1_87 = arith.constant 1 : index
    %c32_88 = arith.constant 32 : index
    %83 = vector.load %arg22[%c1_87, %c32_88] : memref<96x160xf32, #tpu.memory_space<vmem>>, vector<23x32xf32>
    tpu.vector_store %arg22[%c1_87, %c32_88], %82 {strides = array<i32>} : memref<96x160xf32, #tpu.memory_space<vmem>>, vector<23x32xf32>,
    %c24_89 = arith.constant 24 : index
    %c0_90 = arith.constant 0 : index
    %84 = vector.load %arg21[%c24_89, %c0_90] : memref<96x32xf32, #tpu.memory_space<vmem>>, vector<23x32xf32>
    %c25 = arith.constant 25 : index
    %c32_91 = arith.constant 32 : index
    %85 = vector.load %arg22[%c25, %c32_91] : memref<96x160xf32, #tpu.memory_space<vmem>>, vector<23x32xf32>
    tpu.vector_store %arg22[%c25, %c32_91], %84 {strides = array<i32>} : memref<96x160xf32, #tpu.memory_space<vmem>>, vector<23x32xf32>,
    %c48_92 = arith.constant 48 : index
    %c0_93 = arith.constant 0 : index
    %86 = vector.load %arg21[%c48_92, %c0_93] : memref<96x32xf32, #tpu.memory_space<vmem>>, vector<23x32xf32>
    %c49 = arith.constant 49 : index
    %c32_94 = arith.constant 32 : index
    %87 = vector.load %arg22[%c49, %c32_94] : memref<96x160xf32, #tpu.memory_space<vmem>>, vector<23x32xf32>
    tpu.vector_store %arg22[%c49, %c32_94], %86 {strides = array<i32>} : memref<96x160xf32, #tpu.memory_space<vmem>>, vector<23x32xf32>,
    %c72_95 = arith.constant 72 : index
    %c0_96 = arith.constant 0 : index
    %88 = vector.load %arg21[%c72_95, %c0_96] : memref<96x32xf32, #tpu.memory_space<vmem>>, vector<23x32xf32>
    %c73 = arith.constant 73 : index
    %c32_97 = arith.constant 32 : index
    %89 = vector.load %arg22[%c73, %c32_97] : memref<96x160xf32, #tpu.memory_space<vmem>>, vector<23x32xf32>
    tpu.vector_store %arg22[%c73, %c32_97], %88 {strides = array<i32>} : memref<96x160xf32, #tpu.memory_space<vmem>>, vector<23x32xf32>,
    %c1_98 = arith.constant 1 : index
    %c0_99 = arith.constant 0 : index
    %90 = vector.load %arg21[%c1_98, %c0_99] : memref<96x32xf32, #tpu.memory_space<vmem>>, vector<23x32xf32>
    %c0_100 = arith.constant 0 : index
    %c96_101 = arith.constant 96 : index
    %91 = vector.load %arg22[%c0_100, %c96_101] : memref<96x160xf32, #tpu.memory_space<vmem>>, vector<23x32xf32>
    tpu.vector_store %arg22[%c0_100, %c96_101], %90 {strides = array<i32>} : memref<96x160xf32, #tpu.memory_space<vmem>>, vector<23x32xf32>,
    %c25_102 = arith.constant 25 : index
    %c0_103 = arith.constant 0 : index
    %92 = vector.load %arg21[%c25_102, %c0_103] : memref<96x32xf32, #tpu.memory_space<vmem>>, vector<23x32xf32>
    %c24_104 = arith.constant 24 : index
    %c96_105 = arith.constant 96 : index
    %93 = vector.load %arg22[%c24_104, %c96_105] : memref<96x160xf32, #tpu.memory_space<vmem>>, vector<23x32xf32>
    tpu.vector_store %arg22[%c24_104, %c96_105], %92 {strides = array<i32>} : memref<96x160xf32, #tpu.memory_space<vmem>>, vector<23x32xf32>,
    %c49_106 = arith.constant 49 : index
    %c0_107 = arith.constant 0 : index
    %94 = vector.load %arg21[%c49_106, %c0_107] : memref<96x32xf32, #tpu.memory_space<vmem>>, vector<23x32xf32>
    %c48_108 = arith.constant 48 : index
    %c96_109 = arith.constant 96 : index
    %95 = vector.load %arg22[%c48_108, %c96_109] : memref<96x160xf32, #tpu.memory_space<vmem>>, vector<23x32xf32>
    tpu.vector_store %arg22[%c48_108, %c96_109], %94 {strides = array<i32>} : memref<96x160xf32, #tpu.memory_space<vmem>>, vector<23x32xf32>,
    %c73_110 = arith.constant 73 : index
    %c0_111 = arith.constant 0 : index
    %96 = vector.load %arg21[%c73_110, %c0_111] : memref<96x32xf32, #tpu.memory_space<vmem>>, vector<23x32xf32>
    %c72_112 = arith.constant 72 : index
    %c96_113 = arith.constant 96 : index
    %97 = vector.load %arg22[%c72_112, %c96_113] : memref<96x160xf32, #tpu.memory_space<vmem>>, vector<23x32xf32>
    tpu.vector_store %arg22[%c72_112, %c96_113], %96 {strides = array<i32>} : memref<96x160xf32, #tpu.memory_space<vmem>>, vector<23x32xf32>,
    %c2_114 = arith.constant 2 : index
    %c0_115 = arith.constant 0 : index
    %98 = vector.load %arg21[%c2_114, %c0_115] : memref<96x32xf32, #tpu.memory_space<vmem>>, vector<22x32xf32>
    %c0_116 = arith.constant 0 : index
    %c128_117 = arith.constant 128 : index
    %99 = vector.load %arg22[%c0_116, %c128_117] : memref<96x160xf32, #tpu.memory_space<vmem>>, vector<22x32xf32>
    tpu.vector_store %arg22[%c0_116, %c128_117], %98 {strides = array<i32>} : memref<96x160xf32, #tpu.memory_space<vmem>>, vector<22x32xf32>,
    %c26_118 = arith.constant 26 : index
    %c0_119 = arith.constant 0 : index
    %100 = vector.load %arg21[%c26_118, %c0_119] : memref<96x32xf32, #tpu.memory_space<vmem>>, vector<22x32xf32>
    %c24_120 = arith.constant 24 : index
    %c128_121 = arith.constant 128 : index
    %101 = vector.load %arg22[%c24_120, %c128_121] : memref<96x160xf32, #tpu.memory_space<vmem>>, vector<22x32xf32>
    tpu.vector_store %arg22[%c24_120, %c128_121], %100 {strides = array<i32>} : memref<96x160xf32, #tpu.memory_space<vmem>>, vector<22x32xf32>,
    %c50_122 = arith.constant 50 : index
    %c0_123 = arith.constant 0 : index
    %102 = vector.load %arg21[%c50_122, %c0_123] : memref<96x32xf32, #tpu.memory_space<vmem>>, vector<22x32xf32>
    %c48_124 = arith.constant 48 : index
    %c128_125 = arith.constant 128 : index
    %103 = vector.load %arg22[%c48_124, %c128_125] : memref<96x160xf32, #tpu.memory_space<vmem>>, vector<22x32xf32>
    tpu.vector_store %arg22[%c48_124, %c128_125], %102 {strides = array<i32>} : memref<96x160xf32, #tpu.memory_space<vmem>>, vector<22x32xf32>,
    %c74_126 = arith.constant 74 : index
    %c0_127 = arith.constant 0 : index
    %104 = vector.load %arg21[%c74_126, %c0_127] : memref<96x32xf32, #tpu.memory_space<vmem>>, vector<22x32xf32>
    %c72_128 = arith.constant 72 : index
    %c128_129 = arith.constant 128 : index
    %105 = vector.load %arg22[%c72_128, %c128_129] : memref<96x160xf32, #tpu.memory_space<vmem>>, vector<22x32xf32>
    tpu.vector_store %arg22[%c72_128, %c128_129], %104 {strides = array<i32>} : memref<96x160xf32, #tpu.memory_space<vmem>>, vector<22x32xf32>,
    %c0_130 = arith.constant 0 : index
    %c0_131 = arith.constant 0 : index
    %106 = vector.load %arg22[%c0_130, %c0_131] : memref<96x160xf32, #tpu.memory_space<vmem>>, vector<96x160xf32>
    %c0_132 = arith.constant 0 : index
    %c0_133 = arith.constant 0 : index
    %c0_134 = arith.constant 0 : index
    %107 = vector.load %arg6[%c0_132, %c0_133, %c0_134] : memref<3x160x32xf32, #tpu.memory_space<vmem>>, vector<1x160x32xf32>
    %108 = vector.shape_cast %107 : vector<1x160x32xf32> to vector<160x32xf32>
    %cst_135 = arith.constant dense<0.000000e+00> : vector<96x32xf32>
    %109 = tpu.matmul %106, %108, %cst_135 {dimension_numbers = #tpu.dot_dimension_numbers<[1], [0], [0], [1], [0, 0, 1, 1], [], []>} : vector<96x160xf32>, vector<160x32xf32>, vector<96x32xf32> -> vector<96x32xf32>
    %c0_136 = arith.constant 0 : index
    %c0_137 = arith.constant 0 : index
    %c0_138 = arith.constant 0 : index
    %110 = vector.load %arg7[%c0_136, %c0_137, %c0_138] : memref<3x1x32xf32, #tpu.memory_space<vmem>>, vector<1x1x32xf32>
    %111 = vector.shape_cast %110 : vector<1x1x32xf32> to vector<1x32xf32>
    %112 = vector.broadcast %111 : vector<1x32xf32> to vector<96x32xf32>
    %113 = arith.addf %109, %112 : vector<96x32xf32>
    %cst_139 = arith.constant 0.000000e+00 : f32
    %114 = vector.broadcast %cst_139 : f32 to vector<96x32xf32>
    %115 = arith.maximumf %113, %114 : vector<96x32xf32>
    %c0_140 = arith.constant 0 : index
    %c0_141 = arith.constant 0 : index
    %116 = vector.load %arg21[%c0_140, %c0_141] : memref<96x32xf32, #tpu.memory_space<vmem>>, vector<96x32xf32>
    tpu.vector_store %arg21[%c0_140, %c0_141], %115 {strides = array<i32>} : memref<96x32xf32, #tpu.memory_space<vmem>>, vector<96x32xf32>,
    %c0_142 = arith.constant 0 : index
    %c0_143 = arith.constant 0 : index
    %117 = vector.load %arg21[%c0_142, %c0_143] : memref<96x32xf32, #tpu.memory_space<vmem>>, vector<96x32xf32>
    %c0_144 = arith.constant 0 : index
    %c64_145 = arith.constant 64 : index
    %118 = vector.load %arg22[%c0_144, %c64_145] : memref<96x160xf32, #tpu.memory_space<vmem>>, vector<96x32xf32>
    tpu.vector_store %arg22[%c0_144, %c64_145], %117 {strides = array<i32>} : memref<96x160xf32, #tpu.memory_space<vmem>>, vector<96x32xf32>,
    %c0_146 = arith.constant 0 : index
    %c0_147 = arith.constant 0 : index
    %119 = vector.load %arg21[%c0_146, %c0_147] : memref<96x32xf32, #tpu.memory_space<vmem>>, vector<22x32xf32>
    %c2_148 = arith.constant 2 : index
    %c0_149 = arith.constant 0 : index
    %120 = vector.load %arg22[%c2_148, %c0_149] : memref<96x160xf32, #tpu.memory_space<vmem>>, vector<22x32xf32>
    tpu.vector_store %arg22[%c2_148, %c0_149], %119 {strides = array<i32>} : memref<96x160xf32, #tpu.memory_space<vmem>>, vector<22x32xf32>,
    %c24_150 = arith.constant 24 : index
    %c0_151 = arith.constant 0 : index
    %121 = vector.load %arg21[%c24_150, %c0_151] : memref<96x32xf32, #tpu.memory_space<vmem>>, vector<22x32xf32>
    %c26_152 = arith.constant 26 : index
    %c0_153 = arith.constant 0 : index
    %122 = vector.load %arg22[%c26_152, %c0_153] : memref<96x160xf32, #tpu.memory_space<vmem>>, vector<22x32xf32>
    tpu.vector_store %arg22[%c26_152, %c0_153], %121 {strides = array<i32>} : memref<96x160xf32, #tpu.memory_space<vmem>>, vector<22x32xf32>,
    %c48_154 = arith.constant 48 : index
    %c0_155 = arith.constant 0 : index
    %123 = vector.load %arg21[%c48_154, %c0_155] : memref<96x32xf32, #tpu.memory_space<vmem>>, vector<22x32xf32>
    %c50_156 = arith.constant 50 : index
    %c0_157 = arith.constant 0 : index
    %124 = vector.load %arg22[%c50_156, %c0_157] : memref<96x160xf32, #tpu.memory_space<vmem>>, vector<22x32xf32>
    tpu.vector_store %arg22[%c50_156, %c0_157], %123 {strides = array<i32>} : memref<96x160xf32, #tpu.memory_space<vmem>>, vector<22x32xf32>,
    %c72_158 = arith.constant 72 : index
    %c0_159 = arith.constant 0 : index
    %125 = vector.load %arg21[%c72_158, %c0_159] : memref<96x32xf32, #tpu.memory_space<vmem>>, vector<22x32xf32>
    %c74_160 = arith.constant 74 : index
    %c0_161 = arith.constant 0 : index
    %126 = vector.load %arg22[%c74_160, %c0_161] : memref<96x160xf32, #tpu.memory_space<vmem>>, vector<22x32xf32>
    tpu.vector_store %arg22[%c74_160, %c0_161], %125 {strides = array<i32>} : memref<96x160xf32, #tpu.memory_space<vmem>>, vector<22x32xf32>,
    %c0_162 = arith.constant 0 : index
    %c0_163 = arith.constant 0 : index
    %127 = vector.load %arg21[%c0_162, %c0_163] : memref<96x32xf32, #tpu.memory_space<vmem>>, vector<23x32xf32>
    %c1_164 = arith.constant 1 : index
    %c32_165 = arith.constant 32 : index
    %128 = vector.load %arg22[%c1_164, %c32_165] : memref<96x160xf32, #tpu.memory_space<vmem>>, vector<23x32xf32>
    tpu.vector_store %arg22[%c1_164, %c32_165], %127 {strides = array<i32>} : memref<96x160xf32, #tpu.memory_space<vmem>>, vector<23x32xf32>,
    %c24_166 = arith.constant 24 : index
    %c0_167 = arith.constant 0 : index
    %129 = vector.load %arg21[%c24_166, %c0_167] : memref<96x32xf32, #tpu.memory_space<vmem>>, vector<23x32xf32>
    %c25_168 = arith.constant 25 : index
    %c32_169 = arith.constant 32 : index
    %130 = vector.load %arg22[%c25_168, %c32_169] : memref<96x160xf32, #tpu.memory_space<vmem>>, vector<23x32xf32>
    tpu.vector_store %arg22[%c25_168, %c32_169], %129 {strides = array<i32>} : memref<96x160xf32, #tpu.memory_space<vmem>>, vector<23x32xf32>,
    %c48_170 = arith.constant 48 : index
    %c0_171 = arith.constant 0 : index
    %131 = vector.load %arg21[%c48_170, %c0_171] : memref<96x32xf32, #tpu.memory_space<vmem>>, vector<23x32xf32>
    %c49_172 = arith.constant 49 : index
    %c32_173 = arith.constant 32 : index
    %132 = vector.load %arg22[%c49_172, %c32_173] : memref<96x160xf32, #tpu.memory_space<vmem>>, vector<23x32xf32>
    tpu.vector_store %arg22[%c49_172, %c32_173], %131 {strides = array<i32>} : memref<96x160xf32, #tpu.memory_space<vmem>>, vector<23x32xf32>,
    %c72_174 = arith.constant 72 : index
    %c0_175 = arith.constant 0 : index
    %133 = vector.load %arg21[%c72_174, %c0_175] : memref<96x32xf32, #tpu.memory_space<vmem>>, vector<23x32xf32>
    %c73_176 = arith.constant 73 : index
    %c32_177 = arith.constant 32 : index
    %134 = vector.load %arg22[%c73_176, %c32_177] : memref<96x160xf32, #tpu.memory_space<vmem>>, vector<23x32xf32>
    tpu.vector_store %arg22[%c73_176, %c32_177], %133 {strides = array<i32>} : memref<96x160xf32, #tpu.memory_space<vmem>>, vector<23x32xf32>,
    %c1_178 = arith.constant 1 : index
    %c0_179 = arith.constant 0 : index
    %135 = vector.load %arg21[%c1_178, %c0_179] : memref<96x32xf32, #tpu.memory_space<vmem>>, vector<23x32xf32>
    %c0_180 = arith.constant 0 : index
    %c96_181 = arith.constant 96 : index
    %136 = vector.load %arg22[%c0_180, %c96_181] : memref<96x160xf32, #tpu.memory_space<vmem>>, vector<23x32xf32>
    tpu.vector_store %arg22[%c0_180, %c96_181], %135 {strides = array<i32>} : memref<96x160xf32, #tpu.memory_space<vmem>>, vector<23x32xf32>,
    %c25_182 = arith.constant 25 : index
    %c0_183 = arith.constant 0 : index
    %137 = vector.load %arg21[%c25_182, %c0_183] : memref<96x32xf32, #tpu.memory_space<vmem>>, vector<23x32xf32>
    %c24_184 = arith.constant 24 : index
    %c96_185 = arith.constant 96 : index
    %138 = vector.load %arg22[%c24_184, %c96_185] : memref<96x160xf32, #tpu.memory_space<vmem>>, vector<23x32xf32>
    tpu.vector_store %arg22[%c24_184, %c96_185], %137 {strides = array<i32>} : memref<96x160xf32, #tpu.memory_space<vmem>>, vector<23x32xf32>,
    %c49_186 = arith.constant 49 : index
    %c0_187 = arith.constant 0 : index
    %139 = vector.load %arg21[%c49_186, %c0_187] : memref<96x32xf32, #tpu.memory_space<vmem>>, vector<23x32xf32>
    %c48_188 = arith.constant 48 : index
    %c96_189 = arith.constant 96 : index
    %140 = vector.load %arg22[%c48_188, %c96_189] : memref<96x160xf32, #tpu.memory_space<vmem>>, vector<23x32xf32>
    tpu.vector_store %arg22[%c48_188, %c96_189], %139 {strides = array<i32>} : memref<96x160xf32, #tpu.memory_space<vmem>>, vector<23x32xf32>,
    %c73_190 = arith.constant 73 : index
    %c0_191 = arith.constant 0 : index
    %141 = vector.load %arg21[%c73_190, %c0_191] : memref<96x32xf32, #tpu.memory_space<vmem>>, vector<23x32xf32>
    %c72_192 = arith.constant 72 : index
    %c96_193 = arith.constant 96 : index
    %142 = vector.load %arg22[%c72_192, %c96_193] : memref<96x160xf32, #tpu.memory_space<vmem>>, vector<23x32xf32>
    tpu.vector_store %arg22[%c72_192, %c96_193], %141 {strides = array<i32>} : memref<96x160xf32, #tpu.memory_space<vmem>>, vector<23x32xf32>,
    %c2_194 = arith.constant 2 : index
    %c0_195 = arith.constant 0 : index
    %143 = vector.load %arg21[%c2_194, %c0_195] : memref<96x32xf32, #tpu.memory_space<vmem>>, vector<22x32xf32>
    %c0_196 = arith.constant 0 : index
    %c128_197 = arith.constant 128 : index
    %144 = vector.load %arg22[%c0_196, %c128_197] : memref<96x160xf32, #tpu.memory_space<vmem>>, vector<22x32xf32>
    tpu.vector_store %arg22[%c0_196, %c128_197], %143 {strides = array<i32>} : memref<96x160xf32, #tpu.memory_space<vmem>>, vector<22x32xf32>,
    %c26_198 = arith.constant 26 : index
    %c0_199 = arith.constant 0 : index
    %145 = vector.load %arg21[%c26_198, %c0_199] : memref<96x32xf32, #tpu.memory_space<vmem>>, vector<22x32xf32>
    %c24_200 = arith.constant 24 : index
    %c128_201 = arith.constant 128 : index
    %146 = vector.load %arg22[%c24_200, %c128_201] : memref<96x160xf32, #tpu.memory_space<vmem>>, vector<22x32xf32>
    tpu.vector_store %arg22[%c24_200, %c128_201], %145 {strides = array<i32>} : memref<96x160xf32, #tpu.memory_space<vmem>>, vector<22x32xf32>,
    %c50_202 = arith.constant 50 : index
    %c0_203 = arith.constant 0 : index
    %147 = vector.load %arg21[%c50_202, %c0_203] : memref<96x32xf32, #tpu.memory_space<vmem>>, vector<22x32xf32>
    %c48_204 = arith.constant 48 : index
    %c128_205 = arith.constant 128 : index
    %148 = vector.load %arg22[%c48_204, %c128_205] : memref<96x160xf32, #tpu.memory_space<vmem>>, vector<22x32xf32>
    tpu.vector_store %arg22[%c48_204, %c128_205], %147 {strides = array<i32>} : memref<96x160xf32, #tpu.memory_space<vmem>>, vector<22x32xf32>,
    %c74_206 = arith.constant 74 : index
    %c0_207 = arith.constant 0 : index
    %149 = vector.load %arg21[%c74_206, %c0_207] : memref<96x32xf32, #tpu.memory_space<vmem>>, vector<22x32xf32>
    %c72_208 = arith.constant 72 : index
    %c128_209 = arith.constant 128 : index
    %150 = vector.load %arg22[%c72_208, %c128_209] : memref<96x160xf32, #tpu.memory_space<vmem>>, vector<22x32xf32>
    tpu.vector_store %arg22[%c72_208, %c128_209], %149 {strides = array<i32>} : memref<96x160xf32, #tpu.memory_space<vmem>>, vector<22x32xf32>,
    %c0_210 = arith.constant 0 : index
    %c0_211 = arith.constant 0 : index
    %151 = vector.load %arg22[%c0_210, %c0_211] : memref<96x160xf32, #tpu.memory_space<vmem>>, vector<96x160xf32>
    %c1_212 = arith.constant 1 : index
    %c0_213 = arith.constant 0 : index
    %c0_214 = arith.constant 0 : index
    %152 = vector.load %arg6[%c1_212, %c0_213, %c0_214] : memref<3x160x32xf32, #tpu.memory_space<vmem>>, vector<1x160x32xf32>
    %153 = vector.shape_cast %152 : vector<1x160x32xf32> to vector<160x32xf32>
    %cst_215 = arith.constant dense<0.000000e+00> : vector<96x32xf32>
    %154 = tpu.matmul %151, %153, %cst_215 {dimension_numbers = #tpu.dot_dimension_numbers<[1], [0], [0], [1], [0, 0, 1, 1], [], []>} : vector<96x160xf32>, vector<160x32xf32>, vector<96x32xf32> -> vector<96x32xf32>
    %c1_216 = arith.constant 1 : index
    %c0_217 = arith.constant 0 : index
    %c0_218 = arith.constant 0 : index
    %155 = vector.load %arg7[%c1_216, %c0_217, %c0_218] : memref<3x1x32xf32, #tpu.memory_space<vmem>>, vector<1x1x32xf32>
    %156 = vector.shape_cast %155 : vector<1x1x32xf32> to vector<1x32xf32>
    %157 = vector.broadcast %156 : vector<1x32xf32> to vector<96x32xf32>
    %158 = arith.addf %154, %157 : vector<96x32xf32>
    %cst_219 = arith.constant 0.000000e+00 : f32
    %159 = vector.broadcast %cst_219 : f32 to vector<96x32xf32>
    %160 = arith.maximumf %158, %159 : vector<96x32xf32>
    %c0_220 = arith.constant 0 : index
    %c0_221 = arith.constant 0 : index
    %161 = vector.load %arg21[%c0_220, %c0_221] : memref<96x32xf32, #tpu.memory_space<vmem>>, vector<96x32xf32>
    tpu.vector_store %arg21[%c0_220, %c0_221], %160 {strides = array<i32>} : memref<96x32xf32, #tpu.memory_space<vmem>>, vector<96x32xf32>,
    %c0_222 = arith.constant 0 : index
    %c0_223 = arith.constant 0 : index
    %162 = vector.load %arg21[%c0_222, %c0_223] : memref<96x32xf32, #tpu.memory_space<vmem>>, vector<96x32xf32>
    %c0_224 = arith.constant 0 : index
    %c64_225 = arith.constant 64 : index
    %163 = vector.load %arg22[%c0_224, %c64_225] : memref<96x160xf32, #tpu.memory_space<vmem>>, vector<96x32xf32>
    tpu.vector_store %arg22[%c0_224, %c64_225], %162 {strides = array<i32>} : memref<96x160xf32, #tpu.memory_space<vmem>>, vector<96x32xf32>,
    %c0_226 = arith.constant 0 : index
    %c0_227 = arith.constant 0 : index
    %164 = vector.load %arg21[%c0_226, %c0_227] : memref<96x32xf32, #tpu.memory_space<vmem>>, vector<22x32xf32>
    %c2_228 = arith.constant 2 : index
    %c0_229 = arith.constant 0 : index
    %165 = vector.load %arg22[%c2_228, %c0_229] : memref<96x160xf32, #tpu.memory_space<vmem>>, vector<22x32xf32>
    tpu.vector_store %arg22[%c2_228, %c0_229], %164 {strides = array<i32>} : memref<96x160xf32, #tpu.memory_space<vmem>>, vector<22x32xf32>,
    %c24_230 = arith.constant 24 : index
    %c0_231 = arith.constant 0 : index
    %166 = vector.load %arg21[%c24_230, %c0_231] : memref<96x32xf32, #tpu.memory_space<vmem>>, vector<22x32xf32>
    %c26_232 = arith.constant 26 : index
    %c0_233 = arith.constant 0 : index
    %167 = vector.load %arg22[%c26_232, %c0_233] : memref<96x160xf32, #tpu.memory_space<vmem>>, vector<22x32xf32>
    tpu.vector_store %arg22[%c26_232, %c0_233], %166 {strides = array<i32>} : memref<96x160xf32, #tpu.memory_space<vmem>>, vector<22x32xf32>,
    %c48_234 = arith.constant 48 : index
    %c0_235 = arith.constant 0 : index
    %168 = vector.load %arg21[%c48_234, %c0_235] : memref<96x32xf32, #tpu.memory_space<vmem>>, vector<22x32xf32>
    %c50_236 = arith.constant 50 : index
    %c0_237 = arith.constant 0 : index
    %169 = vector.load %arg22[%c50_236, %c0_237] : memref<96x160xf32, #tpu.memory_space<vmem>>, vector<22x32xf32>
    tpu.vector_store %arg22[%c50_236, %c0_237], %168 {strides = array<i32>} : memref<96x160xf32, #tpu.memory_space<vmem>>, vector<22x32xf32>,
    %c72_238 = arith.constant 72 : index
    %c0_239 = arith.constant 0 : index
    %170 = vector.load %arg21[%c72_238, %c0_239] : memref<96x32xf32, #tpu.memory_space<vmem>>, vector<22x32xf32>
    %c74_240 = arith.constant 74 : index
    %c0_241 = arith.constant 0 : index
    %171 = vector.load %arg22[%c74_240, %c0_241] : memref<96x160xf32, #tpu.memory_space<vmem>>, vector<22x32xf32>
    tpu.vector_store %arg22[%c74_240, %c0_241], %170 {strides = array<i32>} : memref<96x160xf32, #tpu.memory_space<vmem>>, vector<22x32xf32>,
    %c0_242 = arith.constant 0 : index
    %c0_243 = arith.constant 0 : index
    %172 = vector.load %arg21[%c0_242, %c0_243] : memref<96x32xf32, #tpu.memory_space<vmem>>, vector<23x32xf32>
    %c1_244 = arith.constant 1 : index
    %c32_245 = arith.constant 32 : index
    %173 = vector.load %arg22[%c1_244, %c32_245] : memref<96x160xf32, #tpu.memory_space<vmem>>, vector<23x32xf32>
    tpu.vector_store %arg22[%c1_244, %c32_245], %172 {strides = array<i32>} : memref<96x160xf32, #tpu.memory_space<vmem>>, vector<23x32xf32>,
    %c24_246 = arith.constant 24 : index
    %c0_247 = arith.constant 0 : index
    %174 = vector.load %arg21[%c24_246, %c0_247] : memref<96x32xf32, #tpu.memory_space<vmem>>, vector<23x32xf32>
    %c25_248 = arith.constant 25 : index
    %c32_249 = arith.constant 32 : index
    %175 = vector.load %arg22[%c25_248, %c32_249] : memref<96x160xf32, #tpu.memory_space<vmem>>, vector<23x32xf32>
    tpu.vector_store %arg22[%c25_248, %c32_249], %174 {strides = array<i32>} : memref<96x160xf32, #tpu.memory_space<vmem>>, vector<23x32xf32>,
    %c48_250 = arith.constant 48 : index
    %c0_251 = arith.constant 0 : index
    %176 = vector.load %arg21[%c48_250, %c0_251] : memref<96x32xf32, #tpu.memory_space<vmem>>, vector<23x32xf32>
    %c49_252 = arith.constant 49 : index
    %c32_253 = arith.constant 32 : index
    %177 = vector.load %arg22[%c49_252, %c32_253] : memref<96x160xf32, #tpu.memory_space<vmem>>, vector<23x32xf32>
    tpu.vector_store %arg22[%c49_252, %c32_253], %176 {strides = array<i32>} : memref<96x160xf32, #tpu.memory_space<vmem>>, vector<23x32xf32>,
    %c72_254 = arith.constant 72 : index
    %c0_255 = arith.constant 0 : index
    %178 = vector.load %arg21[%c72_254, %c0_255] : memref<96x32xf32, #tpu.memory_space<vmem>>, vector<23x32xf32>
    %c73_256 = arith.constant 73 : index
    %c32_257 = arith.constant 32 : index
    %179 = vector.load %arg22[%c73_256, %c32_257] : memref<96x160xf32, #tpu.memory_space<vmem>>, vector<23x32xf32>
    tpu.vector_store %arg22[%c73_256, %c32_257], %178 {strides = array<i32>} : memref<96x160xf32, #tpu.memory_space<vmem>>, vector<23x32xf32>,
    %c1_258 = arith.constant 1 : index
    %c0_259 = arith.constant 0 : index
    %180 = vector.load %arg21[%c1_258, %c0_259] : memref<96x32xf32, #tpu.memory_space<vmem>>, vector<23x32xf32>
    %c0_260 = arith.constant 0 : index
    %c96_261 = arith.constant 96 : index
    %181 = vector.load %arg22[%c0_260, %c96_261] : memref<96x160xf32, #tpu.memory_space<vmem>>, vector<23x32xf32>
    tpu.vector_store %arg22[%c0_260, %c96_261], %180 {strides = array<i32>} : memref<96x160xf32, #tpu.memory_space<vmem>>, vector<23x32xf32>,
    %c25_262 = arith.constant 25 : index
    %c0_263 = arith.constant 0 : index
    %182 = vector.load %arg21[%c25_262, %c0_263] : memref<96x32xf32, #tpu.memory_space<vmem>>, vector<23x32xf32>
    %c24_264 = arith.constant 24 : index
    %c96_265 = arith.constant 96 : index
    %183 = vector.load %arg22[%c24_264, %c96_265] : memref<96x160xf32, #tpu.memory_space<vmem>>, vector<23x32xf32>
    tpu.vector_store %arg22[%c24_264, %c96_265], %182 {strides = array<i32>} : memref<96x160xf32, #tpu.memory_space<vmem>>, vector<23x32xf32>,
    %c49_266 = arith.constant 49 : index
    %c0_267 = arith.constant 0 : index
    %184 = vector.load %arg21[%c49_266, %c0_267] : memref<96x32xf32, #tpu.memory_space<vmem>>, vector<23x32xf32>
    %c48_268 = arith.constant 48 : index
    %c96_269 = arith.constant 96 : index
    %185 = vector.load %arg22[%c48_268, %c96_269] : memref<96x160xf32, #tpu.memory_space<vmem>>, vector<23x32xf32>
    tpu.vector_store %arg22[%c48_268, %c96_269], %184 {strides = array<i32>} : memref<96x160xf32, #tpu.memory_space<vmem>>, vector<23x32xf32>,
    %c73_270 = arith.constant 73 : index
    %c0_271 = arith.constant 0 : index
    %186 = vector.load %arg21[%c73_270, %c0_271] : memref<96x32xf32, #tpu.memory_space<vmem>>, vector<23x32xf32>
    %c72_272 = arith.constant 72 : index
    %c96_273 = arith.constant 96 : index
    %187 = vector.load %arg22[%c72_272, %c96_273] : memref<96x160xf32, #tpu.memory_space<vmem>>, vector<23x32xf32>
    tpu.vector_store %arg22[%c72_272, %c96_273], %186 {strides = array<i32>} : memref<96x160xf32, #tpu.memory_space<vmem>>, vector<23x32xf32>,
    %c2_274 = arith.constant 2 : index
    %c0_275 = arith.constant 0 : index
    %188 = vector.load %arg21[%c2_274, %c0_275] : memref<96x32xf32, #tpu.memory_space<vmem>>, vector<22x32xf32>
    %c0_276 = arith.constant 0 : index
    %c128_277 = arith.constant 128 : index
    %189 = vector.load %arg22[%c0_276, %c128_277] : memref<96x160xf32, #tpu.memory_space<vmem>>, vector<22x32xf32>
    tpu.vector_store %arg22[%c0_276, %c128_277], %188 {strides = array<i32>} : memref<96x160xf32, #tpu.memory_space<vmem>>, vector<22x32xf32>,
    %c26_278 = arith.constant 26 : index
    %c0_279 = arith.constant 0 : index
    %190 = vector.load %arg21[%c26_278, %c0_279] : memref<96x32xf32, #tpu.memory_space<vmem>>, vector<22x32xf32>
    %c24_280 = arith.constant 24 : index
    %c128_281 = arith.constant 128 : index
    %191 = vector.load %arg22[%c24_280, %c128_281] : memref<96x160xf32, #tpu.memory_space<vmem>>, vector<22x32xf32>
    tpu.vector_store %arg22[%c24_280, %c128_281], %190 {strides = array<i32>} : memref<96x160xf32, #tpu.memory_space<vmem>>, vector<22x32xf32>,
    %c50_282 = arith.constant 50 : index
    %c0_283 = arith.constant 0 : index
    %192 = vector.load %arg21[%c50_282, %c0_283] : memref<96x32xf32, #tpu.memory_space<vmem>>, vector<22x32xf32>
    %c48_284 = arith.constant 48 : index
    %c128_285 = arith.constant 128 : index
    %193 = vector.load %arg22[%c48_284, %c128_285] : memref<96x160xf32, #tpu.memory_space<vmem>>, vector<22x32xf32>
    tpu.vector_store %arg22[%c48_284, %c128_285], %192 {strides = array<i32>} : memref<96x160xf32, #tpu.memory_space<vmem>>, vector<22x32xf32>,
    %c74_286 = arith.constant 74 : index
    %c0_287 = arith.constant 0 : index
    %194 = vector.load %arg21[%c74_286, %c0_287] : memref<96x32xf32, #tpu.memory_space<vmem>>, vector<22x32xf32>
    %c72_288 = arith.constant 72 : index
    %c128_289 = arith.constant 128 : index
    %195 = vector.load %arg22[%c72_288, %c128_289] : memref<96x160xf32, #tpu.memory_space<vmem>>, vector<22x32xf32>
    tpu.vector_store %arg22[%c72_288, %c128_289], %194 {strides = array<i32>} : memref<96x160xf32, #tpu.memory_space<vmem>>, vector<22x32xf32>,
    %c0_290 = arith.constant 0 : index
    %c0_291 = arith.constant 0 : index
    %196 = vector.load %arg22[%c0_290, %c0_291] : memref<96x160xf32, #tpu.memory_space<vmem>>, vector<96x160xf32>
    %c2_292 = arith.constant 2 : index
    %c0_293 = arith.constant 0 : index
    %c0_294 = arith.constant 0 : index
    %197 = vector.load %arg6[%c2_292, %c0_293, %c0_294] : memref<3x160x32xf32, #tpu.memory_space<vmem>>, vector<1x160x32xf32>
    %198 = vector.shape_cast %197 : vector<1x160x32xf32> to vector<160x32xf32>
    %cst_295 = arith.constant dense<0.000000e+00> : vector<96x32xf32>
    %199 = tpu.matmul %196, %198, %cst_295 {dimension_numbers = #tpu.dot_dimension_numbers<[1], [0], [0], [1], [0, 0, 1, 1], [], []>} : vector<96x160xf32>, vector<160x32xf32>, vector<96x32xf32> -> vector<96x32xf32>
    %c2_296 = arith.constant 2 : index
    %c0_297 = arith.constant 0 : index
    %c0_298 = arith.constant 0 : index
    %200 = vector.load %arg7[%c2_296, %c0_297, %c0_298] : memref<3x1x32xf32, #tpu.memory_space<vmem>>, vector<1x1x32xf32>
    %201 = vector.shape_cast %200 : vector<1x1x32xf32> to vector<1x32xf32>
    %202 = vector.broadcast %201 : vector<1x32xf32> to vector<96x32xf32>
    %203 = arith.addf %199, %202 : vector<96x32xf32>
    %cst_299 = arith.constant 0.000000e+00 : f32
    %204 = vector.broadcast %cst_299 : f32 to vector<96x32xf32>
    %205 = arith.maximumf %203, %204 : vector<96x32xf32>
    %c0_300 = arith.constant 0 : index
    %c0_301 = arith.constant 0 : index
    %206 = vector.load %arg21[%c0_300, %c0_301] : memref<96x32xf32, #tpu.memory_space<vmem>>, vector<96x32xf32>
    tpu.vector_store %arg21[%c0_300, %c0_301], %205 {strides = array<i32>} : memref<96x32xf32, #tpu.memory_space<vmem>>, vector<96x32xf32>,
    %c0_302 = arith.constant 0 : index
    %c0_303 = arith.constant 0 : index
    %207 = vector.load %arg21[%c0_302, %c0_303] : memref<96x32xf32, #tpu.memory_space<vmem>>, vector<96x32xf32>
    %c0_304 = arith.constant 0 : index
    %c0_305 = arith.constant 0 : index
    %208 = vector.load %arg8[%c0_304, %c0_305] : memref<32x32xf32, #tpu.memory_space<vmem>>, vector<32x32xf32>
    %cst_306 = arith.constant dense<0.000000e+00> : vector<96x32xf32>
    %209 = tpu.matmul %207, %208, %cst_306 {dimension_numbers = #tpu.dot_dimension_numbers<[1], [0], [0], [1], [0, 0, 1, 1], [], []>} : vector<96x32xf32>, vector<32x32xf32>, vector<96x32xf32> -> vector<96x32xf32>
    %c0_307 = arith.constant 0 : index
    %c0_308 = arith.constant 0 : index
    %210 = vector.load %arg9[%c0_307, %c0_308] : memref<1x32xf32, #tpu.memory_space<vmem>>, vector<1x32xf32>
    %211 = vector.broadcast %210 : vector<1x32xf32> to vector<96x32xf32>
    %212 = arith.addf %209, %211 : vector<96x32xf32>
    %cst_309 = arith.constant 0.000000e+00 : f32
    %213 = vector.broadcast %cst_309 : f32 to vector<96x32xf32>
    %214 = arith.maximumf %212, %213 : vector<96x32xf32>
    %c0_310 = arith.constant 0 : index
    %c0_311 = arith.constant 0 : index
    %215 = vector.load %arg8[%c0_310, %c0_311] : memref<32x32xf32, #tpu.memory_space<vmem>>, vector<32x32xf32>
    %cst_312 = arith.constant dense<0.000000e+00> : vector<8x32xf32>
    %216 = tpu.matmul %37, %215, %cst_312 {dimension_numbers = #tpu.dot_dimension_numbers<[1], [0], [0], [1], [0, 0, 1, 1], [], []>} : vector<8x32xf32>, vector<32x32xf32>, vector<8x32xf32> -> vector<8x32xf32>
    %c0_313 = arith.constant 0 : index
    %c0_314 = arith.constant 0 : index
    %217 = vector.load %arg9[%c0_313, %c0_314] : memref<1x32xf32, #tpu.memory_space<vmem>>, vector<1x32xf32>
    %218 = vector.broadcast %217 : vector<1x32xf32> to vector<8x32xf32>
    %219 = arith.addf %216, %218 : vector<8x32xf32>
    %cst_315 = arith.constant 0.000000e+00 : f32
    %220 = vector.broadcast %cst_315 : f32 to vector<8x32xf32>
    %221 = arith.maximumf %219, %220 : vector<8x32xf32>
    %c0_316 = arith.constant 0 : index
    %c0_317 = arith.constant 0 : index
    %222 = vector.load %arg10[%c0_316, %c0_317] : memref<96x8xf32, #tpu.memory_space<vmem>>, vector<96x8xf32>
    %cst_318 = arith.constant dense<0.000000e+00> : vector<96x32xf32>
    %223 = tpu.matmul %222, %221, %cst_318 {dimension_numbers = #tpu.dot_dimension_numbers<[1], [0], [0], [1], [0, 0, 1, 1], [], []>} : vector<96x8xf32>, vector<8x32xf32>, vector<96x32xf32> -> vector<96x32xf32>
    %224 = arith.mulf %214, %223 : vector<96x32xf32>
    %cst_319 = arith.constant dense<0.000000e+00> : vector<96xf32>
    %225 = vector.multi_reduction <add>, %224, %cst_319 [1] : vector<96x32xf32> to vector<96xf32>
    %226 = vector.shape_cast %225 : vector<96xf32> to vector<96x1xf32>
    %227 = math.tanh %226 : vector<96x1xf32>
    %c0_320 = arith.constant 0 : index
    %c0_321 = arith.constant 0 : index
    %228 = vector.load %arg11[%c0_320, %c0_321] : memref<8x96xf32, #tpu.memory_space<vmem>>, vector<8x96xf32>
    %229 = vector.broadcast %227 : vector<96x1xf32> to vector<96x32xf32>
    %230 = arith.mulf %229, %214 : vector<96x32xf32>
    %cst_322 = arith.constant dense<0.000000e+00> : vector<8x32xf32>
    %231 = tpu.matmul %228, %230, %cst_322 {dimension_numbers = #tpu.dot_dimension_numbers<[1], [0], [0], [1], [0, 0, 1, 1], [], []>} : vector<8x96xf32>, vector<96x32xf32>, vector<8x32xf32> -> vector<8x32xf32>
    %c0_323 = arith.constant 0 : index
    %c0_324 = arith.constant 0 : index
    %232 = vector.load %arg13[%c0_323, %c0_324] : memref<32x64xf32, #tpu.memory_space<vmem>>, vector<32x64xf32>
    %cst_325 = arith.constant dense<0.000000e+00> : vector<8x64xf32>
    %233 = tpu.matmul %37, %232, %cst_325 {dimension_numbers = #tpu.dot_dimension_numbers<[1], [0], [0], [1], [0, 0, 1, 1], [], []>} : vector<8x32xf32>, vector<32x64xf32>, vector<8x64xf32> -> vector<8x64xf32>
    %c0_326 = arith.constant 0 : index
    %c0_327 = arith.constant 0 : index
    %234 = vector.load %arg14[%c0_326, %c0_327] : memref<32x64xf32, #tpu.memory_space<vmem>>, vector<32x64xf32>
    %cst_328 = arith.constant dense<0.000000e+00> : vector<8x64xf32>
    %235 = tpu.matmul %231, %234, %cst_328 {dimension_numbers = #tpu.dot_dimension_numbers<[1], [0], [0], [1], [0, 0, 1, 1], [], []>} : vector<8x32xf32>, vector<32x64xf32>, vector<8x64xf32> -> vector<8x64xf32>
    %236 = arith.addf %233, %235 : vector<8x64xf32>
    %c0_329 = arith.constant 0 : index
    %c0_330 = arith.constant 0 : index
    %237 = vector.load %arg15[%c0_329, %c0_330] : memref<1x64xf32, #tpu.memory_space<vmem>>, vector<1x64xf32>
    %238 = vector.broadcast %237 : vector<1x64xf32> to vector<8x64xf32>
    %239 = arith.addf %236, %238 : vector<8x64xf32>
    %cst_331 = arith.constant 0.000000e+00 : f32
    %240 = vector.broadcast %cst_331 : f32 to vector<8x64xf32>
    %241 = arith.maximumf %239, %240 : vector<8x64xf32>
    %c0_332 = arith.constant 0 : index
    %c0_333 = arith.constant 0 : index
    %c0_334 = arith.constant 0 : index
    %242 = vector.load %arg16[%c0_332, %c0_333, %c0_334] : memref<1x64x64xf32, #tpu.memory_space<vmem>>, vector<1x64x64xf32>
    %243 = vector.shape_cast %242 : vector<1x64x64xf32> to vector<64x64xf32>
    %cst_335 = arith.constant dense<0.000000e+00> : vector<8x64xf32>
    %244 = tpu.matmul %241, %243, %cst_335 {dimension_numbers = #tpu.dot_dimension_numbers<[1], [0], [0], [1], [0, 0, 1, 1], [], []>} : vector<8x64xf32>, vector<64x64xf32>, vector<8x64xf32> -> vector<8x64xf32>
    %c0_336 = arith.constant 0 : index
    %c0_337 = arith.constant 0 : index
    %c0_338 = arith.constant 0 : index
    %245 = vector.load %arg17[%c0_336, %c0_337, %c0_338] : memref<1x1x64xf32, #tpu.memory_space<vmem>>, vector<1x1x64xf32>
    %246 = vector.shape_cast %245 : vector<1x1x64xf32> to vector<1x64xf32>
    %247 = vector.broadcast %246 : vector<1x64xf32> to vector<8x64xf32>
    %248 = arith.addf %244, %247 : vector<8x64xf32>
    %cst_339 = arith.constant 0.000000e+00 : f32
    %249 = vector.broadcast %cst_339 : f32 to vector<8x64xf32>
    %250 = arith.maximumf %248, %249 : vector<8x64xf32>
    %c0_340 = arith.constant 0 : index
    %c0_341 = arith.constant 0 : index
    %251 = vector.load %arg18[%c0_340, %c0_341] : memref<64x128xf32, #tpu.memory_space<vmem>>, vector<64x128xf32>
    %cst_342 = arith.constant dense<0.000000e+00> : vector<8x128xf32>
    %252 = tpu.matmul %250, %251, %cst_342 {dimension_numbers = #tpu.dot_dimension_numbers<[1], [0], [0], [1], [0, 0, 1, 1], [], []>} : vector<8x64xf32>, vector<64x128xf32>, vector<8x128xf32> -> vector<8x128xf32>
    %c0_343 = arith.constant 0 : index
    %c0_344 = arith.constant 0 : index
    %253 = vector.load %arg19[%c0_343, %c0_344] : memref<1x128xf32, #tpu.memory_space<vmem>>, vector<1x128xf32>
    %254 = vector.broadcast %253 : vector<1x128xf32> to vector<8x128xf32>
    %255 = arith.addf %252, %254 : vector<8x128xf32>
    %c0_345 = arith.constant 0 : index
    %c0_346 = arith.constant 0 : index
    %c0_347 = arith.constant 0 : index
    %256 = vector.load %arg20[%c0_345, %c0_346, %c0_347] : memref<1x8x128xf32, #tpu.memory_space<vmem>>, vector<1x8x128xf32>
    %257 = vector.shape_cast %256 : vector<1x8x128xf32> to vector<8x128xf32>
    %258 = vector.shape_cast %255 : vector<8x128xf32> to vector<1x8x128xf32>
    tpu.vector_store %arg20[%c0_345, %c0_346, %c0_347], %258 {strides = array<i32>} : memref<1x8x128xf32, #tpu.memory_space<vmem>>, vector<1x8x128xf32>,
    return
  }
  func.func @transform_0(%arg0: i32) -> (i32, i32) {
    %c0_i32 = arith.constant 0 : i32
    %c0_i32_0 = arith.constant 0 : i32
    return %arg0, %c0_i32 : i32, i32
  }
  func.func @transform_1(%arg0: i32) -> (i32, i32, i32) {
    %c0_i32 = arith.constant 0 : i32
    %c0_i32_0 = arith.constant 0 : i32
    %c0_i32_1 = arith.constant 0 : i32
    return %arg0, %c0_i32, %c0_i32_0 : i32, i32, i32
  }
  func.func @transform_2(%arg0: i32) -> (i32, i32) {
    %c0_i32 = arith.constant 0 : i32
    %c0_i32_0 = arith.constant 0 : i32
    return %arg0, %c0_i32 : i32, i32
  }
  func.func @transform_3(%arg0: i32) -> (i32, i32, i32) {
    %c0_i32 = arith.constant 0 : i32
    %c0_i32_0 = arith.constant 0 : i32
    %c0_i32_1 = arith.constant 0 : i32
    %c0_i32_2 = arith.constant 0 : i32
    return %c0_i32, %c0_i32_0, %c0_i32_1 : i32, i32, i32
  }
  func.func @transform_4(%arg0: i32) -> (i32, i32, i32) {
    %c0_i32 = arith.constant 0 : i32
    %c0_i32_0 = arith.constant 0 : i32
    %c0_i32_1 = arith.constant 0 : i32
    %c0_i32_2 = arith.constant 0 : i32
    return %c0_i32, %c0_i32_0, %c0_i32_1 : i32, i32, i32
  }
  func.func @transform_5(%arg0: i32) -> (i32, i32, i32) {
    %c0_i32 = arith.constant 0 : i32
    %c0_i32_0 = arith.constant 0 : i32
    %c0_i32_1 = arith.constant 0 : i32
    %c0_i32_2 = arith.constant 0 : i32
    return %c0_i32, %c0_i32_0, %c0_i32_1 : i32, i32, i32
  }
  func.func @transform_6(%arg0: i32) -> (i32, i32, i32) {
    %c0_i32 = arith.constant 0 : i32
    %c0_i32_0 = arith.constant 0 : i32
    %c0_i32_1 = arith.constant 0 : i32
    %c0_i32_2 = arith.constant 0 : i32
    return %c0_i32, %c0_i32_0, %c0_i32_1 : i32, i32, i32
  }
  func.func @transform_7(%arg0: i32) -> (i32, i32) {
    %c0_i32 = arith.constant 0 : i32
    %c0_i32_0 = arith.constant 0 : i32
    %c0_i32_1 = arith.constant 0 : i32
    return %c0_i32, %c0_i32_0 : i32, i32
  }
  func.func @transform_8(%arg0: i32) -> (i32, i32) {
    %c0_i32 = arith.constant 0 : i32
    %c0_i32_0 = arith.constant 0 : i32
    %c0_i32_1 = arith.constant 0 : i32
    return %c0_i32, %c0_i32_0 : i32, i32
  }
  func.func @transform_9(%arg0: i32) -> (i32, i32) {
    %c0_i32 = arith.constant 0 : i32
    %c0_i32_0 = arith.constant 0 : i32
    %c0_i32_1 = arith.constant 0 : i32
    return %c0_i32, %c0_i32_0 : i32, i32
  }
  func.func @transform_10(%arg0: i32) -> (i32, i32) {
    %c0_i32 = arith.constant 0 : i32
    %c0_i32_0 = arith.constant 0 : i32
    %c0_i32_1 = arith.constant 0 : i32
    return %c0_i32, %c0_i32_0 : i32, i32
  }
  func.func @transform_11(%arg0: i32) -> (i32, i32) {
    %c0_i32 = arith.constant 0 : i32
    %c0_i32_0 = arith.constant 0 : i32
    %c0_i32_1 = arith.constant 0 : i32
    return %c0_i32, %c0_i32_0 : i32, i32
  }
  func.func @transform_12(%arg0: i32) -> (i32, i32) {
    %c0_i32 = arith.constant 0 : i32
    %c0_i32_0 = arith.constant 0 : i32
    %c0_i32_1 = arith.constant 0 : i32
    return %c0_i32, %c0_i32_0 : i32, i32
  }
  func.func @transform_13(%arg0: i32) -> (i32, i32) {
    %c0_i32 = arith.constant 0 : i32
    %c0_i32_0 = arith.constant 0 : i32
    %c0_i32_1 = arith.constant 0 : i32
    return %c0_i32, %c0_i32_0 : i32, i32
  }
  func.func @transform_14(%arg0: i32) -> (i32, i32) {
    %c0_i32 = arith.constant 0 : i32
    %c0_i32_0 = arith.constant 0 : i32
    %c0_i32_1 = arith.constant 0 : i32
    return %c0_i32, %c0_i32_0 : i32, i32
  }
  func.func @transform_15(%arg0: i32) -> (i32, i32, i32) {
    %c0_i32 = arith.constant 0 : i32
    %c0_i32_0 = arith.constant 0 : i32
    %c0_i32_1 = arith.constant 0 : i32
    %c0_i32_2 = arith.constant 0 : i32
    return %c0_i32, %c0_i32_0, %c0_i32_1 : i32, i32, i32
  }
  func.func @transform_16(%arg0: i32) -> (i32, i32, i32) {
    %c0_i32 = arith.constant 0 : i32
    %c0_i32_0 = arith.constant 0 : i32
    %c0_i32_1 = arith.constant 0 : i32
    %c0_i32_2 = arith.constant 0 : i32
    return %c0_i32, %c0_i32_0, %c0_i32_1 : i32, i32, i32
  }
  func.func @transform_17(%arg0: i32) -> (i32, i32) {
    %c0_i32 = arith.constant 0 : i32
    %c0_i32_0 = arith.constant 0 : i32
    %c0_i32_1 = arith.constant 0 : i32
    return %c0_i32, %c0_i32_0 : i32, i32
  }
  func.func @transform_18(%arg0: i32) -> (i32, i32) {
    %c0_i32 = arith.constant 0 : i32
    %c0_i32_0 = arith.constant 0 : i32
    %c0_i32_1 = arith.constant 0 : i32
    return %c0_i32, %c0_i32_0 : i32, i32
  }
  func.func @transform_19(%arg0: i32) -> (i32, i32, i32) {
    %c0_i32 = arith.constant 0 : i32
    %c0_i32_0 = arith.constant 0 : i32
    %c0_i32_1 = arith.constant 0 : i32
    return %arg0, %c0_i32, %c0_i32_0 : i32, i32, i32
  }
}

</mosaic_0001>

<llo_original>
// kernel: tpu_custom_call.1
$region0: #{tpu_custom_call.1}
  #allocation0 [shape = 'u32[]', space=smem, size = 0x4, offset = 0x4, fixed_abs, tag = 'smem constant byte address 0x4 - core index']
  #allocation1 [shape = 'u32[144,128]{1,0:T(1,128)}', space=vmem, size = 0x12000, scoped, tag = 'internal scratch']
  #allocation2 [shape = 'f32[96,32]{1,0:T(8,128)}', space=vmem, size = 0xc000, scoped, tag = 'scratch operand']
  #allocation3 [shape = 'f32[96,160]{1,0:T(8,128)}', space=vmem, size = 0x18000, scoped, tag = 'scratch operand']
  %s0 = inlined_call_operand.vmem [shape: f32[128,32], index: 0, kind: input, shape index: {}]
  %s1 = inlined_call_operand.vmem [shape: f32[2,64,64], index: 1, kind: input, shape index: {}]
  %s2 = inlined_call_operand.vmem [shape: f32[192,32], index: 2, kind: input, shape index: {}]
  %s3 = inlined_call_operand.vmem [shape: f32[3,32,32], index: 3, kind: input, shape index: {}]
  %s4 = inlined_call_operand.vmem [shape: f32[3,1,32], index: 4, kind: input, shape index: {}]
  %s5 = inlined_call_operand.vmem [shape: f32[3,160,32], index: 5, kind: input, shape index: {}]
  %s6 = inlined_call_operand.vmem [shape: f32[3,1,32], index: 6, kind: input, shape index: {}]
  %s7 = inlined_call_operand.vmem [shape: f32[32,32], index: 7, kind: input, shape index: {}]
  %s8 = inlined_call_operand.vmem [shape: f32[1,32], index: 8, kind: input, shape index: {}]
  %s9 = inlined_call_operand.vmem [shape: f32[96,8], index: 9, kind: input, shape index: {}]
  %s10 = inlined_call_operand.vmem [shape: f32[8,96], index: 10, kind: input, shape index: {}]
  %s11 = inlined_call_operand.vmem [shape: f32[8,64], index: 11, kind: input, shape index: {}]
  %s12 = inlined_call_operand.vmem [shape: f32[32,64], index: 12, kind: input, shape index: {}]
  %s13 = inlined_call_operand.vmem [shape: f32[32,64], index: 13, kind: input, shape index: {}]
  %s14 = inlined_call_operand.vmem [shape: f32[1,64], index: 14, kind: input, shape index: {}]
  %s15 = inlined_call_operand.vmem [shape: f32[1,64,64], index: 15, kind: input, shape index: {}]
  %s16 = inlined_call_operand.vmem [shape: f32[1,1,64], index: 16, kind: input, shape index: {}]
  %s17 = inlined_call_operand.vmem [shape: f32[64,128], index: 17, kind: input, shape index: {}]
  %s18 = inlined_call_operand.vmem [shape: f32[1,128], index: 18, kind: input, shape index: {}]
  %s19 = inlined_call_operand.hbm [shape: f32[2,8,128], index: 19, kind: output, shape index: {}]
  %s20 = sld [smem:[#allocation0]]
  $region109: #{tpu_custom_call.1} parent=0
    _
  %s22 = ssub.s32 1, %s20
  %s23 = scalar_select 0, %s22, %s20
  $region1: #{tpu_custom_call.1} parent=0
    #allocation4 [shape = 'u8[8192]{0}', space=vmem, size = 0x2000, scoped, tag = 'output window, operand 0']
    #allocation5 [shape = 's32[2]{0}', space=sflag, size = 0x8, scoped, tag = 'scoped memory for tpu_custom_call.1']
    %24 = vsyncpa [#allocation5], 0
    %s25 = scalar_lea.sflag [#allocation5], 1
    %26 = vsyncpa %s25, 0
    loop: start=0, step=1, limit=4
    $region2: #{tpu_custom_call.1} parent=1 // loop_pre_header
      _
    $region3: #{tpu_custom_call.1} parent=1 // loop_header
      %s28 = sphi 0, %s32
      %p29 = scmp.ge.s32.totalorder %s28, 4
      %s38 = sphi 0, %s40
      %s41 = sphi 0, %s38
      %s42 = sphi 0, %s41
      %s58 = sphi 0, %s42
      %s64 = sphi 0, %s66
      %s67 = sphi 0, %s64
      %s68 = sphi 0, %s67
      %s84 = sphi 0, %s68
      %s90 = sphi 0, %s92
      %s93 = sphi 0, %s90
      %s94 = sphi 0, %s93
      %s110 = sphi 0, %s94
      %s114 = sphi 0, %s114
      %s116 = sphi 0, %s114
      %s117 = sphi 0, %s116
      %s131 = sphi 0, %s117
      %s135 = sphi 0, %s135
      %s137 = sphi 0, %s135
      %s138 = sphi 0, %s137
      %s152 = sphi 0, %s138
      %s156 = sphi 0, %s156
      %s158 = sphi 0, %s156
      %s159 = sphi 0, %s158
      %s173 = sphi 0, %s159
      %s177 = sphi 0, %s177
      %s179 = sphi 0, %s177
      %s180 = sphi 0, %s179
      %s194 = sphi 0, %s180
      %s198 = sphi 0, %s198
      %s200 = sphi 0, %s198
      %s201 = sphi 0, %s200
      %s215 = sphi 0, %s201
      %s219 = sphi 0, %s219
      %s221 = sphi 0, %s219
      %s222 = sphi 0, %s221
      %s236 = sphi 0, %s222
      %s240 = sphi 0, %s240
      %s242 = sphi 0, %s240
      %s243 = sphi 0, %s242
      %s257 = sphi 0, %s243
      %s261 = sphi 0, %s261
      %s263 = sphi 0, %s261
      %s264 = sphi 0, %s263
      %s278 = sphi 0, %s264
      %s282 = sphi 0, %s282
      %s284 = sphi 0, %s282
      %s285 = sphi 0, %s284
      %s299 = sphi 0, %s285
      %s303 = sphi 0, %s303
      %s305 = sphi 0, %s303
      %s306 = sphi 0, %s305
      %s320 = sphi 0, %s306
      %s324 = sphi 0, %s324
      %s326 = sphi 0, %s324
      %s327 = sphi 0, %s326
      %s341 = sphi 0, %s327
      %s345 = sphi 0, %s345
      %s347 = sphi 0, %s345
      %s348 = sphi 0, %s347
      %s362 = sphi 0, %s348
      %s366 = sphi 0, %s366
      %s368 = sphi 0, %s366
      %s369 = sphi 0, %s368
      %s383 = sphi 0, %s369
      %s387 = sphi 0, %s387
      %s389 = sphi 0, %s387
      %s390 = sphi 0, %s389
      %s404 = sphi 0, %s390
      %s408 = sphi 0, %s408
      %s410 = sphi 0, %s408
      %s411 = sphi 0, %s410
      %s425 = sphi 0, %s411
      %s429 = sphi 0, %s429
      %s431 = sphi 0, %s429
      %s432 = sphi 0, %s431
      %s446 = sphi 0, %s432
      %s452 = sphi 0, %s454
      %s455 = sphi 0, %s452
      %s456 = sphi 0, %s455
      %s472 = sphi 0, %s456
    $region4: #{tpu_custom_call.1} parent=1 // loop_header_branch
      %31 = sbr.rel (%p29) target = $region8
    $region5: #{tpu_custom_call.1} parent=1 // loop_body
      %s33 = ssub.s32 %s28, 1
      %s34 = ssub.s32 %s28, 2
      %s35 = sadd.s32 %s28, 1
      %s36 = ssub.s32 %s28, %s35
      %p37 = scmp.eq.s32.totalorder %s36, 0
      %s39 = sadd.s32 %s38, 1
      %s40 = scalar_select %p37, %s38, %s39
      %p43 = pneg %p37
      %p44 = scmp.eq.s32.totalorder %s28, 1
      %p45 = por %p43, %p44
      %p46 = scmp.ne.s32.totalorder %s38, %s41
      %p47 = scmp.eq.s32.totalorder %s28, 0
      %p48 = por %p46, %p47
      %p49 = scmp.ne.s32.totalorder %s38, %s41
      %p50 = scmp.eq.s32.totalorder %s33, 1
      %p51 = por %p49, %p50
      %p52 = scmp.ne.s32.totalorder %s41, %s42
      %p53 = scmp.eq.s32.totalorder %s33, 0
      %p54 = por %p52, %p53
      %p55 = scmp.ne.s32.totalorder %s41, %s42
      %p56 = scmp.eq.s32.totalorder %s34, 1
      %p57 = por %p55, %p56
      %p59 = scmp.ne.s32.totalorder %s42, %s58
      %p60 = scmp.eq.s32.totalorder %s34, 0
      %p61 = por %p59, %p60
      %s62 = ssub.s32 %s28, %s35
      %p63 = scmp.eq.s32.totalorder %s62, 0
      %s65 = sadd.s32 %s64, 1
      %s66 = scalar_select %p63, %s64, %s65
      %p69 = pneg %p63
      %p70 = scmp.eq.s32.totalorder %s28, 1
      %p71 = por %p69, %p70
      %p72 = scmp.ne.s32.totalorder %s64, %s67
      %p73 = scmp.eq.s32.totalorder %s28, 0
      %p74 = por %p72, %p73
      %p75 = scmp.ne.s32.totalorder %s64, %s67
      %p76 = scmp.eq.s32.totalorder %s33, 1
      %p77 = por %p75, %p76
      %p78 = scmp.ne.s32.totalorder %s67, %s68
      %p79 = scmp.eq.s32.totalorder %s33, 0
      %p80 = por %p78, %p79
      %p81 = scmp.ne.s32.totalorder %s67, %s68
      %p82 = scmp.eq.s32.totalorder %s34, 1
      %p83 = por %p81, %p82
      %p85 = scmp.ne.s32.totalorder %s68, %s84
      %p86 = scmp.eq.s32.totalorder %s34, 0
      %p87 = por %p85, %p86
      %s88 = ssub.s32 %s28, %s35
      %p89 = scmp.eq.s32.totalorder %s88, 0
      %s91 = sadd.s32 %s90, 1
      %s92 = scalar_select %p89, %s90, %s91
      %p95 = pneg %p89
      %p96 = scmp.eq.s32.totalorder %s28, 1
      %p97 = por %p95, %p96
      %p98 = scmp.ne.s32.totalorder %s90, %s93
      %p99 = scmp.eq.s32.totalorder %s28, 0
      %p100 = por %p98, %p99
      %p101 = scmp.ne.s32.totalorder %s90, %s93
      %p102 = scmp.eq.s32.totalorder %s33, 1
      %p103 = por %p101, %p102
      %p104 = scmp.ne.s32.totalorder %s93, %s94
      %p105 = scmp.eq.s32.totalorder %s33, 0
      %p106 = por %p104, %p105
      %p107 = scmp.ne.s32.totalorder %s93, %s94
      %p108 = scmp.eq.s32.totalorder %s34, 1
      %p109 = por %p107, %p108
      %p111 = scmp.ne.s32.totalorder %s94, %s110
      %p112 = scmp.eq.s32.totalorder %s34, 0
      %p113 = por %p111, %p112
      %s115 = sadd.s32 %s114, 1
      %p118 = scmp.eq.s32.totalorder %s28, 1
      %p119 = scmp.ne.s32.totalorder %s114, %s116
      %p120 = scmp.eq.s32.totalorder %s28, 0
      %p121 = por %p119, %p120
      %p122 = scmp.ne.s32.totalorder %s114, %s116
      %p123 = scmp.eq.s32.totalorder %s33, 1
      %p124 = por %p122, %p123
      %p125 = scmp.ne.s32.totalorder %s116, %s117
      %p126 = scmp.eq.s32.totalorder %s33, 0
      %p127 = por %p125, %p126
      %p128 = scmp.ne.s32.totalorder %s116, %s117
      %p129 = scmp.eq.s32.totalorder %s34, 1
      %p130 = por %p128, %p129
      %p132 = scmp.ne.s32.totalorder %s117, %s131
      %p133 = scmp.eq.s32.totalorder %s34, 0
      %p134 = por %p132, %p133
      %s136 = sadd.s32 %s135, 1
      %p139 = scmp.eq.s32.totalorder %s28, 1
      %p140 = scmp.ne.s32.totalorder %s135, %s137
      %p141 = scmp.eq.s32.totalorder %s28, 0
      %p142 = por %p140, %p141
      %p143 = scmp.ne.s32.totalorder %s135, %s137
      %p144 = scmp.eq.s32.totalorder %s33, 1
      %p145 = por %p143, %p144
      %p146 = scmp.ne.s32.totalorder %s137, %s138
      %p147 = scmp.eq.s32.totalorder %s33, 0
      %p148 = por %p146, %p147
      %p149 = scmp.ne.s32.totalorder %s137, %s138
      %p150 = scmp.eq.s32.totalorder %s34, 1
      %p151 = por %p149, %p150
      %p153 = scmp.ne.s32.totalorder %s138, %s152
      %p154 = scmp.eq.s32.totalorder %s34, 0
      %p155 = por %p153, %p154
      %s157 = sadd.s32 %s156, 1
      %p160 = scmp.eq.s32.totalorder %s28, 1
      %p161 = scmp.ne.s32.totalorder %s156, %s158
      %p162 = scmp.eq.s32.totalorder %s28, 0
      %p163 = por %p161, %p162
      %p164 = scmp.ne.s32.totalorder %s156, %s158
      %p165 = scmp.eq.s32.totalorder %s33, 1
      %p166 = por %p164, %p165
      %p167 = scmp.ne.s32.totalorder %s158, %s159
      %p168 = scmp.eq.s32.totalorder %s33, 0
      %p169 = por %p167, %p168
      %p170 = scmp.ne.s32.totalorder %s158, %s159
      %p171 = scmp.eq.s32.totalorder %s34, 1
      %p172 = por %p170, %p171
      %p174 = scmp.ne.s32.totalorder %s159, %s173
      %p175 = scmp.eq.s32.totalorder %s34, 0
      %p176 = por %p174, %p175
      %s178 = sadd.s32 %s177, 1
      %p181 = scmp.eq.s32.totalorder %s28, 1
      %p182 = scmp.ne.s32.totalorder %s177, %s179
      %p183 = scmp.eq.s32.totalorder %s28, 0
      %p184 = por %p182, %p183
      %p185 = scmp.ne.s32.totalorder %s177, %s179
      %p186 = scmp.eq.s32.totalorder %s33, 1
      %p187 = por %p185, %p186
      %p188 = scmp.ne.s32.totalorder %s179, %s180
      %p189 = scmp.eq.s32.totalorder %s33, 0
      %p190 = por %p188, %p189
      %p191 = scmp.ne.s32.totalorder %s179, %s180
      %p192 = scmp.eq.s32.totalorder %s34, 1
      %p193 = por %p191, %p192
      %p195 = scmp.ne.s32.totalorder %s180, %s194
      %p196 = scmp.eq.s32.totalorder %s34, 0
      %p197 = por %p195, %p196
      %s199 = sadd.s32 %s198, 1
      %p202 = scmp.eq.s32.totalorder %s28, 1
      %p203 = scmp.ne.s32.totalorder %s198, %s200
      %p204 = scmp.eq.s32.totalorder %s28, 0
      %p205 = por %p203, %p204
      %p206 = scmp.ne.s32.totalorder %s198, %s200
      %p207 = scmp.eq.s32.totalorder %s33, 1
      %p208 = por %p206, %p207
      %p209 = scmp.ne.s32.totalorder %s200, %s201
      %p210 = scmp.eq.s32.totalorder %s33, 0
      %p211 = por %p209, %p210
      %p212 = scmp.ne.s32.totalorder %s200, %s201
      %p213 = scmp.eq.s32.totalorder %s34, 1
      %p214 = por %p212, %p213
      %p216 = scmp.ne.s32.totalorder %s201, %s215
      %p217 = scmp.eq.s32.totalorder %s34, 0
      %p218 = por %p216, %p217
      %s220 = sadd.s32 %s219, 1
      %p223 = scmp.eq.s32.totalorder %s28, 1
      %p224 = scmp.ne.s32.totalorder %s219, %s221
      %p225 = scmp.eq.s32.totalorder %s28, 0
      %p226 = por %p224, %p225
      %p227 = scmp.ne.s32.totalorder %s219, %s221
      %p228 = scmp.eq.s32.totalorder %s33, 1
      %p229 = por %p227, %p228
      %p230 = scmp.ne.s32.totalorder %s221, %s222
      %p231 = scmp.eq.s32.totalorder %s33, 0
      %p232 = por %p230, %p231
      %p233 = scmp.ne.s32.totalorder %s221, %s222
      %p234 = scmp.eq.s32.totalorder %s34, 1
      %p235 = por %p233, %p234
      %p237 = scmp.ne.s32.totalorder %s222, %s236
      %p238 = scmp.eq.s32.totalorder %s34, 0
      %p239 = por %p237, %p238
      %s241 = sadd.s32 %s240, 1
      %p244 = scmp.eq.s32.totalorder %s28, 1
      %p245 = scmp.ne.s32.totalorder %s240, %s242
      %p246 = scmp.eq.s32.totalorder %s28, 0
      %p247 = por %p245, %p246
      %p248 = scmp.ne.s32.totalorder %s240, %s242
      %p249 = scmp.eq.s32.totalorder %s33, 1
      %p250 = por %p248, %p249
      %p251 = scmp.ne.s32.totalorder %s242, %s243
      %p252 = scmp.eq.s32.totalorder %s33, 0
      %p253 = por %p251, %p252
      %p254 = scmp.ne.s32.totalorder %s242, %s243
      %p255 = scmp.eq.s32.totalorder %s34, 1
      %p256 = por %p254, %p255
      %p258 = scmp.ne.s32.totalorder %s243, %s257
      %p259 = scmp.eq.s32.totalorder %s34, 0
      %p260 = por %p258, %p259
      %s262 = sadd.s32 %s261, 1
      %p265 = scmp.eq.s32.totalorder %s28, 1
      %p266 = scmp.ne.s32.totalorder %s261, %s263
      %p267 = scmp.eq.s32.totalorder %s28, 0
      %p268 = por %p266, %p267
      %p269 = scmp.ne.s32.totalorder %s261, %s263
      %p270 = scmp.eq.s32.totalorder %s33, 1
      %p271 = por %p269, %p270
      %p272 = scmp.ne.s32.totalorder %s263, %s264
      %p273 = scmp.eq.s32.totalorder %s33, 0
      %p274 = por %p272, %p273
      %p275 = scmp.ne.s32.totalorder %s263, %s264
      %p276 = scmp.eq.s32.totalorder %s34, 1
      %p277 = por %p275, %p276
      %p279 = scmp.ne.s32.totalorder %s264, %s278
      %p280 = scmp.eq.s32.totalorder %s34, 0
      %p281 = por %p279, %p280
      %s283 = sadd.s32 %s282, 1
      %p286 = scmp.eq.s32.totalorder %s28, 1
      %p287 = scmp.ne.s32.totalorder %s282, %s284
      %p288 = scmp.eq.s32.totalorder %s28, 0
      %p289 = por %p287, %p288
      %p290 = scmp.ne.s32.totalorder %s282, %s284
      %p291 = scmp.eq.s32.totalorder %s33, 1
      %p292 = por %p290, %p291
      %p293 = scmp.ne.s32.totalorder %s284, %s285
      %p294 = scmp.eq.s32.totalorder %s33, 0
      %p295 = por %p293, %p294
      %p296 = scmp.ne.s32.totalorder %s284, %s285
      %p297 = scmp.eq.s32.totalorder %s34, 1
      %p298 = por %p296, %p297
      %p300 = scmp.ne.s32.totalorder %s285, %s299
      %p301 = scmp.eq.s32.totalorder %s34, 0
      %p302 = por %p300, %p301
      %s304 = sadd.s32 %s303, 1
      %p307 = scmp.eq.s32.totalorder %s28, 1
      %p308 = scmp.ne.s32.totalorder %s303, %s305
      %p309 = scmp.eq.s32.totalorder %s28, 0
      %p310 = por %p308, %p309
      %p311 = scmp.ne.s32.totalorder %s303, %s305
      %p312 = scmp.eq.s32.totalorder %s33, 1
      %p313 = por %p311, %p312
      %p314 = scmp.ne.s32.totalorder %s305, %s306
      %p315 = scmp.eq.s32.totalorder %s33, 0
      %p316 = por %p314, %p315
      %p317 = scmp.ne.s32.totalorder %s305, %s306
      %p318 = scmp.eq.s32.totalorder %s34, 1
      %p319 = por %p317, %p318
      %p321 = scmp.ne.s32.totalorder %s306, %s320
      %p322 = scmp.eq.s32.totalorder %s34, 0
      %p323 = por %p321, %p322
      %s325 = sadd.s32 %s324, 1
      %p328 = scmp.eq.s32.totalorder %s28, 1
      %p329 = scmp.ne.s32.totalorder %s324, %s326
      %p330 = scmp.eq.s32.totalorder %s28, 0
      %p331 = por %p329, %p330
      %p332 = scmp.ne.s32.totalorder %s324, %s326
      %p333 = scmp.eq.s32.totalorder %s33, 1
      %p334 = por %p332, %p333
      %p335 = scmp.ne.s32.totalorder %s326, %s327
      %p336 = scmp.eq.s32.totalorder %s33, 0
      %p337 = por %p335, %p336
      %p338 = scmp.ne.s32.totalorder %s326, %s327
      %p339 = scmp.eq.s32.totalorder %s34, 1
      %p340 = por %p338, %p339
      %p342 = scmp.ne.s32.totalorder %s327, %s341
      %p343 = scmp.eq.s32.totalorder %s34, 0
      %p344 = por %p342, %p343
      %s346 = sadd.s32 %s345, 1
      %p349 = scmp.eq.s32.totalorder %s28, 1
      %p350 = scmp.ne.s32.totalorder %s345, %s347
      %p351 = scmp.eq.s32.totalorder %s28, 0
      %p352 = por %p350, %p351
      %p353 = scmp.ne.s32.totalorder %s345, %s347
      %p354 = scmp.eq.s32.totalorder %s33, 1
      %p355 = por %p353, %p354
      %p356 = scmp.ne.s32.totalorder %s347, %s348
      %p357 = scmp.eq.s32.totalorder %s33, 0
      %p358 = por %p356, %p357
      %p359 = scmp.ne.s32.totalorder %s347, %s348
      %p360 = scmp.eq.s32.totalorder %s34, 1
      %p361 = por %p359, %p360
      %p363 = scmp.ne.s32.totalorder %s348, %s362
      %p364 = scmp.eq.s32.totalorder %s34, 0
      %p365 = por %p363, %p364
      %s367 = sadd.s32 %s366, 1
      %p370 = scmp.eq.s32.totalorder %s28, 1
      %p371 = scmp.ne.s32.totalorder %s366, %s368
      %p372 = scmp.eq.s32.totalorder %s28, 0
      %p373 = por %p371, %p372
      %p374 = scmp.ne.s32.totalorder %s366, %s368
      %p375 = scmp.eq.s32.totalorder %s33, 1
      %p376 = por %p374, %p375
      %p377 = scmp.ne.s32.totalorder %s368, %s369
      %p378 = scmp.eq.s32.totalorder %s33, 0
      %p379 = por %p377, %p378
      %p380 = scmp.ne.s32.totalorder %s368, %s369
      %p381 = scmp.eq.s32.totalorder %s34, 1
      %p382 = por %p380, %p381
      %p384 = scmp.ne.s32.totalorder %s369, %s383
      %p385 = scmp.eq.s32.totalorder %s34, 0
      %p386 = por %p384, %p385
      %s388 = sadd.s32 %s387, 1
      %p391 = scmp.eq.s32.totalorder %s28, 1
      %p392 = scmp.ne.s32.totalorder %s387, %s389
      %p393 = scmp.eq.s32.totalorder %s28, 0
      %p394 = por %p392, %p393
      %p395 = scmp.ne.s32.totalorder %s387, %s389
      %p396 = scmp.eq.s32.totalorder %s33, 1
      %p397 = por %p395, %p396
      %p398 = scmp.ne.s32.totalorder %s389, %s390
      %p399 = scmp.eq.s32.totalorder %s33, 0
      %p400 = por %p398, %p399
      %p401 = scmp.ne.s32.totalorder %s389, %s390
      %p402 = scmp.eq.s32.totalorder %s34, 1
      %p403 = por %p401, %p402
      %p405 = scmp.ne.s32.totalorder %s390, %s404
      %p406 = scmp.eq.s32.totalorder %s34, 0
      %p407 = por %p405, %p406
      %s409 = sadd.s32 %s408, 1
      %p412 = scmp.eq.s32.totalorder %s28, 1
      %p413 = scmp.ne.s32.totalorder %s408, %s410
      %p414 = scmp.eq.s32.totalorder %s28, 0
      %p415 = por %p413, %p414
      %p416 = scmp.ne.s32.totalorder %s408, %s410
      %p417 = scmp.eq.s32.totalorder %s33, 1
      %p418 = por %p416, %p417
      %p419 = scmp.ne.s32.totalorder %s410, %s411
      %p420 = scmp.eq.s32.totalorder %s33, 0
      %p421 = por %p419, %p420
      %p422 = scmp.ne.s32.totalorder %s410, %s411
      %p423 = scmp.eq.s32.totalorder %s34, 1
      %p424 = por %p422, %p423
      %p426 = scmp.ne.s32.totalorder %s411, %s425
      %p427 = scmp.eq.s32.totalorder %s34, 0
      %p428 = por %p426, %p427
      %s430 = sadd.s32 %s429, 1
      %p433 = scmp.eq.s32.totalorder %s28, 1
      %p434 = scmp.ne.s32.totalorder %s429, %s431
      %p435 = scmp.eq.s32.totalorder %s28, 0
      %p436 = por %p434, %p435
      %p437 = scmp.ne.s32.totalorder %s429, %s431
      %p438 = scmp.eq.s32.totalorder %s33, 1
      %p439 = por %p437, %p438
      %p440 = scmp.ne.s32.totalorder %s431, %s432
      %p441 = scmp.eq.s32.totalorder %s33, 0
      %p442 = por %p440, %p441
      %p443 = scmp.ne.s32.totalorder %s431, %s432
      %p444 = scmp.eq.s32.totalorder %s34, 1
      %p445 = por %p443, %p444
      %p447 = scmp.ne.s32.totalorder %s432, %s446
      %p448 = scmp.eq.s32.totalorder %s34, 0
      %p449 = por %p447, %p448
      %s450 = ssub.s32 %s28, %s35
      %p451 = scmp.eq.s32.totalorder %s450, 0
      %s453 = sadd.s32 %s452, 1
      %s454 = scalar_select %p451, %s452, %s453
      %p457 = pneg %p451
      %p458 = scmp.eq.s32.totalorder %s28, 1
      %p459 = por %p457, %p458
      %p460 = scmp.ne.s32.totalorder %s452, %s455
      %p461 = scmp.eq.s32.totalorder %s28, 0
      %p462 = por %p460, %p461
      %p463 = scmp.ne.s32.totalorder %s452, %s455
      %p464 = scmp.eq.s32.totalorder %s33, 1
      %p465 = por %p463, %p464
      %p466 = scmp.ne.s32.totalorder %s455, %s456
      %p467 = scmp.eq.s32.totalorder %s33, 0
      %p468 = por %p466, %p467
      %p469 = scmp.ne.s32.totalorder %s455, %s456
      %p470 = scmp.eq.s32.totalorder %s34, 1
      %p471 = por %p469, %p470
      %p473 = scmp.ne.s32.totalorder %s456, %s472
      %p474 = scmp.eq.s32.totalorder %s34, 0
      %p475 = por %p473, %p474
      %p476 = scmp.le.s32.totalorder 1, %s28
      %p477 = scmp.lt.s32.totalorder %s28, 3
      %p478 = pnand %p476, %p477
      %p479 = pneg %p478
      // Predicated region
      $region9: #{tpu_custom_call.1} parent=5 // pred_check
        _
      $region10: #{tpu_custom_call.1} parent=5 // pred_check_branch
        %481 = sbr.rel (%p478) target = $region12
      $region11: #{tpu_custom_call.1} parent=5 // pred_region
        %s482 = ssub.s32 %s28, 1
        // Predicated region
        $region13: #{tpu_custom_call.1} parent=11 // pred_check
          %p483 = pneg %p127
        $region14: #{tpu_custom_call.1} parent=11 // pred_check_branch
          %485 = sbr.rel (%p483) target = $region16
        $region15: #{tpu_custom_call.1} parent=11 // pred_region
          _
        $region16: #{tpu_custom_call.1} parent=11 // pred_fallthru
          _
        // Predicated region
        $region17: #{tpu_custom_call.1} parent=11 // pred_check
          %p486 = pneg %p148
        $region18: #{tpu_custom_call.1} parent=11 // pred_check_branch
          %488 = sbr.rel (%p486) target = $region20
        $region19: #{tpu_custom_call.1} parent=11 // pred_region
          _
        $region20: #{tpu_custom_call.1} parent=11 // pred_fallthru
          _
        // Predicated region
        $region21: #{tpu_custom_call.1} parent=11 // pred_check
          %p489 = pneg %p169
        $region22: #{tpu_custom_call.1} parent=11 // pred_check_branch
          %491 = sbr.rel (%p489) target = $region24
        $region23: #{tpu_custom_call.1} parent=11 // pred_region
          _
        $region24: #{tpu_custom_call.1} parent=11 // pred_fallthru
          _
        // Predicated region
        $region25: #{tpu_custom_call.1} parent=11 // pred_check
          %p492 = pneg %p190
        $region26: #{tpu_custom_call.1} parent=11 // pred_check_branch
          %494 = sbr.rel (%p492) target = $region28
        $region27: #{tpu_custom_call.1} parent=11 // pred_region
          _
        $region28: #{tpu_custom_call.1} parent=11 // pred_fallthru
          _
        // Predicated region
        $region29: #{tpu_custom_call.1} parent=11 // pred_check
          %p495 = pneg %p211
        $region30: #{tpu_custom_call.1} parent=11 // pred_check_branch
          %497 = sbr.rel (%p495) target = $region32
        $region31: #{tpu_custom_call.1} parent=11 // pred_region
          _
        $region32: #{tpu_custom_call.1} parent=11 // pred_fallthru
          _
        // Predicated region
        $region33: #{tpu_custom_call.1} parent=11 // pred_check
          %p498 = pneg %p232
        $region34: #{tpu_custom_call.1} parent=11 // pred_check_branch
          %500 = sbr.rel (%p498) target = $region36
        $region35: #{tpu_custom_call.1} parent=11 // pred_region
          _
        $region36: #{tpu_custom_call.1} parent=11 // pred_fallthru
          _
        // Predicated region
        $region37: #{tpu_custom_call.1} parent=11 // pred_check
          %p501 = pneg %p253
        $region38: #{tpu_custom_call.1} parent=11 // pred_check_branch
          %503 = sbr.rel (%p501) target = $region40
        $region39: #{tpu_custom_call.1} parent=11 // pred_region
          _
        $region40: #{tpu_custom_call.1} parent=11 // pred_fallthru
          _
        // Predicated region
        $region41: #{tpu_custom_call.1} parent=11 // pred_check
          %p504 = pneg %p274
        $region42: #{tpu_custom_call.1} parent=11 // pred_check_branch
          %506 = sbr.rel (%p504) target = $region44
        $region43: #{tpu_custom_call.1} parent=11 // pred_region
          _
        $region44: #{tpu_custom_call.1} parent=11 // pred_fallthru
          _
        // Predicated region
        $region45: #{tpu_custom_call.1} parent=11 // pred_check
          %p507 = pneg %p295
        $region46: #{tpu_custom_call.1} parent=11 // pred_check_branch
          %509 = sbr.rel (%p507) target = $region48
        $region47: #{tpu_custom_call.1} parent=11 // pred_region
          _
        $region48: #{tpu_custom_call.1} parent=11 // pred_fallthru
          _
        // Predicated region
        $region49: #{tpu_custom_call.1} parent=11 // pred_check
          %p510 = pneg %p316
        $region50: #{tpu_custom_call.1} parent=11 // pred_check_branch
          %512 = sbr.rel (%p510) target = $region52
        $region51: #{tpu_custom_call.1} parent=11 // pred_region
          _
        $region52: #{tpu_custom_call.1} parent=11 // pred_fallthru
          _
        // Predicated region
        $region53: #{tpu_custom_call.1} parent=11 // pred_check
          %p513 = pneg %p337
        $region54: #{tpu_custom_call.1} parent=11 // pred_check_branch
          %515 = sbr.rel (%p513) target = $region56
        $region55: #{tpu_custom_call.1} parent=11 // pred_region
          _
        $region56: #{tpu_custom_call.1} parent=11 // pred_fallthru
          _
        // Predicated region
        $region57: #{tpu_custom_call.1} parent=11 // pred_check
          %p516 = pneg %p358
        $region58: #{tpu_custom_call.1} parent=11 // pred_check_branch
          %518 = sbr.rel (%p516) target = $region60
        $region59: #{tpu_custom_call.1} parent=11 // pred_region
          _
        $region60: #{tpu_custom_call.1} parent=11 // pred_fallthru
          _
        // Predicated region
        $region61: #{tpu_custom_call.1} parent=11 // pred_check
          %p519 = pneg %p379
        $region62: #{tpu_custom_call.1} parent=11 // pred_check_branch
          %521 = sbr.rel (%p519) target = $region64
        $region63: #{tpu_custom_call.1} parent=11 // pred_region
          _
        $region64: #{tpu_custom_call.1} parent=11 // pred_fallthru
          _
        // Predicated region
        $region65: #{tpu_custom_call.1} parent=11 // pred_check
          %p522 = pneg %p400
        $region66: #{tpu_custom_call.1} parent=11 // pred_check_branch
          %524 = sbr.rel (%p522) target = $region68
        $region67: #{tpu_custom_call.1} parent=11 // pred_region
          _
        $region68: #{tpu_custom_call.1} parent=11 // pred_fallthru
          _
        // Predicated region
        $region69: #{tpu_custom_call.1} parent=11 // pred_check
          %p525 = pneg %p421
        $region70: #{tpu_custom_call.1} parent=11 // pred_check_branch
          %527 = sbr.rel (%p525) target = $region72
        $region71: #{tpu_custom_call.1} parent=11 // pred_region
          _
        $region72: #{tpu_custom_call.1} parent=11 // pred_fallthru
          _
        // Predicated region
        $region73: #{tpu_custom_call.1} parent=11 // pred_check
          %p528 = pneg %p442
        $region74: #{tpu_custom_call.1} parent=11 // pred_check_branch
          %530 = sbr.rel (%p528) target = $region76
        $region75: #{tpu_custom_call.1} parent=11 // pred_region
          _
        $region76: #{tpu_custom_call.1} parent=11 // pred_fallthru
          _
      $region12: #{tpu_custom_call.1} parent=5 // pred_fallthru
        _
      %p531 = scmp.lt.s32.totalorder %s28, 2
      // Predicated region
      $region77: #{tpu_custom_call.1} parent=5 // pred_check
        %p532 = pneg %p531
      $region78: #{tpu_custom_call.1} parent=5 // pred_check_branch
        %534 = sbr.rel (%p532) target = $region80
      $region79: #{tpu_custom_call.1} parent=5 // pred_region
        // Predicated region
        $region81: #{tpu_custom_call.1} parent=79 // pred_check
          %p535 = pneg %p48
        $region82: #{tpu_custom_call.1} parent=79 // pred_check_branch
          %537 = sbr.rel (%p535) target = $region84
        $region83: #{tpu_custom_call.1} parent=79 // pred_region
          %s538 = smul.u32 8, %s28
          %p539 = scmp.lt.s32.totalorder %s538, 15
          %s540 = scalar_select %p539, %s538, 15
          %s541 = smul.addr %s540, 8
          %s542 = scalar_lea.vmem %s0, %s541
          %s543 = smul.u32 8, %s28
        $region84: #{tpu_custom_call.1} parent=79 // pred_fallthru
          _
        // Predicated region
        $region85: #{tpu_custom_call.1} parent=79 // pred_check
          %p544 = pneg %p74
        $region86: #{tpu_custom_call.1} parent=79 // pred_check_branch
          %546 = sbr.rel (%p544) target = $region88
        $region87: #{tpu_custom_call.1} parent=79 // pred_region
          %p547 = scmp.lt.s32.totalorder %s28, 1
          %s548 = scalar_select %p547, %s28, 1
          %s549 = smul.addr %s548, 8
          %s550 = smul.addr %s549, 8
          %s551 = scalar_lea.vmem %s1, %s550
        $region88: #{tpu_custom_call.1} parent=79 // pred_fallthru
          _
        // Predicated region
        $region89: #{tpu_custom_call.1} parent=79 // pred_check
          %p552 = pneg %p100
        $region90: #{tpu_custom_call.1} parent=79 // pred_check_branch
          %554 = sbr.rel (%p552) target = $region92
        $region91: #{tpu_custom_call.1} parent=79 // pred_region
          %s555 = smul.u32 12, %s28
          %p556 = scmp.lt.s32.totalorder %s555, 23
          %s557 = scalar_select %p556, %s555, 23
          %s558 = smul.addr %s557, 8
          %s559 = scalar_lea.vmem %s2, %s558
          %s560 = smul.u32 12, %s28
        $region92: #{tpu_custom_call.1} parent=79 // pred_fallthru
          _
      $region80: #{tpu_custom_call.1} parent=5 // pred_fallthru
        _
      %p561 = scmp.le.s32.totalorder 1, %s28
      %p562 = scmp.lt.s32.totalorder %s28, 3
      %p563 = pnand %p561, %p562
      %p564 = pneg %p563
      // Predicated region
      $region93: #{tpu_custom_call.1} parent=5 // pred_check
        _
      $region94: #{tpu_custom_call.1} parent=5 // pred_check_branch
        %566 = sbr.rel (%p563) target = $region96
      $region95: #{tpu_custom_call.1} parent=5 // pred_region
        %s567 = ssub.s32 %s28, 1
        %s568 = smul.u32 8, %s33
        %p569 = scmp.lt.s32.totalorder %s568, 15
        %s570 = scalar_select %p569, %s568, 15
        %s571 = smul.addr %s570, 8
        %s572 = scalar_lea.vmem %s0, %s571
        %p573 = pneg %p54
        %p574 = pneg %p51
        %p575 = scmp.lt.s32.totalorder %s33, 1
        %s576 = scalar_select %p575, %s33, 1
        %s577 = smul.addr %s576, 8
        %s578 = smul.addr %s577, 8
        %s579 = scalar_lea.vmem %s1, %s578
        %p580 = pneg %p80
        %p581 = pneg %p77
        %s582 = smul.u32 12, %s33
        %p583 = scmp.lt.s32.totalorder %s582, 23
        %s584 = scalar_select %p583, %s582, 23
        %s585 = smul.addr %s584, 8
        %s586 = scalar_lea.vmem %s2, %s585
        %p587 = pneg %p106
        %p588 = pneg %p103
        %p589 = pneg %p127
        %p590 = pneg %p124
        %p591 = pneg %p148
        %p592 = pneg %p145
        %p593 = pneg %p169
        %p594 = pneg %p166
        %p595 = pneg %p190
        %p596 = pneg %p187
        %p597 = pneg %p211
        %p598 = pneg %p208
        %p599 = pneg %p232
        %p600 = pneg %p229
        %p601 = pneg %p253
        %p602 = pneg %p250
        %p603 = pneg %p274
        %p604 = pneg %p271
        %p605 = pneg %p295
        %p606 = pneg %p292
        %p607 = pneg %p316
        %p608 = pneg %p313
        %p609 = pneg %p337
        %p610 = pneg %p334
        %p611 = pneg %p358
        %p612 = pneg %p355
        %p613 = pneg %p379
        %p614 = pneg %p376
        %p615 = pneg %p400
        %p616 = pneg %p397
        %p617 = pneg %p421
        %p618 = pneg %p418
        %p619 = pneg %p442
        %p620 = pneg %p439
        %p621 = pneg %p468
        %p622 = pneg %p465
        %s623 = sand.u32 %s455, 1
        %s624 = scalar_lea.sflag [#allocation5], %s623
        %s625 = sand.u32 %s455, 1
        %s626 = smul.addr %s625, 8
        %s627 = scalar_lea.vmem [#allocation4], %s626
        %s628 = smul.u32 8, %s33
        %p629 = scmp.lt.s32.totalorder %s628, 15
        %s630 = scalar_select %p629, %s628, 15
        %s631 = smul.addr %s630, 8
        %s632 = scalar_lea.vmem %s0, %s631
        %s633 = smul.u32 8, %s33
        %p634 = scmp.lt.s32.totalorder %s33, 1
        %s635 = scalar_select %p634, %s33, 1
        %s636 = smul.addr %s635, 8
        %s637 = smul.addr %s636, 8
        %s638 = scalar_lea.vmem %s1, %s637
        %s639 = smul.u32 12, %s33
        %p640 = scmp.lt.s32.totalorder %s639, 23
        %s641 = scalar_select %p640, %s639, 23
        %s642 = smul.addr %s641, 8
        %s643 = scalar_lea.vmem %s2, %s642
        %s644 = smul.u32 12, %s33
        %v645 = vld [vmem:[%s632] sm:$0xff]
        %v646 = vld [vmem:[%s632 + $0x8] sm:$0xff]
        %v647 = vld [vmem:[%s632 + $0x10] sm:$0xff]
        %v648 = vld [vmem:[%s632 + $0x18] sm:$0xff]
        %v649 = vld [vmem:[%s632 + $0x20] sm:$0xff]
        %v650 = vld [vmem:[%s632 + $0x28] sm:$0xff]
        %v651 = vld [vmem:[%s632 + $0x30] sm:$0xff]
        %v652 = vld [vmem:[%s632 + $0x38] sm:$0xff]
        %v653 = vld [vmem:[%s638] sm:$0xff]
        %v654 = vld [vmem:[%s638 + $0x8] sm:$0xff]
        %v655 = vld [vmem:[%s638 + $0x10] sm:$0xff]
        %v656 = vld [vmem:[%s638 + $0x18] sm:$0xff]
        %v657 = vld [vmem:[%s638 + $0x20] sm:$0xff]
        %v658 = vld [vmem:[%s638 + $0x28] sm:$0xff]
        %v659 = vld [vmem:[%s638 + $0x30] sm:$0xff]
        %v660 = vld [vmem:[%s638 + $0x38] sm:$0xff]
        %v661 = vld [vmem:[%s3] sm:$0xff]
        %v662 = vld [vmem:[%s3 + $0x8] sm:$0xff]
        %v663 = vld [vmem:[%s3 + $0x10] sm:$0xff]
        %v664 = vld [vmem:[%s3 + $0x18] sm:$0xff]
        %v665 = vld [vmem:[%s4] sm:$0x1]
        %v667 = vlaneseq
        %v668 = vshrl.u32 %v667, 7
        %v669 = vsub.s32 0, %v668
        %v670 = vrot.slane %v665, %v669
        %vm672 = vcmask 261120
        %v674 = vsel %vm672, %v645, 0
        %v677 = vsel %vm672, %v646, 0
        %v680 = vsel %vm672, %v647, 0
        %v683 = vsel %vm672, %v648, 0
        %v686 = vsel %vm672, %v649, 0
        %v689 = vsel %vm672, %v650, 0
        %v692 = vsel %vm672, %v651, 0
        %v695 = vsel %vm672, %v652, 0
        %697 = vmatprep.subr.mxu0 0.0
        %698 = vmatpush1.msra.mxu0 0.0
        %699 = vmatprep.subr.mxu0 0.0
        %700 = vmatpush1.msra.mxu0 0.0
        %701 = vmatprep.subr.mxu0 0.0
        %702 = vmatpush1.msra.mxu0 0.0
        %703 = vmatprep.subr.mxu0 0.0
        %704 = vmatpush1.msra.mxu0 0.0
        %705 = vmatprep.subr.mxu0 0.0
        %706 = vmatpush1.msra.mxu0 0.0
        %707 = vmatprep.subr.mxu0 0.0
        %708 = vmatpush1.msra.mxu0 0.0
        %709 = vmatprep.subr.mxu0 0.0
        %710 = vmatpush1.msra.mxu0 0.0
        %711 = vmatprep.subr.mxu0 0.0
        %712 = vmatpush1.msra.mxu0 0.0
        %713 = vmatprep.subr.mxu0 0.0
        %714 = vmatpush1.msra.mxu0 0.0
        %715 = vmatprep.subr.mxu0 0.0
        %716 = vmatpush1.msra.mxu0 0.0
        %717 = vmatprep.subr.mxu0 0.0
        %718 = vmatpush1.msra.mxu0 0.0
        %719 = vmatprep.subr.mxu0 0.0
        %720 = vmatpush1.msra.mxu0 0.0
        %721 = vmatprep.subr.mxu0 0.0
        %722 = vmatpush1.msra.mxu0 %v664
        %723 = vmatprep.subr.mxu0 0.0
        %724 = vmatpush1.msra.mxu0 %v663
        %725 = vmatprep.subr.mxu0 0.0
        %726 = vmatpush1.msra.mxu0 %v662
        %727 = vmatprep.subr.mxu0 0.0
        %728 = vmatpush1.msra.mxu0 %v661
        %729 = vmatprep.subr.mxu0 0.0
        %730 = vmatpush2.msra.mxu0 0.0
        %731 = vmatprep.subr.mxu0 0.0
        %732 = vmatpush2.msra.mxu0 0.0
        %733 = vmatprep.subr.mxu0 0.0
        %734 = vmatpush2.msra.mxu0 0.0
        %735 = vmatprep.subr.mxu0 0.0
        %736 = vmatpush2.msra.mxu0 0.0
        %737 = vmatprep.subr.mxu0 0.0
        %738 = vmatpush2.msra.mxu0 0.0
        %739 = vmatprep.subr.mxu0 0.0
        %740 = vmatpush2.msra.mxu0 0.0
        %741 = vmatprep.subr.mxu0 0.0
        %742 = vmatpush2.msra.mxu0 0.0
        %743 = vmatprep.subr.mxu0 0.0
        %744 = vmatpush2.msra.mxu0 0.0
        %745 = vmatprep.subr.mxu0 0.0
        %746 = vmatpush2.msra.mxu0 0.0
        %747 = vmatprep.subr.mxu0 0.0
        %748 = vmatpush2.msra.mxu0 0.0
        %749 = vmatprep.subr.mxu0 0.0
        %750 = vmatpush2.msra.mxu0 0.0
        %751 = vmatprep.subr.mxu0 0.0
        %752 = vmatpush2.msra.mxu0 0.0
        %753 = vmatprep.subr.mxu0 0.0
        %754 = vmatpush2.msra.mxu0 0.0
        %755 = vmatprep.subr.mxu0 0.0
        %756 = vmatpush2.msra.mxu0 0.0
        %757 = vmatprep.subr.mxu0 0.0
        %758 = vmatpush2.msra.mxu0 0.0
        %759 = vmatprep.subr.mxu0 0.0
        %760 = vmatpush2.msra.mxu0 0.0
        %761 = vmatprep.mubr.f32.mxu0 0.0
        %762 = vmatmul.mubr.f32.gmra.mxu0 %v674
        %v763 = vpop.f32.mrf.mxu0
        %v764 = vadd.f32 %v670, %v763
        %v765 = vpop.f32.mrf.mxu0
        %766 = vmatprep.mubr.f32.mxu0 0.0
        %767 = vmatmul.mubr.f32.gmra.mxu0 %v677
        %v768 = vpop.f32.mrf.mxu0
        %v769 = vadd.f32 %v670, %v768
        %v770 = vpop.f32.mrf.mxu0
        %771 = vmatprep.mubr.f32.mxu0 0.0
        %772 = vmatmul.mubr.f32.gmra.mxu0 %v680
        %v773 = vpop.f32.mrf.mxu0
        %v774 = vadd.f32 %v670, %v773
        %v775 = vpop.f32.mrf.mxu0
        %776 = vmatprep.mubr.f32.mxu0 0.0
        %777 = vmatmul.mubr.f32.gmra.mxu0 %v683
        %v778 = vpop.f32.mrf.mxu0
        %v779 = vadd.f32 %v670, %v778
        %v780 = vpop.f32.mrf.mxu0
        %781 = vmatprep.mubr.f32.mxu0 0.0
        %782 = vmatmul.mubr.f32.gmra.mxu0 %v686
        %v783 = vpop.f32.mrf.mxu0
        %v784 = vadd.f32 %v670, %v783
        %v785 = vpop.f32.mrf.mxu0
        %786 = vmatprep.mubr.f32.mxu0 0.0
        %787 = vmatmul.mubr.f32.gmra.mxu0 %v689
        %v788 = vpop.f32.mrf.mxu0
        %v789 = vadd.f32 %v670, %v788
        %v790 = vpop.f32.mrf.mxu0
        %791 = vmatprep.mubr.f32.mxu0 0.0
        %792 = vmatmul.mubr.f32.gmra.mxu0 %v692
        %v793 = vpop.f32.mrf.mxu0
        %v794 = vadd.f32 %v670, %v793
        %v795 = vpop.f32.mrf.mxu0
        %796 = vmatprep.mubr.f32.mxu0 0.0
        %797 = vmatmul.mubr.f32.gmra.mxu0 %v695
        %v798 = vpop.f32.mrf.mxu0
        %v799 = vadd.f32 %v670, %v798
        %v800 = vpop.f32.mrf.mxu0
        %801 = vdwg.mxu0
        %v802 = vmax.f32 %v764, 0.0
        %v803 = vmax.f32 %v769, 0.0
        %v804 = vmax.f32 %v774, 0.0
        %v805 = vmax.f32 %v779, 0.0
        %v806 = vmax.f32 %v784, 0.0
        %v807 = vmax.f32 %v789, 0.0
        %v808 = vmax.f32 %v794, 0.0
        %v809 = vmax.f32 %v799, 0.0
        %vm810 = vcmask 523264
        %v812 = vsel %vm810, %v653, 0
        %v815 = vsel %vm810, %v654, 0
        %v818 = vsel %vm810, %v655, 0
        %v821 = vsel %vm810, %v656, 0
        %v824 = vsel %vm810, %v657, 0
        %v827 = vsel %vm810, %v658, 0
        %v830 = vsel %vm810, %v659, 0
        %v833 = vsel %vm810, %v660, 0
        %835 = vmatprep.subr.mxu0 0.0
        %836 = vmatpush1.msra.mxu0 0.0
        %837 = vmatprep.subr.mxu0 0.0
        %838 = vmatpush1.msra.mxu0 0.0
        %839 = vmatprep.subr.mxu0 0.0
        %840 = vmatpush1.msra.mxu0 0.0
        %841 = vmatprep.subr.mxu0 0.0
        %842 = vmatpush1.msra.mxu0 0.0
        %843 = vmatprep.subr.mxu0 0.0
        %844 = vmatpush1.msra.mxu0 0.0
        %845 = vmatprep.subr.mxu0 0.0
        %846 = vmatpush1.msra.mxu0 0.0
        %847 = vmatprep.subr.mxu0 0.0
        %848 = vmatpush1.msra.mxu0 0.0
        %849 = vmatprep.subr.mxu0 0.0
        %850 = vmatpush1.msra.mxu0 0.0
        %851 = vmatprep.subr.mxu0 0.0
        %852 = vmatpush1.msra.mxu0 %v809
        %853 = vmatprep.subr.mxu0 0.0
        %854 = vmatpush1.msra.mxu0 %v808
        %855 = vmatprep.subr.mxu0 0.0
        %856 = vmatpush1.msra.mxu0 %v807
        %857 = vmatprep.subr.mxu0 0.0
        %858 = vmatpush1.msra.mxu0 %v806
        %859 = vmatprep.subr.mxu0 0.0
        %860 = vmatpush1.msra.mxu0 %v805
        %861 = vmatprep.subr.mxu0 0.0
        %862 = vmatpush1.msra.mxu0 %v804
        %863 = vmatprep.subr.mxu0 0.0
        %864 = vmatpush1.msra.mxu0 %v803
        %865 = vmatprep.subr.mxu0 0.0
        %866 = vmatpush1.msra.mxu0 %v802
        %867 = vmatprep.subr.mxu0 0.0
        %868 = vmatpush2.msra.mxu0 0.0
        %869 = vmatprep.subr.mxu0 0.0
        %870 = vmatpush2.msra.mxu0 0.0
        %871 = vmatprep.subr.mxu0 0.0
        %872 = vmatpush2.msra.mxu0 0.0
        %873 = vmatprep.subr.mxu0 0.0
        %874 = vmatpush2.msra.mxu0 0.0
        %875 = vmatprep.subr.mxu0 0.0
        %876 = vmatpush2.msra.mxu0 0.0
        %877 = vmatprep.subr.mxu0 0.0
        %878 = vmatpush2.msra.mxu0 0.0
        %879 = vmatprep.subr.mxu0 0.0
        %880 = vmatpush2.msra.mxu0 0.0
        %881 = vmatprep.subr.mxu0 0.0
        %882 = vmatpush2.msra.mxu0 0.0
        %883 = vmatprep.subr.mxu0 0.0
        %884 = vmatpush2.msra.mxu0 0.0
        %885 = vmatprep.subr.mxu0 0.0
        %886 = vmatpush2.msra.mxu0 0.0
        %887 = vmatprep.subr.mxu0 0.0
        %888 = vmatpush2.msra.mxu0 0.0
        %889 = vmatprep.subr.mxu0 0.0
        %890 = vmatpush2.msra.mxu0 0.0
        %891 = vmatprep.subr.mxu0 0.0
        %892 = vmatpush2.msra.mxu0 0.0
        %893 = vmatprep.subr.mxu0 0.0
        %894 = vmatpush2.msra.mxu0 0.0
        %895 = vmatprep.subr.mxu0 0.0
        %896 = vmatpush2.msra.mxu0 0.0
        %897 = vmatprep.subr.mxu0 0.0
        %898 = vmatpush2.msra.mxu0 0.0
        %899 = vmatprep.mubr.f32.mxu0 0.0
        %900 = vmatmul.mubr.f32.gmra.mxu0 %v812
        %v901 = vpop.f32.mrf.mxu0
        %v902 = vadd.f32 0.0, %v901
        %v903 = vpop.f32.mrf.mxu0
        %904 = vmatprep.mubr.f32.mxu0 0.0
        %905 = vmatmul.mubr.f32.gmra.mxu0 %v815
        %v906 = vpop.f32.mrf.mxu0
        %v907 = vadd.f32 0.0, %v906
        %v908 = vpop.f32.mrf.mxu0
        %909 = vmatprep.mubr.f32.mxu0 0.0
        %910 = vmatmul.mubr.f32.gmra.mxu0 %v818
        %v911 = vpop.f32.mrf.mxu0
        %v912 = vadd.f32 0.0, %v911
        %v913 = vpop.f32.mrf.mxu0
        %914 = vmatprep.mubr.f32.mxu0 0.0
        %915 = vmatmul.mubr.f32.gmra.mxu0 %v821
        %v916 = vpop.f32.mrf.mxu0
        %v917 = vadd.f32 0.0, %v916
        %v918 = vpop.f32.mrf.mxu0
        %919 = vmatprep.mubr.f32.mxu0 0.0
        %920 = vmatmul.mubr.f32.gmra.mxu0 %v824
        %v921 = vpop.f32.mrf.mxu0
        %v922 = vadd.f32 0.0, %v921
        %v923 = vpop.f32.mrf.mxu0
        %924 = vmatprep.mubr.f32.mxu0 0.0
        %925 = vmatmul.mubr.f32.gmra.mxu0 %v827
        %v926 = vpop.f32.mrf.mxu0
        %v927 = vadd.f32 0.0, %v926
        %v928 = vpop.f32.mrf.mxu0
        %929 = vmatprep.mubr.f32.mxu0 0.0
        %930 = vmatmul.mubr.f32.gmra.mxu0 %v830
        %v931 = vpop.f32.mrf.mxu0
        %v932 = vadd.f32 0.0, %v931
        %v933 = vpop.f32.mrf.mxu0
        %934 = vmatprep.mubr.f32.mxu0 0.0
        %935 = vmatmul.mubr.f32.gmra.mxu0 %v833
        %v936 = vpop.f32.mrf.mxu0
        %v937 = vadd.f32 0.0, %v936
        %v938 = vpop.f32.mrf.mxu0
        %939 = vdwg.mxu0
        %v940 = vadd.f32 %v645, %v902
        %v941 = vadd.f32 %v646, %v907
        %v942 = vadd.f32 %v647, %v912
        %v943 = vadd.f32 %v648, %v917
        %v944 = vadd.f32 %v649, %v922
        %v945 = vadd.f32 %v650, %v927
        %v946 = vadd.f32 %v651, %v932
        %v947 = vadd.f32 %v652, %v937
        %s948 = scalar_lea.vmem %s3, 32
        %v949 = vld [vmem:[%s948] sm:$0xff]
        %v950 = vld [vmem:[%s948 + $0x8] sm:$0xff]
        %v951 = vld [vmem:[%s948 + $0x10] sm:$0xff]
        %v952 = vld [vmem:[%s948 + $0x18] sm:$0xff]
        %s953 = scalar_lea.vmem %s4, 1
        %v954 = vld [vmem:[%s953] sm:$0x1]
        %v956 = vlaneseq
        %v957 = vshrl.u32 %v956, 7
        %v958 = vsub.s32 0, %v957
        %v959 = vrot.slane %v954, %v958
        %v962 = vsel %vm672, %v940, 0
        %v965 = vsel %vm672, %v941, 0
        %v968 = vsel %vm672, %v942, 0
        %v971 = vsel %vm672, %v943, 0
        %v974 = vsel %vm672, %v944, 0
        %v977 = vsel %vm672, %v945, 0
        %v980 = vsel %vm672, %v946, 0
        %v983 = vsel %vm672, %v947, 0
        %985 = vmatprep.subr.mxu0 0.0
        %986 = vmatpush1.msra.mxu0 0.0
        %987 = vmatprep.subr.mxu0 0.0
        %988 = vmatpush1.msra.mxu0 0.0
        %989 = vmatprep.subr.mxu0 0.0
        %990 = vmatpush1.msra.mxu0 0.0
        %991 = vmatprep.subr.mxu0 0.0
        %992 = vmatpush1.msra.mxu0 0.0
        %993 = vmatprep.subr.mxu0 0.0
        %994 = vmatpush1.msra.mxu0 0.0
        %995 = vmatprep.subr.mxu0 0.0
        %996 = vmatpush1.msra.mxu0 0.0
        %997 = vmatprep.subr.mxu0 0.0
        %998 = vmatpush1.msra.mxu0 0.0
        %999 = vmatprep.subr.mxu0 0.0
        %1000 = vmatpush1.msra.mxu0 0.0
        %1001 = vmatprep.subr.mxu0 0.0
        %1002 = vmatpush1.msra.mxu0 0.0
        %1003 = vmatprep.subr.mxu0 0.0
        %1004 = vmatpush1.msra.mxu0 0.0
        %1005 = vmatprep.subr.mxu0 0.0
        %1006 = vmatpush1.msra.mxu0 0.0
        %1007 = vmatprep.subr.mxu0 0.0
        %1008 = vmatpush1.msra.mxu0 0.0
        %1009 = vmatprep.subr.mxu0 0.0
        %1010 = vmatpush1.msra.mxu0 %v952
        %1011 = vmatprep.subr.mxu0 0.0
        %1012 = vmatpush1.msra.mxu0 %v951
        %1013 = vmatprep.subr.mxu0 0.0
        %1014 = vmatpush1.msra.mxu0 %v950
        %1015 = vmatprep.subr.mxu0 0.0
        %1016 = vmatpush1.msra.mxu0 %v949
        %1017 = vmatprep.subr.mxu0 0.0
        %1018 = vmatpush2.msra.mxu0 0.0
        %1019 = vmatprep.subr.mxu0 0.0
        %1020 = vmatpush2.msra.mxu0 0.0
        %1021 = vmatprep.subr.mxu0 0.0
        %1022 = vmatpush2.msra.mxu0 0.0
        %1023 = vmatprep.subr.mxu0 0.0
        %1024 = vmatpush2.msra.mxu0 0.0
        %1025 = vmatprep.subr.mxu0 0.0
        %1026 = vmatpush2.msra.mxu0 0.0
        %1027 = vmatprep.subr.mxu0 0.0
        %1028 = vmatpush2.msra.mxu0 0.0
        %1029 = vmatprep.subr.mxu0 0.0
        %1030 = vmatpush2.msra.mxu0 0.0
        %1031 = vmatprep.subr.mxu0 0.0
        %1032 = vmatpush2.msra.mxu0 0.0
        %1033 = vmatprep.subr.mxu0 0.0
        %1034 = vmatpush2.msra.mxu0 0.0
        %1035 = vmatprep.subr.mxu0 0.0
        %1036 = vmatpush2.msra.mxu0 0.0
        %1037 = vmatprep.subr.mxu0 0.0
        %1038 = vmatpush2.msra.mxu0 0.0
        %1039 = vmatprep.subr.mxu0 0.0
        %1040 = vmatpush2.msra.mxu0 0.0
        %1041 = vmatprep.subr.mxu0 0.0
        %1042 = vmatpush2.msra.mxu0 0.0
        %1043 = vmatprep.subr.mxu0 0.0
        %1044 = vmatpush2.msra.mxu0 0.0
        %1045 = vmatprep.subr.mxu0 0.0
        %1046 = vmatpush2.msra.mxu0 0.0
        %1047 = vmatprep.subr.mxu0 0.0
        %1048 = vmatpush2.msra.mxu0 0.0
        %1049 = vmatprep.mubr.f32.mxu0 0.0
        %1050 = vmatmul.mubr.f32.gmra.mxu0 %v962
        %v1051 = vpop.f32.mrf.mxu0
        %v1052 = vadd.f32 %v959, %v1051
        %v1053 = vpop.f32.mrf.mxu0
        %1054 = vmatprep.mubr.f32.mxu0 0.0
        %1055 = vmatmul.mubr.f32.gmra.mxu0 %v965
        %v1056 = vpop.f32.mrf.mxu0
        %v1057 = vadd.f32 %v959, %v1056
        %v1058 = vpop.f32.mrf.mxu0
        %1059 = vmatprep.mubr.f32.mxu0 0.0
        %1060 = vmatmul.mubr.f32.gmra.mxu0 %v968
        %v1061 = vpop.f32.mrf.mxu0
        %v1062 = vadd.f32 %v959, %v1061
        %v1063 = vpop.f32.mrf.mxu0
        %1064 = vmatprep.mubr.f32.mxu0 0.0
        %1065 = vmatmul.mubr.f32.gmra.mxu0 %v971
        %v1066 = vpop.f32.mrf.mxu0
        %v1067 = vadd.f32 %v959, %v1066
        %v1068 = vpop.f32.mrf.mxu0
        %1069 = vmatprep.mubr.f32.mxu0 0.0
        %1070 = vmatmul.mubr.f32.gmra.mxu0 %v974
        %v1071 = vpop.f32.mrf.mxu0
        %v1072 = vadd.f32 %v959, %v1071
        %v1073 = vpop.f32.mrf.mxu0
        %1074 = vmatprep.mubr.f32.mxu0 0.0
        %1075 = vmatmul.mubr.f32.gmra.mxu0 %v977
        %v1076 = vpop.f32.mrf.mxu0
        %v1077 = vadd.f32 %v959, %v1076
        %v1078 = vpop.f32.mrf.mxu0
        %1079 = vmatprep.mubr.f32.mxu0 0.0
        %1080 = vmatmul.mubr.f32.gmra.mxu0 %v980
        %v1081 = vpop.f32.mrf.mxu0
        %v1082 = vadd.f32 %v959, %v1081
        %v1083 = vpop.f32.mrf.mxu0
        %1084 = vmatprep.mubr.f32.mxu0 0.0
        %1085 = vmatmul.mubr.f32.gmra.mxu0 %v983
        %v1086 = vpop.f32.mrf.mxu0
        %v1087 = vadd.f32 %v959, %v1086
        %v1088 = vpop.f32.mrf.mxu0
        %1089 = vdwg.mxu0
        %v1090 = vmax.f32 %v1052, 0.0
        %v1091 = vmax.f32 %v1057, 0.0
        %v1092 = vmax.f32 %v1062, 0.0
        %v1093 = vmax.f32 %v1067, 0.0
        %v1094 = vmax.f32 %v1072, 0.0
        %v1095 = vmax.f32 %v1077, 0.0
        %v1096 = vmax.f32 %v1082, 0.0
        %v1097 = vmax.f32 %v1087, 0.0
        %1098 = vmatprep.subr.mxu0 0.0
        %1099 = vmatpush1.msra.mxu0 0.0
        %1100 = vmatprep.subr.mxu0 0.0
        %1101 = vmatpush1.msra.mxu0 0.0
        %1102 = vmatprep.subr.mxu0 0.0
        %1103 = vmatpush1.msra.mxu0 0.0
        %1104 = vmatprep.subr.mxu0 0.0
        %1105 = vmatpush1.msra.mxu0 0.0
        %1106 = vmatprep.subr.mxu0 0.0
        %1107 = vmatpush1.msra.mxu0 0.0
        %1108 = vmatprep.subr.mxu0 0.0
        %1109 = vmatpush1.msra.mxu0 0.0
        %1110 = vmatprep.subr.mxu0 0.0
        %1111 = vmatpush1.msra.mxu0 0.0
        %1112 = vmatprep.subr.mxu0 0.0
        %1113 = vmatpush1.msra.mxu0 0.0
        %1114 = vmatprep.subr.mxu0 0.0
        %1115 = vmatpush1.msra.mxu0 %v1097
        %1116 = vmatprep.subr.mxu0 0.0
        %1117 = vmatpush1.msra.mxu0 %v1096
        %1118 = vmatprep.subr.mxu0 0.0
        %1119 = vmatpush1.msra.mxu0 %v1095
        %1120 = vmatprep.subr.mxu0 0.0
        %1121 = vmatpush1.msra.mxu0 %v1094
        %1122 = vmatprep.subr.mxu0 0.0
        %1123 = vmatpush1.msra.mxu0 %v1093
        %1124 = vmatprep.subr.mxu0 0.0
        %1125 = vmatpush1.msra.mxu0 %v1092
        %1126 = vmatprep.subr.mxu0 0.0
        %1127 = vmatpush1.msra.mxu0 %v1091
        %1128 = vmatprep.subr.mxu0 0.0
        %1129 = vmatpush1.msra.mxu0 %v1090
        %1130 = vmatprep.subr.mxu0 0.0
        %1131 = vmatpush2.msra.mxu0 0.0
        %1132 = vmatprep.subr.mxu0 0.0
        %1133 = vmatpush2.msra.mxu0 0.0
        %1134 = vmatprep.subr.mxu0 0.0
        %1135 = vmatpush2.msra.mxu0 0.0
        %1136 = vmatprep.subr.mxu0 0.0
        %1137 = vmatpush2.msra.mxu0 0.0
        %1138 = vmatprep.subr.mxu0 0.0
        %1139 = vmatpush2.msra.mxu0 0.0
        %1140 = vmatprep.subr.mxu0 0.0
        %1141 = vmatpush2.msra.mxu0 0.0
        %1142 = vmatprep.subr.mxu0 0.0
        %1143 = vmatpush2.msra.mxu0 0.0
        %1144 = vmatprep.subr.mxu0 0.0
        %1145 = vmatpush2.msra.mxu0 0.0
        %1146 = vmatprep.subr.mxu0 0.0
        %1147 = vmatpush2.msra.mxu0 0.0
        %1148 = vmatprep.subr.mxu0 0.0
        %1149 = vmatpush2.msra.mxu0 0.0
        %1150 = vmatprep.subr.mxu0 0.0
        %1151 = vmatpush2.msra.mxu0 0.0
        %1152 = vmatprep.subr.mxu0 0.0
        %1153 = vmatpush2.msra.mxu0 0.0
        %1154 = vmatprep.subr.mxu0 0.0
        %1155 = vmatpush2.msra.mxu0 0.0
        %1156 = vmatprep.subr.mxu0 0.0
        %1157 = vmatpush2.msra.mxu0 0.0
        %1158 = vmatprep.subr.mxu0 0.0
        %1159 = vmatpush2.msra.mxu0 0.0
        %1160 = vmatprep.subr.mxu0 0.0
        %1161 = vmatpush2.msra.mxu0 0.0
        %1162 = vmatprep.mubr.f32.mxu0 0.0
        %1163 = vmatmul.mubr.f32.gmra.mxu0 %v812
        %v1164 = vpop.f32.mrf.mxu0
        %v1165 = vadd.f32 0.0, %v1164
        %v1166 = vpop.f32.mrf.mxu0
        %1167 = vmatprep.mubr.f32.mxu0 0.0
        %1168 = vmatmul.mubr.f32.gmra.mxu0 %v815
        %v1169 = vpop.f32.mrf.mxu0
        %v1170 = vadd.f32 0.0, %v1169
        %v1171 = vpop.f32.mrf.mxu0
        %1172 = vmatprep.mubr.f32.mxu0 0.0
        %1173 = vmatmul.mubr.f32.gmra.mxu0 %v818
        %v1174 = vpop.f32.mrf.mxu0
        %v1175 = vadd.f32 0.0, %v1174
        %v1176 = vpop.f32.mrf.mxu0
        %1177 = vmatprep.mubr.f32.mxu0 0.0
        %1178 = vmatmul.mubr.f32.gmra.mxu0 %v821
        %v1179 = vpop.f32.mrf.mxu0
        %v1180 = vadd.f32 0.0, %v1179
        %v1181 = vpop.f32.mrf.mxu0
        %1182 = vmatprep.mubr.f32.mxu0 0.0
        %1183 = vmatmul.mubr.f32.gmra.mxu0 %v824
        %v1184 = vpop.f32.mrf.mxu0
        %v1185 = vadd.f32 0.0, %v1184
        %v1186 = vpop.f32.mrf.mxu0
        %1187 = vmatprep.mubr.f32.mxu0 0.0
        %1188 = vmatmul.mubr.f32.gmra.mxu0 %v827
        %v1189 = vpop.f32.mrf.mxu0
        %v1190 = vadd.f32 0.0, %v1189
        %v1191 = vpop.f32.mrf.mxu0
        %1192 = vmatprep.mubr.f32.mxu0 0.0
        %1193 = vmatmul.mubr.f32.gmra.mxu0 %v830
        %v1194 = vpop.f32.mrf.mxu0
        %v1195 = vadd.f32 0.0, %v1194
        %v1196 = vpop.f32.mrf.mxu0
        %1197 = vmatprep.mubr.f32.mxu0 0.0
        %1198 = vmatmul.mubr.f32.gmra.mxu0 %v833
        %v1199 = vpop.f32.mrf.mxu0
        %v1200 = vadd.f32 0.0, %v1199
        %v1201 = vpop.f32.mrf.mxu0
        %1202 = vdwg.mxu0
        %v1203 = vadd.f32 %v940, %v1165
        %v1204 = vadd.f32 %v941, %v1170
        %v1205 = vadd.f32 %v942, %v1175
        %v1206 = vadd.f32 %v943, %v1180
        %v1207 = vadd.f32 %v944, %v1185
        %v1208 = vadd.f32 %v945, %v1190
        %v1209 = vadd.f32 %v946, %v1195
        %v1210 = vadd.f32 %v947, %v1200
        %s1211 = scalar_lea.vmem %s3, 64
        %v1212 = vld [vmem:[%s1211] sm:$0xff]
        %v1213 = vld [vmem:[%s1211 + $0x8] sm:$0xff]
        %v1214 = vld [vmem:[%s1211 + $0x10] sm:$0xff]
        %v1215 = vld [vmem:[%s1211 + $0x18] sm:$0xff]
        %s1216 = scalar_lea.vmem %s4, 2
        %v1217 = vld [vmem:[%s1216] sm:$0x1]
        %v1219 = vlaneseq
        %v1220 = vshrl.u32 %v1219, 7
        %v1221 = vsub.s32 0, %v1220
        %v1222 = vrot.slane %v1217, %v1221
        %v1225 = vsel %vm672, %v1203, 0
        %v1228 = vsel %vm672, %v1204, 0
        %v1231 = vsel %vm672, %v1205, 0
        %v1234 = vsel %vm672, %v1206, 0
        %v1237 = vsel %vm672, %v1207, 0
        %v1240 = vsel %vm672, %v1208, 0
        %v1243 = vsel %vm672, %v1209, 0
        %v1246 = vsel %vm672, %v1210, 0
        %1248 = vmatprep.subr.mxu0 0.0
        %1249 = vmatpush1.msra.mxu0 0.0
        %1250 = vmatprep.subr.mxu0 0.0
        %1251 = vmatpush1.msra.mxu0 0.0
        %1252 = vmatprep.subr.mxu0 0.0
        %1253 = vmatpush1.msra.mxu0 0.0
        %1254 = vmatprep.subr.mxu0 0.0
        %1255 = vmatpush1.msra.mxu0 0.0
        %1256 = vmatprep.subr.mxu0 0.0
        %1257 = vmatpush1.msra.mxu0 0.0
        %1258 = vmatprep.subr.mxu0 0.0
        %1259 = vmatpush1.msra.mxu0 0.0
        %1260 = vmatprep.subr.mxu0 0.0
        %1261 = vmatpush1.msra.mxu0 0.0
        %1262 = vmatprep.subr.mxu0 0.0
        %1263 = vmatpush1.msra.mxu0 0.0
        %1264 = vmatprep.subr.mxu0 0.0
        %1265 = vmatpush1.msra.mxu0 0.0
        %1266 = vmatprep.subr.mxu0 0.0
        %1267 = vmatpush1.msra.mxu0 0.0
        %1268 = vmatprep.subr.mxu0 0.0
        %1269 = vmatpush1.msra.mxu0 0.0
        %1270 = vmatprep.subr.mxu0 0.0
        %1271 = vmatpush1.msra.mxu0 0.0
        %1272 = vmatprep.subr.mxu0 0.0
        %1273 = vmatpush1.msra.mxu0 %v1215
        %1274 = vmatprep.subr.mxu0 0.0
        %1275 = vmatpush1.msra.mxu0 %v1214
        %1276 = vmatprep.subr.mxu0 0.0
        %1277 = vmatpush1.msra.mxu0 %v1213
        %1278 = vmatprep.subr.mxu0 0.0
        %1279 = vmatpush1.msra.mxu0 %v1212
        %1280 = vmatprep.subr.mxu0 0.0
        %1281 = vmatpush2.msra.mxu0 0.0
        %1282 = vmatprep.subr.mxu0 0.0
        %1283 = vmatpush2.msra.mxu0 0.0
        %1284 = vmatprep.subr.mxu0 0.0
        %1285 = vmatpush2.msra.mxu0 0.0
        %1286 = vmatprep.subr.mxu0 0.0
        %1287 = vmatpush2.msra.mxu0 0.0
        %1288 = vmatprep.subr.mxu0 0.0
        %1289 = vmatpush2.msra.mxu0 0.0
        %1290 = vmatprep.subr.mxu0 0.0
        %1291 = vmatpush2.msra.mxu0 0.0
        %1292 = vmatprep.subr.mxu0 0.0
        %1293 = vmatpush2.msra.mxu0 0.0
        %1294 = vmatprep.subr.mxu0 0.0
        %1295 = vmatpush2.msra.mxu0 0.0
        %1296 = vmatprep.subr.mxu0 0.0
        %1297 = vmatpush2.msra.mxu0 0.0
        %1298 = vmatprep.subr.mxu0 0.0
        %1299 = vmatpush2.msra.mxu0 0.0
        %1300 = vmatprep.subr.mxu0 0.0
        %1301 = vmatpush2.msra.mxu0 0.0
        %1302 = vmatprep.subr.mxu0 0.0
        %1303 = vmatpush2.msra.mxu0 0.0
        %1304 = vmatprep.subr.mxu0 0.0
        %1305 = vmatpush2.msra.mxu0 0.0
        %1306 = vmatprep.subr.mxu0 0.0
        %1307 = vmatpush2.msra.mxu0 0.0
        %1308 = vmatprep.subr.mxu0 0.0
        %1309 = vmatpush2.msra.mxu0 0.0
        %1310 = vmatprep.subr.mxu0 0.0
        %1311 = vmatpush2.msra.mxu0 0.0
        %1312 = vmatprep.mubr.f32.mxu0 0.0
        %1313 = vmatmul.mubr.f32.gmra.mxu0 %v1225
        %v1314 = vpop.f32.mrf.mxu0
        %v1315 = vadd.f32 %v1222, %v1314
        %v1316 = vpop.f32.mrf.mxu0
        %1317 = vmatprep.mubr.f32.mxu0 0.0
        %1318 = vmatmul.mubr.f32.gmra.mxu0 %v1228
        %v1319 = vpop.f32.mrf.mxu0
        %v1320 = vadd.f32 %v1222, %v1319
        %v1321 = vpop.f32.mrf.mxu0
        %1322 = vmatprep.mubr.f32.mxu0 0.0
        %1323 = vmatmul.mubr.f32.gmra.mxu0 %v1231
        %v1324 = vpop.f32.mrf.mxu0
        %v1325 = vadd.f32 %v1222, %v1324
        %v1326 = vpop.f32.mrf.mxu0
        %1327 = vmatprep.mubr.f32.mxu0 0.0
        %1328 = vmatmul.mubr.f32.gmra.mxu0 %v1234
        %v1329 = vpop.f32.mrf.mxu0
        %v1330 = vadd.f32 %v1222, %v1329
        %v1331 = vpop.f32.mrf.mxu0
        %1332 = vmatprep.mubr.f32.mxu0 0.0
        %1333 = vmatmul.mubr.f32.gmra.mxu0 %v1237
        %v1334 = vpop.f32.mrf.mxu0
        %v1335 = vadd.f32 %v1222, %v1334
        %v1336 = vpop.f32.mrf.mxu0
        %1337 = vmatprep.mubr.f32.mxu0 0.0
        %1338 = vmatmul.mubr.f32.gmra.mxu0 %v1240
        %v1339 = vpop.f32.mrf.mxu0
        %v1340 = vadd.f32 %v1222, %v1339
        %v1341 = vpop.f32.mrf.mxu0
        %1342 = vmatprep.mubr.f32.mxu0 0.0
        %1343 = vmatmul.mubr.f32.gmra.mxu0 %v1243
        %v1344 = vpop.f32.mrf.mxu0
        %v1345 = vadd.f32 %v1222, %v1344
        %v1346 = vpop.f32.mrf.mxu0
        %1347 = vmatprep.mubr.f32.mxu0 0.0
        %1348 = vmatmul.mubr.f32.gmra.mxu0 %v1246
        %v1349 = vpop.f32.mrf.mxu0
        %v1350 = vadd.f32 %v1222, %v1349
        %v1351 = vpop.f32.mrf.mxu0
        %1352 = vdwg.mxu0
        %v1353 = vmax.f32 %v1315, 0.0
        %v1354 = vmax.f32 %v1320, 0.0
        %v1355 = vmax.f32 %v1325, 0.0
        %v1356 = vmax.f32 %v1330, 0.0
        %v1357 = vmax.f32 %v1335, 0.0
        %v1358 = vmax.f32 %v1340, 0.0
        %v1359 = vmax.f32 %v1345, 0.0
        %v1360 = vmax.f32 %v1350, 0.0
        %1361 = vmatprep.subr.mxu0 0.0
        %1362 = vmatpush1.msra.mxu0 0.0
        %1363 = vmatprep.subr.mxu0 0.0
        %1364 = vmatpush1.msra.mxu0 0.0
        %1365 = vmatprep.subr.mxu0 0.0
        %1366 = vmatpush1.msra.mxu0 0.0
        %1367 = vmatprep.subr.mxu0 0.0
        %1368 = vmatpush1.msra.mxu0 0.0
        %1369 = vmatprep.subr.mxu0 0.0
        %1370 = vmatpush1.msra.mxu0 0.0
        %1371 = vmatprep.subr.mxu0 0.0
        %1372 = vmatpush1.msra.mxu0 0.0
        %1373 = vmatprep.subr.mxu0 0.0
        %1374 = vmatpush1.msra.mxu0 0.0
        %1375 = vmatprep.subr.mxu0 0.0
        %1376 = vmatpush1.msra.mxu0 0.0
        %1377 = vmatprep.subr.mxu0 0.0
        %1378 = vmatpush1.msra.mxu0 %v1360
        %1379 = vmatprep.subr.mxu0 0.0
        %1380 = vmatpush1.msra.mxu0 %v1359
        %1381 = vmatprep.subr.mxu0 0.0
        %1382 = vmatpush1.msra.mxu0 %v1358
        %1383 = vmatprep.subr.mxu0 0.0
        %1384 = vmatpush1.msra.mxu0 %v1357
        %1385 = vmatprep.subr.mxu0 0.0
        %1386 = vmatpush1.msra.mxu0 %v1356
        %1387 = vmatprep.subr.mxu0 0.0
        %1388 = vmatpush1.msra.mxu0 %v1355
        %1389 = vmatprep.subr.mxu0 0.0
        %1390 = vmatpush1.msra.mxu0 %v1354
        %1391 = vmatprep.subr.mxu0 0.0
        %1392 = vmatpush1.msra.mxu0 %v1353
        %1393 = vmatprep.subr.mxu0 0.0
        %1394 = vmatpush2.msra.mxu0 0.0
        %1395 = vmatprep.subr.mxu0 0.0
        %1396 = vmatpush2.msra.mxu0 0.0
        %1397 = vmatprep.subr.mxu0 0.0
        %1398 = vmatpush2.msra.mxu0 0.0
        %1399 = vmatprep.subr.mxu0 0.0
        %1400 = vmatpush2.msra.mxu0 0.0
        %1401 = vmatprep.subr.mxu0 0.0
        %1402 = vmatpush2.msra.mxu0 0.0
        %1403 = vmatprep.subr.mxu0 0.0
        %1404 = vmatpush2.msra.mxu0 0.0
        %1405 = vmatprep.subr.mxu0 0.0
        %1406 = vmatpush2.msra.mxu0 0.0
        %1407 = vmatprep.subr.mxu0 0.0
        %1408 = vmatpush2.msra.mxu0 0.0
        %1409 = vmatprep.subr.mxu0 0.0
        %1410 = vmatpush2.msra.mxu0 0.0
        %1411 = vmatprep.subr.mxu0 0.0
        %1412 = vmatpush2.msra.mxu0 0.0
        %1413 = vmatprep.subr.mxu0 0.0
        %1414 = vmatpush2.msra.mxu0 0.0
        %1415 = vmatprep.subr.mxu0 0.0
        %1416 = vmatpush2.msra.mxu0 0.0
        %1417 = vmatprep.subr.mxu0 0.0
        %1418 = vmatpush2.msra.mxu0 0.0
        %1419 = vmatprep.subr.mxu0 0.0
        %1420 = vmatpush2.msra.mxu0 0.0
        %1421 = vmatprep.subr.mxu0 0.0
        %1422 = vmatpush2.msra.mxu0 0.0
        %1423 = vmatprep.subr.mxu0 0.0
        %1424 = vmatpush2.msra.mxu0 0.0
        %1425 = vmatprep.mubr.f32.mxu0 0.0
        %1426 = vmatmul.mubr.f32.gmra.mxu0 %v812
        %v1427 = vpop.f32.mrf.mxu0
        %v1428 = vadd.f32 0.0, %v1427
        %v1429 = vpop.f32.mrf.mxu0
        %1430 = vmatprep.mubr.f32.mxu0 0.0
        %1431 = vmatmul.mubr.f32.gmra.mxu0 %v815
        %v1432 = vpop.f32.mrf.mxu0
        %v1433 = vadd.f32 0.0, %v1432
        %v1434 = vpop.f32.mrf.mxu0
        %1435 = vmatprep.mubr.f32.mxu0 0.0
        %1436 = vmatmul.mubr.f32.gmra.mxu0 %v818
        %v1437 = vpop.f32.mrf.mxu0
        %v1438 = vadd.f32 0.0, %v1437
        %v1439 = vpop.f32.mrf.mxu0
        %1440 = vmatprep.mubr.f32.mxu0 0.0
        %1441 = vmatmul.mubr.f32.gmra.mxu0 %v821
        %v1442 = vpop.f32.mrf.mxu0
        %v1443 = vadd.f32 0.0, %v1442
        %v1444 = vpop.f32.mrf.mxu0
        %1445 = vmatprep.mubr.f32.mxu0 0.0
        %1446 = vmatmul.mubr.f32.gmra.mxu0 %v824
        %v1447 = vpop.f32.mrf.mxu0
        %v1448 = vadd.f32 0.0, %v1447
        %v1449 = vpop.f32.mrf.mxu0
        %1450 = vmatprep.mubr.f32.mxu0 0.0
        %1451 = vmatmul.mubr.f32.gmra.mxu0 %v827
        %v1452 = vpop.f32.mrf.mxu0
        %v1453 = vadd.f32 0.0, %v1452
        %v1454 = vpop.f32.mrf.mxu0
        %1455 = vmatprep.mubr.f32.mxu0 0.0
        %1456 = vmatmul.mubr.f32.gmra.mxu0 %v830
        %v1457 = vpop.f32.mrf.mxu0
        %v1458 = vadd.f32 0.0, %v1457
        %v1459 = vpop.f32.mrf.mxu0
        %1460 = vmatprep.mubr.f32.mxu0 0.0
        %1461 = vmatmul.mubr.f32.gmra.mxu0 %v833
        %v1462 = vpop.f32.mrf.mxu0
        %v1463 = vadd.f32 0.0, %v1462
        %v1464 = vpop.f32.mrf.mxu0
        %1465 = vdwg.mxu0
        %v1466 = vadd.f32 %v1203, %v1428
        %v1467 = vadd.f32 %v1204, %v1433
        %v1468 = vadd.f32 %v1205, %v1438
        %v1469 = vadd.f32 %v1206, %v1443
        %v1470 = vadd.f32 %v1207, %v1448
        %v1471 = vadd.f32 %v1208, %v1453
        %v1472 = vadd.f32 %v1209, %v1458
        %v1473 = vadd.f32 %v1210, %v1463
        %v1474 = vld [vmem:[%s11] sm:$0xff]
        %v1476 = vsel %vm810, %v1474, 0
        %1478 = vmatprep.subr.mxu0 0.0
        %1479 = vmatpush1.msra.mxu0 0.0
        %1480 = vmatprep.subr.mxu0 0.0
        %1481 = vmatpush1.msra.mxu0 0.0
        %1482 = vmatprep.subr.mxu0 0.0
        %1483 = vmatpush1.msra.mxu0 0.0
        %1484 = vmatprep.subr.mxu0 0.0
        %1485 = vmatpush1.msra.mxu0 0.0
        %1486 = vmatprep.subr.mxu0 0.0
        %1487 = vmatpush1.msra.mxu0 0.0
        %1488 = vmatprep.subr.mxu0 0.0
        %1489 = vmatpush1.msra.mxu0 0.0
        %1490 = vmatprep.subr.mxu0 0.0
        %1491 = vmatpush1.msra.mxu0 0.0
        %1492 = vmatprep.subr.mxu0 0.0
        %1493 = vmatpush1.msra.mxu0 0.0
        %1494 = vmatprep.subr.mxu0 0.0
        %1495 = vmatpush1.msra.mxu0 %v1473
        %1496 = vmatprep.subr.mxu0 0.0
        %1497 = vmatpush1.msra.mxu0 %v1472
        %1498 = vmatprep.subr.mxu0 0.0
        %1499 = vmatpush1.msra.mxu0 %v1471
        %1500 = vmatprep.subr.mxu0 0.0
        %1501 = vmatpush1.msra.mxu0 %v1470
        %1502 = vmatprep.subr.mxu0 0.0
        %1503 = vmatpush1.msra.mxu0 %v1469
        %1504 = vmatprep.subr.mxu0 0.0
        %1505 = vmatpush1.msra.mxu0 %v1468
        %1506 = vmatprep.subr.mxu0 0.0
        %1507 = vmatpush1.msra.mxu0 %v1467
        %1508 = vmatprep.subr.mxu0 0.0
        %1509 = vmatpush1.msra.mxu0 %v1466
        %1510 = vmatprep.subr.mxu0 0.0
        %1511 = vmatpush2.msra.mxu0 0.0
        %1512 = vmatprep.subr.mxu0 0.0
        %1513 = vmatpush2.msra.mxu0 0.0
        %1514 = vmatprep.subr.mxu0 0.0
        %1515 = vmatpush2.msra.mxu0 0.0
        %1516 = vmatprep.subr.mxu0 0.0
        %1517 = vmatpush2.msra.mxu0 0.0
        %1518 = vmatprep.subr.mxu0 0.0
        %1519 = vmatpush2.msra.mxu0 0.0
        %1520 = vmatprep.subr.mxu0 0.0
        %1521 = vmatpush2.msra.mxu0 0.0
        %1522 = vmatprep.subr.mxu0 0.0
        %1523 = vmatpush2.msra.mxu0 0.0
        %1524 = vmatprep.subr.mxu0 0.0
        %1525 = vmatpush2.msra.mxu0 0.0
        %1526 = vmatprep.subr.mxu0 0.0
        %1527 = vmatpush2.msra.mxu0 0.0
        %1528 = vmatprep.subr.mxu0 0.0
        %1529 = vmatpush2.msra.mxu0 0.0
        %1530 = vmatprep.subr.mxu0 0.0
        %1531 = vmatpush2.msra.mxu0 0.0
        %1532 = vmatprep.subr.mxu0 0.0
        %1533 = vmatpush2.msra.mxu0 0.0
        %1534 = vmatprep.subr.mxu0 0.0
        %1535 = vmatpush2.msra.mxu0 0.0
        %1536 = vmatprep.subr.mxu0 0.0
        %1537 = vmatpush2.msra.mxu0 0.0
        %1538 = vmatprep.subr.mxu0 0.0
        %1539 = vmatpush2.msra.mxu0 0.0
        %1540 = vmatprep.subr.mxu0 0.0
        %1541 = vmatpush2.msra.mxu0 0.0
        %1542 = vmatprep.mubr.f32.mxu0 0.0
        %1543 = vmatmul.mubr.f32.gmra.mxu0 %v1476
        %v1544 = vpop.f32.mrf.mxu0
        %v1545 = vadd.f32 0.0, %v1544
        %v1546 = vpop.f32.mrf.mxu0
        %1547 = vdwg.mxu0
        %v1548 = vld [vmem:[%s643] sm:$0xff]
        %v1549 = vld [vmem:[%s643 + $0x8] sm:$0xff]
        %v1550 = vld [vmem:[%s643 + $0x10] sm:$0xff]
        %v1551 = vld [vmem:[%s643 + $0x18] sm:$0xff]
        %v1552 = vld [vmem:[%s643 + $0x20] sm:$0xff]
        %v1553 = vld [vmem:[%s643 + $0x28] sm:$0xff]
        %v1554 = vld [vmem:[%s643 + $0x30] sm:$0xff]
        %v1555 = vld [vmem:[%s643 + $0x38] sm:$0xff]
        %v1556 = vld [vmem:[%s643 + $0x40] sm:$0xff]
        %v1557 = vld [vmem:[%s643 + $0x48] sm:$0xff]
        %v1558 = vld [vmem:[%s643 + $0x50] sm:$0xff]
        %v1559 = vld [vmem:[%s643 + $0x58] sm:$0xff]
        %1560 = vst.msk [vmem:[#allocation2] sm:$0xff] %vm672, %v1548
        %1561 = vst.msk [vmem:[#allocation2 + $0x8] sm:$0xff] %vm672, %v1549
        %1562 = vst.msk [vmem:[#allocation2 + $0x10] sm:$0xff] %vm672, %v1550
        %1563 = vst.msk [vmem:[#allocation2 + $0x18] sm:$0xff] %vm672, %v1551
        %1564 = vst.msk [vmem:[#allocation2 + $0x20] sm:$0xff] %vm672, %v1552
        %1565 = vst.msk [vmem:[#allocation2 + $0x28] sm:$0xff] %vm672, %v1553
        %1566 = vst.msk [vmem:[#allocation2 + $0x30] sm:$0xff] %vm672, %v1554
        %1567 = vst.msk [vmem:[#allocation2 + $0x38] sm:$0xff] %vm672, %v1555
        %1568 = vst.msk [vmem:[#allocation2 + $0x40] sm:$0xff] %vm672, %v1556
        %1569 = vst.msk [vmem:[#allocation2 + $0x48] sm:$0xff] %vm672, %v1557
        %1570 = vst.msk [vmem:[#allocation2 + $0x50] sm:$0xff] %vm672, %v1558
        %1571 = vst.msk [vmem:[#allocation2 + $0x58] sm:$0xff] %vm672, %v1559
        %vm1572 = vcmask 254976
        %1573 = vst.msk [vmem:[#allocation3] sm:$0x3] %vm1572, 0.0
        %1574 = vst.msk [vmem:[#allocation3 + $0x30] sm:$0x3] %vm1572, 0.0
        %1575 = vst.msk [vmem:[#allocation3 + $0x60] sm:$0x3] %vm1572, 0.0
        %1576 = vst.msk [vmem:[#allocation3 + $0x90] sm:$0x3] %vm1572, 0.0
        %vm1577 = vcmask 516352
        %1578 = vst.msk [vmem:[#allocation3] sm:$0x1] %vm1577, 0.0
        %1579 = vst.msk [vmem:[#allocation3 + $0x30] sm:$0x1] %vm1577, 0.0
        %1580 = vst.msk [vmem:[#allocation3 + $0x60] sm:$0x1] %vm1577, 0.0
        %1581 = vst.msk [vmem:[#allocation3 + $0x90] sm:$0x1] %vm1577, 0.0
        %vm1582 = vcmask 1041152
        %1583 = vst.msk [vmem:[#allocation3 + $0x27] sm:$0x1] %vm1582, 0.0
        %1584 = vst.msk [vmem:[#allocation3 + $0x57] sm:$0x1] %vm1582, 0.0
        %1585 = vst.msk [vmem:[#allocation3 + $0x87] sm:$0x1] %vm1582, 0.0
        %1586 = vst.msk [vmem:[#allocation3 + $0xb7] sm:$0x1] %vm1582, 0.0
        %vm1587 = vcmask 261126
        %1588 = vst.msk [vmem:[#allocation3 + $0x28] sm:$0xc0] %vm1587, 0.0
        %1589 = vst.msk [vmem:[#allocation3 + $0x58] sm:$0xc0] %vm1587, 0.0
        %1590 = vst.msk [vmem:[#allocation3 + $0x88] sm:$0xc0] %vm1587, 0.0
        %1591 = vst.msk [vmem:[#allocation3 + $0xb8] sm:$0xc0] %vm1587, 0.0
        %v1592 = vld [vmem:[#allocation2] sm:$0xff]
        %v1593 = vld [vmem:[#allocation2 + $0x8] sm:$0xff]
        %v1594 = vld [vmem:[#allocation2 + $0x10] sm:$0xff]
        %v1595 = vld [vmem:[#allocation2 + $0x18] sm:$0xff]
        %v1596 = vld [vmem:[#allocation2 + $0x20] sm:$0xff]
        %v1597 = vld [vmem:[#allocation2 + $0x28] sm:$0xff]
        %v1598 = vld [vmem:[#allocation2 + $0x30] sm:$0xff]
        %v1599 = vld [vmem:[#allocation2 + $0x38] sm:$0xff]
        %v1600 = vld [vmem:[#allocation2 + $0x40] sm:$0xff]
        %v1601 = vld [vmem:[#allocation2 + $0x48] sm:$0xff]
        %v1602 = vld [vmem:[#allocation2 + $0x50] sm:$0xff]
        %v1603 = vld [vmem:[#allocation2 + $0x58] sm:$0xff]
        %1616 = vrot.lane.b32.xlu0 %v1592, 64
        %v1617 = vpop.permute.xlu0 %1616
        %1618 = vrot.lane.b32.xlu0 %v1593, 64
        %v1619 = vpop.permute.xlu0 %1618
        %1620 = vrot.lane.b32.xlu0 %v1594, 64
        %v1621 = vpop.permute.xlu0 %1620
        %1622 = vrot.lane.b32.xlu0 %v1595, 64
        %v1623 = vpop.permute.xlu0 %1622
        %1624 = vrot.lane.b32.xlu0 %v1596, 64
        %v1625 = vpop.permute.xlu0 %1624
        %1626 = vrot.lane.b32.xlu0 %v1597, 64
        %v1627 = vpop.permute.xlu0 %1626
        %1628 = vrot.lane.b32.xlu0 %v1598, 64
        %v1629 = vpop.permute.xlu0 %1628
        %1630 = vrot.lane.b32.xlu0 %v1599, 64
        %v1631 = vpop.permute.xlu0 %1630
        %1632 = vrot.lane.b32.xlu0 %v1600, 64
        %v1633 = vpop.permute.xlu0 %1632
        %1634 = vrot.lane.b32.xlu0 %v1601, 64
        %v1635 = vpop.permute.xlu0 %1634
        %1636 = vrot.lane.b32.xlu0 %v1602, 64
        %v1637 = vpop.permute.xlu0 %1636
        %1638 = vrot.lane.b32.xlu0 %v1603, 64
        %v1639 = vpop.permute.xlu0 %1638
        %vm1652 = vcmask 785920
        %1653 = vst.msk [vmem:[#allocation3] sm:$0xff] %vm1652, %v1617
        %1654 = vst.msk [vmem:[#allocation3 + $0x10] sm:$0xff] %vm1652, %v1619
        %1655 = vst.msk [vmem:[#allocation3 + $0x20] sm:$0xff] %vm1652, %v1621
        %1656 = vst.msk [vmem:[#allocation3 + $0x30] sm:$0xff] %vm1652, %v1623
        %1657 = vst.msk [vmem:[#allocation3 + $0x40] sm:$0xff] %vm1652, %v1625
        %1658 = vst.msk [vmem:[#allocation3 + $0x50] sm:$0xff] %vm1652, %v1627
        %1659 = vst.msk [vmem:[#allocation3 + $0x60] sm:$0xff] %vm1652, %v1629
        %1660 = vst.msk [vmem:[#allocation3 + $0x70] sm:$0xff] %vm1652, %v1631
        %1661 = vst.msk [vmem:[#allocation3 + $0x80] sm:$0xff] %vm1652, %v1633
        %1662 = vst.msk [vmem:[#allocation3 + $0x90] sm:$0xff] %vm1652, %v1635
        %1663 = vst.msk [vmem:[#allocation3 + $0xa0] sm:$0xff] %vm1652, %v1637
        %1664 = vst.msk [vmem:[#allocation3 + $0xb0] sm:$0xff] %vm1652, %v1639
        %v1665 = vld [vmem:[#allocation2] sm:$0xff]
        %v1666 = vld [vmem:[#allocation2 + $0x8] sm:$0xff]
        %v1667 = vld [vmem:[#allocation2 + $0x10] sm:$0x3f]
        %vm1671 = vcmask 1041408
        %v1672 = vrot.slane %v1665, 6
        %v1673 = vrot.slane %v1666, 6
        %v1674 = vsel %vm1671, %v1672, %v1673
        %v1675 = vrot.slane %v1667, 6
        %v1676 = vsel %vm1671, %v1673, %v1675
        %vm1680 = vcmask 261122
        %1681 = vst.msk [vmem:[#allocation3] sm:$0xfc] %vm1680, %v1672
        %1682 = vst.msk [vmem:[#allocation3 + $0x10] sm:$0xff] %vm672, %v1674
        %1683 = vst.msk [vmem:[#allocation3 + $0x20] sm:$0xff] %vm672, %v1676
        %v1684 = vld [vmem:[#allocation2 + $0x18] sm:$0xff]
        %v1685 = vld [vmem:[#allocation2 + $0x20] sm:$0xff]
        %v1686 = vld [vmem:[#allocation2 + $0x28] sm:$0x3f]
        %v1690 = vrot.slane %v1684, 6
        %v1691 = vrot.slane %v1685, 6
        %v1692 = vsel %vm1671, %v1690, %v1691
        %v1693 = vrot.slane %v1686, 6
        %v1694 = vsel %vm1671, %v1691, %v1693
        %1698 = vst.msk [vmem:[#allocation3 + $0x30] sm:$0xfc] %vm1680, %v1690
        %1699 = vst.msk [vmem:[#allocation3 + $0x40] sm:$0xff] %vm672, %v1692
        %1700 = vst.msk [vmem:[#allocation3 + $0x50] sm:$0xff] %vm672, %v1694
        %v1701 = vld [vmem:[#allocation2 + $0x30] sm:$0xff]
        %v1702 = vld [vmem:[#allocation2 + $0x38] sm:$0xff]
        %v1703 = vld [vmem:[#allocation2 + $0x40] sm:$0x3f]
        %v1707 = vrot.slane %v1701, 6
        %v1708 = vrot.slane %v1702, 6
        %v1709 = vsel %vm1671, %v1707, %v1708
        %v1710 = vrot.slane %v1703, 6
        %v1711 = vsel %vm1671, %v1708, %v1710
        %1715 = vst.msk [vmem:[#allocation3 + $0x60] sm:$0xfc] %vm1680, %v1707
        %1716 = vst.msk [vmem:[#allocation3 + $0x70] sm:$0xff] %vm672, %v1709
        %1717 = vst.msk [vmem:[#allocation3 + $0x80] sm:$0xff] %vm672, %v1711
        %v1718 = vld [vmem:[#allocation2 + $0x48] sm:$0xff]
        %v1719 = vld [vmem:[#allocation2 + $0x50] sm:$0xff]
        %v1720 = vld [vmem:[#allocation2 + $0x58] sm:$0x3f]
        %v1724 = vrot.slane %v1718, 6
        %v1725 = vrot.slane %v1719, 6
        %v1726 = vsel %vm1671, %v1724, %v1725
        %v1727 = vrot.slane %v1720, 6
        %v1728 = vsel %vm1671, %v1725, %v1727
        %1732 = vst.msk [vmem:[#allocation3 + $0x90] sm:$0xfc] %vm1680, %v1724
        %1733 = vst.msk [vmem:[#allocation3 + $0xa0] sm:$0xff] %vm672, %v1726
        %1734 = vst.msk [vmem:[#allocation3 + $0xb0] sm:$0xff] %vm672, %v1728
        %v1735 = vld [vmem:[#allocation2] sm:$0xff]
        %v1736 = vld [vmem:[#allocation2 + $0x8] sm:$0xff]
        %v1737 = vld [vmem:[#allocation2 + $0x10] sm:$0x7f]
        %vm1741 = vcmask 1040384
        %v1742 = vrot.slane %v1735, 7
        %v1743 = vrot.slane %v1736, 7
        %v1744 = vsel %vm1741, %v1742, %v1743
        %v1745 = vrot.slane %v1737, 7
        %v1746 = vsel %vm1741, %v1743, %v1745
        %1747 = vrot.lane.b32.xlu0 %v1742, 32
        %v1748 = vpop.permute.xlu0 %1747
        %1749 = vrot.lane.b32.xlu0 %v1744, 32
        %v1750 = vpop.permute.xlu0 %1749
        %1751 = vrot.lane.b32.xlu0 %v1746, 32
        %v1752 = vpop.permute.xlu0 %1751
        %vm1756 = vcmask 523521
        %1757 = vst.msk [vmem:[#allocation3] sm:$0xfe] %vm1756, %v1748
        %vm1758 = vcmask 523520
        %1759 = vst.msk [vmem:[#allocation3 + $0x10] sm:$0xff] %vm1758, %v1750
        %1760 = vst.msk [vmem:[#allocation3 + $0x20] sm:$0xff] %vm1758, %v1752
        %v1761 = vld [vmem:[#allocation2 + $0x18] sm:$0xff]
        %v1762 = vld [vmem:[#allocation2 + $0x20] sm:$0xff]
        %v1763 = vld [vmem:[#allocation2 + $0x28] sm:$0x7f]
        %v1767 = vrot.slane %v1761, 7
        %v1768 = vrot.slane %v1762, 7
        %v1769 = vsel %vm1741, %v1767, %v1768
        %v1770 = vrot.slane %v1763, 7
        %v1771 = vsel %vm1741, %v1768, %v1770
        %1772 = vrot.lane.b32.xlu0 %v1767, 32
        %v1773 = vpop.permute.xlu0 %1772
        %1774 = vrot.lane.b32.xlu0 %v1769, 32
        %v1775 = vpop.permute.xlu0 %1774
        %1776 = vrot.lane.b32.xlu0 %v1771, 32
        %v1777 = vpop.permute.xlu0 %1776
        %1781 = vst.msk [vmem:[#allocation3 + $0x30] sm:$0xfe] %vm1756, %v1773
        %1782 = vst.msk [vmem:[#allocation3 + $0x40] sm:$0xff] %vm1758, %v1775
        %1783 = vst.msk [vmem:[#allocation3 + $0x50] sm:$0xff] %vm1758, %v1777
        %v1784 = vld [vmem:[#allocation2 + $0x30] sm:$0xff]
        %v1785 = vld [vmem:[#allocation2 + $0x38] sm:$0xff]
        %v1786 = vld [vmem:[#allocation2 + $0x40] sm:$0x7f]
        %v1790 = vrot.slane %v1784, 7
        %v1791 = vrot.slane %v1785, 7
        %v1792 = vsel %vm1741, %v1790, %v1791
        %v1793 = vrot.slane %v1786, 7
        %v1794 = vsel %vm1741, %v1791, %v1793
        %1795 = vrot.lane.b32.xlu0 %v1790, 32
        %v1796 = vpop.permute.xlu0 %1795
        %1797 = vrot.lane.b32.xlu0 %v1792, 32
        %v1798 = vpop.permute.xlu0 %1797
        %1799 = vrot.lane.b32.xlu0 %v1794, 32
        %v1800 = vpop.permute.xlu0 %1799
        %1804 = vst.msk [vmem:[#allocation3 + $0x60] sm:$0xfe] %vm1756, %v1796
        %1805 = vst.msk [vmem:[#allocation3 + $0x70] sm:$0xff] %vm1758, %v1798
        %1806 = vst.msk [vmem:[#allocation3 + $0x80] sm:$0xff] %vm1758, %v1800
        %v1807 = vld [vmem:[#allocation2 + $0x48] sm:$0xff]
        %v1808 = vld [vmem:[#allocation2 + $0x50] sm:$0xff]
        %v1809 = vld [vmem:[#allocation2 + $0x58] sm:$0x7f]
        %v1813 = vrot.slane %v1807, 7
        %v1814 = vrot.slane %v1808, 7
        %v1815 = vsel %vm1741, %v1813, %v1814
        %v1816 = vrot.slane %v1809, 7
        %v1817 = vsel %vm1741, %v1814, %v1816
        %1818 = vrot.lane.b32.xlu0 %v1813, 32
        %v1819 = vpop.permute.xlu0 %1818
        %1820 = vrot.lane.b32.xlu0 %v1815, 32
        %v1821 = vpop.permute.xlu0 %1820
        %1822 = vrot.lane.b32.xlu0 %v1817, 32
        %v1823 = vpop.permute.xlu0 %1822
        %1827 = vst.msk [vmem:[#allocation3 + $0x90] sm:$0xfe] %vm1756, %v1819
        %1828 = vst.msk [vmem:[#allocation3 + $0xa0] sm:$0xff] %vm1758, %v1821
        %1829 = vst.msk [vmem:[#allocation3 + $0xb0] sm:$0xff] %vm1758, %v1823
        %v1830 = vld [vmem:[#allocation2 + $0x1] sm:$0xff]
        %v1831 = vld [vmem:[#allocation2 + $0x9] sm:$0xff]
        %v1832 = vld [vmem:[#allocation2 + $0x11] sm:$0x7f]
        %1836 = vrot.lane.b32.xlu0 %v1830, 96
        %v1837 = vpop.permute.xlu0 %1836
        %1838 = vrot.lane.b32.xlu0 %v1831, 96
        %v1839 = vpop.permute.xlu0 %1838
        %1840 = vrot.lane.b32.xlu0 %v1832, 96
        %v1841 = vpop.permute.xlu0 %1840
        %vm1845 = vcmask 1048320
        %1846 = vst.msk [vmem:[#allocation3] sm:$0xff] %vm1845, %v1837
        %1847 = vst.msk [vmem:[#allocation3 + $0x10] sm:$0xff] %vm1845, %v1839
        %vm1848 = vcmask 1047296
        %1849 = vst.msk [vmem:[#allocation3 + $0x20] sm:$0x7f] %vm1848, %v1841
        %v1850 = vld [vmem:[#allocation2 + $0x19] sm:$0xff]
        %v1851 = vld [vmem:[#allocation2 + $0x21] sm:$0xff]
        %v1852 = vld [vmem:[#allocation2 + $0x29] sm:$0x7f]
        %1856 = vrot.lane.b32.xlu0 %v1850, 96
        %v1857 = vpop.permute.xlu0 %1856
        %1858 = vrot.lane.b32.xlu0 %v1851, 96
        %v1859 = vpop.permute.xlu0 %1858
        %1860 = vrot.lane.b32.xlu0 %v1852, 96
        %v1861 = vpop.permute.xlu0 %1860
        %1865 = vst.msk [vmem:[#allocation3 + $0x30] sm:$0xff] %vm1845, %v1857
        %1866 = vst.msk [vmem:[#allocation3 + $0x40] sm:$0xff] %vm1845, %v1859
        %1867 = vst.msk [vmem:[#allocation3 + $0x50] sm:$0x7f] %vm1848, %v1861
        %v1868 = vld [vmem:[#allocation2 + $0x31] sm:$0xff]
        %v1869 = vld [vmem:[#allocation2 + $0x39] sm:$0xff]
        %v1870 = vld [vmem:[#allocation2 + $0x41] sm:$0x7f]
        %1874 = vrot.lane.b32.xlu0 %v1868, 96
        %v1875 = vpop.permute.xlu0 %1874
        %1876 = vrot.lane.b32.xlu0 %v1869, 96
        %v1877 = vpop.permute.xlu0 %1876
        %1878 = vrot.lane.b32.xlu0 %v1870, 96
        %v1879 = vpop.permute.xlu0 %1878
        %1883 = vst.msk [vmem:[#allocation3 + $0x60] sm:$0xff] %vm1845, %v1875
        %1884 = vst.msk [vmem:[#allocation3 + $0x70] sm:$0xff] %vm1845, %v1877
        %1885 = vst.msk [vmem:[#allocation3 + $0x80] sm:$0x7f] %vm1848, %v1879
        %v1886 = vld [vmem:[#allocation2 + $0x49] sm:$0xff]
        %v1887 = vld [vmem:[#allocation2 + $0x51] sm:$0xff]
        %v1888 = vld [vmem:[#allocation2 + $0x59] sm:$0x7f]
        %1892 = vrot.lane.b32.xlu0 %v1886, 96
        %v1893 = vpop.permute.xlu0 %1892
        %1894 = vrot.lane.b32.xlu0 %v1887, 96
        %v1895 = vpop.permute.xlu0 %1894
        %1896 = vrot.lane.b32.xlu0 %v1888, 96
        %v1897 = vpop.permute.xlu0 %1896
        %1901 = vst.msk [vmem:[#allocation3 + $0x90] sm:$0xff] %vm1845, %v1893
        %1902 = vst.msk [vmem:[#allocation3 + $0xa0] sm:$0xff] %vm1845, %v1895
        %1903 = vst.msk [vmem:[#allocation3 + $0xb0] sm:$0x7f] %vm1848, %v1897
        %v1904 = vld [vmem:[#allocation2 + $0x2] sm:$0xff]
        %v1905 = vld [vmem:[#allocation2 + $0xa] sm:$0xff]
        %v1906 = vld [vmem:[#allocation2 + $0x12] sm:$0x3f]
        %1907 = vst.msk [vmem:[#allocation3 + $0x8] sm:$0xff] %vm672, %v1904
        %1908 = vst.msk [vmem:[#allocation3 + $0x18] sm:$0xff] %vm672, %v1905
        %vm1909 = vcmask 259072
        %1910 = vst.msk [vmem:[#allocation3 + $0x28] sm:$0x3f] %vm1909, %v1906
        %v1911 = vld [vmem:[#allocation2 + $0x1a] sm:$0xff]
        %v1912 = vld [vmem:[#allocation2 + $0x22] sm:$0xff]
        %v1913 = vld [vmem:[#allocation2 + $0x2a] sm:$0x3f]
        %1914 = vst.msk [vmem:[#allocation3 + $0x38] sm:$0xff] %vm672, %v1911
        %1915 = vst.msk [vmem:[#allocation3 + $0x48] sm:$0xff] %vm672, %v1912
        %1916 = vst.msk [vmem:[#allocation3 + $0x58] sm:$0x3f] %vm1909, %v1913
        %v1917 = vld [vmem:[#allocation2 + $0x32] sm:$0xff]
        %v1918 = vld [vmem:[#allocation2 + $0x3a] sm:$0xff]
        %v1919 = vld [vmem:[#allocation2 + $0x42] sm:$0x3f]
        %1920 = vst.msk [vmem:[#allocation3 + $0x68] sm:$0xff] %vm672, %v1917
        %1921 = vst.msk [vmem:[#allocation3 + $0x78] sm:$0xff] %vm672, %v1918
        %1922 = vst.msk [vmem:[#allocation3 + $0x88] sm:$0x3f] %vm1909, %v1919
        %v1923 = vld [vmem:[#allocation2 + $0x4a] sm:$0xff]
        %v1924 = vld [vmem:[#allocation2 + $0x52] sm:$0xff]
        %v1925 = vld [vmem:[#allocation2 + $0x5a] sm:$0x3f]
        %1926 = vst.msk [vmem:[#allocation3 + $0x98] sm:$0xff] %vm672, %v1923
        %1927 = vst.msk [vmem:[#allocation3 + $0xa8] sm:$0xff] %vm672, %v1924
        %1928 = vst.msk [vmem:[#allocation3 + $0xb8] sm:$0x3f] %vm1909, %v1925
        %v1929 = vld [vmem:[#allocation3] sm:$0xff]
        %v1930 = vld [vmem:[#allocation3 + $0x8] sm:$0xff]
        %v1931 = vld [vmem:[#allocation3 + $0x10] sm:$0xff]
        %v1932 = vld [vmem:[#allocation3 + $0x18] sm:$0xff]
        %v1933 = vld [vmem:[#allocation3 + $0x20] sm:$0xff]
        %v1934 = vld [vmem:[#allocation3 + $0x28] sm:$0xff]
        %v1935 = vld [vmem:[#allocation3 + $0x30] sm:$0xff]
        %v1936 = vld [vmem:[#allocation3 + $0x38] sm:$0xff]
        %v1937 = vld [vmem:[#allocation3 + $0x40] sm:$0xff]
        %v1938 = vld [vmem:[#allocation3 + $0x48] sm:$0xff]
        %v1939 = vld [vmem:[#allocation3 + $0x50] sm:$0xff]
        %v1940 = vld [vmem:[#allocation3 + $0x58] sm:$0xff]
        %v1941 = vld [vmem:[#allocation3 + $0x60] sm:$0xff]
        %v1942 = vld [vmem:[#allocation3 + $0x68] sm:$0xff]
        %v1943 = vld [vmem:[#allocation3 + $0x70] sm:$0xff]
        %v1944 = vld [vmem:[#allocation3 + $0x78] sm:$0xff]
        %v1945 = vld [vmem:[#allocation3 + $0x80] sm:$0xff]
        %v1946 = vld [vmem:[#allocation3 + $0x88] sm:$0xff]
        %v1947 = vld [vmem:[#allocation3 + $0x90] sm:$0xff]
        %v1948 = vld [vmem:[#allocation3 + $0x98] sm:$0xff]
        %v1949 = vld [vmem:[#allocation3 + $0xa0] sm:$0xff]
        %v1950 = vld [vmem:[#allocation3 + $0xa8] sm:$0xff]
        %v1951 = vld [vmem:[#allocation3 + $0xb0] sm:$0xff]
        %v1952 = vld [vmem:[#allocation3 + $0xb8] sm:$0xff]
        %v1953 = vld [vmem:[%s5] sm:$0xff]
        %v1954 = vld [vmem:[%s5 + $0x8] sm:$0xff]
        %v1955 = vld [vmem:[%s5 + $0x10] sm:$0xff]
        %v1956 = vld [vmem:[%s5 + $0x18] sm:$0xff]
        %v1957 = vld [vmem:[%s5 + $0x20] sm:$0xff]
        %v1958 = vld [vmem:[%s5 + $0x28] sm:$0xff]
        %v1959 = vld [vmem:[%s5 + $0x30] sm:$0xff]
        %v1960 = vld [vmem:[%s5 + $0x38] sm:$0xff]
        %v1961 = vld [vmem:[%s5 + $0x40] sm:$0xff]
        %v1962 = vld [vmem:[%s5 + $0x48] sm:$0xff]
        %v1963 = vld [vmem:[%s5 + $0x50] sm:$0xff]
        %v1964 = vld [vmem:[%s5 + $0x58] sm:$0xff]
        %v1965 = vld [vmem:[%s5 + $0x60] sm:$0xff]
        %v1966 = vld [vmem:[%s5 + $0x68] sm:$0xff]
        %v1967 = vld [vmem:[%s5 + $0x70] sm:$0xff]
        %v1968 = vld [vmem:[%s5 + $0x78] sm:$0xff]
        %v1969 = vld [vmem:[%s5 + $0x80] sm:$0xff]
        %v1970 = vld [vmem:[%s5 + $0x88] sm:$0xff]
        %v1971 = vld [vmem:[%s5 + $0x90] sm:$0xff]
        %v1972 = vld [vmem:[%s5 + $0x98] sm:$0xff]
        %v1973 = vld [vmem:[%s6] sm:$0x1]
        %v1975 = vlaneseq
        %v1976 = vshrl.u32 %v1975, 7
        %v1977 = vsub.s32 0, %v1976
        %v1978 = vrot.slane %v1973, %v1977
        %v1981 = vsel %vm672, %v1930, 0
        %v1984 = vsel %vm672, %v1932, 0
        %v1987 = vsel %vm672, %v1934, 0
        %v1990 = vsel %vm672, %v1936, 0
        %v1993 = vsel %vm672, %v1938, 0
        %v1996 = vsel %vm672, %v1940, 0
        %v1999 = vsel %vm672, %v1942, 0
        %v2002 = vsel %vm672, %v1944, 0
        %v2005 = vsel %vm672, %v1946, 0
        %v2008 = vsel %vm672, %v1948, 0
        %v2011 = vsel %vm672, %v1950, 0
        %v2014 = vsel %vm672, %v1952, 0
        %2016 = vmatprep.subr.mxu0 0.0
        %2017 = vmatpush1.msra.mxu0 %v1968
        %2018 = vmatprep.subr.mxu0 0.0
        %2019 = vmatpush1.msra.mxu0 %v1967
        %2020 = vmatprep.subr.mxu0 0.0
        %2021 = vmatpush1.msra.mxu0 %v1966
        %2022 = vmatprep.subr.mxu0 0.0
        %2023 = vmatpush1.msra.mxu0 %v1965
        %2024 = vmatprep.subr.mxu0 0.0
        %2025 = vmatpush1.msra.mxu0 %v1964
        %2026 = vmatprep.subr.mxu0 0.0
        %2027 = vmatpush1.msra.mxu0 %v1963
        %2028 = vmatprep.subr.mxu0 0.0
        %2029 = vmatpush1.msra.mxu0 %v1962
        %2030 = vmatprep.subr.mxu0 0.0
        %2031 = vmatpush1.msra.mxu0 %v1961
        %2032 = vmatprep.subr.mxu0 0.0
        %2033 = vmatpush1.msra.mxu0 %v1960
        %2034 = vmatprep.subr.mxu0 0.0
        %2035 = vmatpush1.msra.mxu0 %v1959
        %2036 = vmatprep.subr.mxu0 0.0
        %2037 = vmatpush1.msra.mxu0 %v1958
        %2038 = vmatprep.subr.mxu0 0.0
        %2039 = vmatpush1.msra.mxu0 %v1957
        %2040 = vmatprep.subr.mxu0 0.0
        %2041 = vmatpush1.msra.mxu0 %v1956
        %2042 = vmatprep.subr.mxu0 0.0
        %2043 = vmatpush1.msra.mxu0 %v1955
        %2044 = vmatprep.subr.mxu0 0.0
        %2045 = vmatpush1.msra.mxu0 %v1954
        %2046 = vmatprep.subr.mxu0 0.0
        %2047 = vmatpush1.msra.mxu0 %v1953
        %2048 = vmatprep.subr.mxu0 0.0
        %2049 = vmatpush2.msra.mxu0 0.0
        %2050 = vmatprep.subr.mxu0 0.0
        %2051 = vmatpush2.msra.mxu0 0.0
        %2052 = vmatprep.subr.mxu0 0.0
        %2053 = vmatpush2.msra.mxu0 0.0
        %2054 = vmatprep.subr.mxu0 0.0
        %2055 = vmatpush2.msra.mxu0 0.0
        %2056 = vmatprep.subr.mxu0 0.0
        %2057 = vmatpush2.msra.mxu0 0.0
        %2058 = vmatprep.subr.mxu0 0.0
        %2059 = vmatpush2.msra.mxu0 0.0
        %2060 = vmatprep.subr.mxu0 0.0
        %2061 = vmatpush2.msra.mxu0 0.0
        %2062 = vmatprep.subr.mxu0 0.0
        %2063 = vmatpush2.msra.mxu0 0.0
        %2064 = vmatprep.subr.mxu0 0.0
        %2065 = vmatpush2.msra.mxu0 0.0
        %2066 = vmatprep.subr.mxu0 0.0
        %2067 = vmatpush2.msra.mxu0 0.0
        %2068 = vmatprep.subr.mxu0 0.0
        %2069 = vmatpush2.msra.mxu0 0.0
        %2070 = vmatprep.subr.mxu0 0.0
        %2071 = vmatpush2.msra.mxu0 0.0
        %2072 = vmatprep.subr.mxu0 0.0
        %2073 = vmatpush2.msra.mxu0 %v1972
        %2074 = vmatprep.subr.mxu0 0.0
        %2075 = vmatpush2.msra.mxu0 %v1971
        %2076 = vmatprep.subr.mxu0 0.0
        %2077 = vmatpush2.msra.mxu0 %v1970
        %2078 = vmatprep.subr.mxu0 0.0
        %2079 = vmatpush2.msra.mxu0 %v1969
        %2080 = vmatprep.mubr.f32.mxu0 %v1981
        %2081 = vmatmul.mubr.f32.gmra.mxu0 %v1929
        %v2082 = vpop.f32.mrf.mxu0
        %v2083 = vadd.f32 %v1978, %v2082
        %v2084 = vpop.f32.mrf.mxu0
        %2085 = vmatprep.mubr.f32.mxu0 %v1984
        %2086 = vmatmul.mubr.f32.gmra.mxu0 %v1931
        %v2087 = vpop.f32.mrf.mxu0
        %v2088 = vadd.f32 %v1978, %v2087
        %v2089 = vpop.f32.mrf.mxu0
        %2090 = vmatprep.mubr.f32.mxu0 %v1987
        %2091 = vmatmul.mubr.f32.gmra.mxu0 %v1933
        %v2092 = vpop.f32.mrf.mxu0
        %v2093 = vadd.f32 %v1978, %v2092
        %v2094 = vpop.f32.mrf.mxu0
        %2095 = vmatprep.mubr.f32.mxu0 %v1990
        %2096 = vmatmul.mubr.f32.gmra.mxu0 %v1935
        %v2097 = vpop.f32.mrf.mxu0
        %v2098 = vadd.f32 %v1978, %v2097
        %v2099 = vpop.f32.mrf.mxu0
        %2100 = vmatprep.mubr.f32.mxu0 %v1993
        %2101 = vmatmul.mubr.f32.gmra.mxu0 %v1937
        %v2102 = vpop.f32.mrf.mxu0
        %v2103 = vadd.f32 %v1978, %v2102
        %v2104 = vpop.f32.mrf.mxu0
        %2105 = vmatprep.mubr.f32.mxu0 %v1996
        %2106 = vmatmul.mubr.f32.gmra.mxu0 %v1939
        %v2107 = vpop.f32.mrf.mxu0
        %v2108 = vadd.f32 %v1978, %v2107
        %v2109 = vpop.f32.mrf.mxu0
        %2110 = vmatprep.mubr.f32.mxu0 %v1999
        %2111 = vmatmul.mubr.f32.gmra.mxu0 %v1941
        %v2112 = vpop.f32.mrf.mxu0
        %v2113 = vadd.f32 %v1978, %v2112
        %v2114 = vpop.f32.mrf.mxu0
        %2115 = vmatprep.mubr.f32.mxu0 %v2002
        %2116 = vmatmul.mubr.f32.gmra.mxu0 %v1943
        %v2117 = vpop.f32.mrf.mxu0
        %v2118 = vadd.f32 %v1978, %v2117
        %v2119 = vpop.f32.mrf.mxu0
        %2120 = vmatprep.mubr.f32.mxu0 %v2005
        %2121 = vmatmul.mubr.f32.gmra.mxu0 %v1945
        %v2122 = vpop.f32.mrf.mxu0
        %v2123 = vadd.f32 %v1978, %v2122
        %v2124 = vpop.f32.mrf.mxu0
        %2125 = vmatprep.mubr.f32.mxu0 %v2008
        %2126 = vmatmul.mubr.f32.gmra.mxu0 %v1947
        %v2127 = vpop.f32.mrf.mxu0
        %v2128 = vadd.f32 %v1978, %v2127
        %v2129 = vpop.f32.mrf.mxu0
        %2130 = vmatprep.mubr.f32.mxu0 %v2011
        %2131 = vmatmul.mubr.f32.gmra.mxu0 %v1949
        %v2132 = vpop.f32.mrf.mxu0
        %v2133 = vadd.f32 %v1978, %v2132
        %v2134 = vpop.f32.mrf.mxu0
        %2135 = vmatprep.mubr.f32.mxu0 %v2014
        %2136 = vmatmul.mubr.f32.gmra.mxu0 %v1951
        %v2137 = vpop.f32.mrf.mxu0
        %v2138 = vadd.f32 %v1978, %v2137
        %v2139 = vpop.f32.mrf.mxu0
        %2140 = vdwg.mxu0
        %v2141 = vmax.f32 %v2083, 0.0
        %v2142 = vmax.f32 %v2088, 0.0
        %v2143 = vmax.f32 %v2093, 0.0
        %v2144 = vmax.f32 %v2098, 0.0
        %v2145 = vmax.f32 %v2103, 0.0
        %v2146 = vmax.f32 %v2108, 0.0
        %v2147 = vmax.f32 %v2113, 0.0
        %v2148 = vmax.f32 %v2118, 0.0
        %v2149 = vmax.f32 %v2123, 0.0
        %v2150 = vmax.f32 %v2128, 0.0
        %v2151 = vmax.f32 %v2133, 0.0
        %v2152 = vmax.f32 %v2138, 0.0
        %2153 = vst.msk [vmem:[#allocation2] sm:$0xff] %vm672, %v2141
        %2154 = vst.msk [vmem:[#allocation2 + $0x8] sm:$0xff] %vm672, %v2142
        %2155 = vst.msk [vmem:[#allocation2 + $0x10] sm:$0xff] %vm672, %v2143
        %2156 = vst.msk [vmem:[#allocation2 + $0x18] sm:$0xff] %vm672, %v2144
        %2157 = vst.msk [vmem:[#allocation2 + $0x20] sm:$0xff] %vm672, %v2145
        %2158 = vst.msk [vmem:[#allocation2 + $0x28] sm:$0xff] %vm672, %v2146
        %2159 = vst.msk [vmem:[#allocation2 + $0x30] sm:$0xff] %vm672, %v2147
        %2160 = vst.msk [vmem:[#allocation2 + $0x38] sm:$0xff] %vm672, %v2148
        %2161 = vst.msk [vmem:[#allocation2 + $0x40] sm:$0xff] %vm672, %v2149
        %2162 = vst.msk [vmem:[#allocation2 + $0x48] sm:$0xff] %vm672, %v2150
        %2163 = vst.msk [vmem:[#allocation2 + $0x50] sm:$0xff] %vm672, %v2151
        %2164 = vst.msk [vmem:[#allocation2 + $0x58] sm:$0xff] %vm672, %v2152
        %v2165 = vld [vmem:[#allocation2] sm:$0xff]
        %v2166 = vld [vmem:[#allocation2 + $0x8] sm:$0xff]
        %v2167 = vld [vmem:[#allocation2 + $0x10] sm:$0xff]
        %v2168 = vld [vmem:[#allocation2 + $0x18] sm:$0xff]
        %v2169 = vld [vmem:[#allocation2 + $0x20] sm:$0xff]
        %v2170 = vld [vmem:[#allocation2 + $0x28] sm:$0xff]
        %v2171 = vld [vmem:[#allocation2 + $0x30] sm:$0xff]
        %v2172 = vld [vmem:[#allocation2 + $0x38] sm:$0xff]
        %v2173 = vld [vmem:[#allocation2 + $0x40] sm:$0xff]
        %v2174 = vld [vmem:[#allocation2 + $0x48] sm:$0xff]
        %v2175 = vld [vmem:[#allocation2 + $0x50] sm:$0xff]
        %v2176 = vld [vmem:[#allocation2 + $0x58] sm:$0xff]
        %2189 = vrot.lane.b32.xlu0 %v2165, 64
        %v2190 = vpop.permute.xlu0 %2189
        %2191 = vrot.lane.b32.xlu0 %v2166, 64
        %v2192 = vpop.permute.xlu0 %2191
        %2193 = vrot.lane.b32.xlu0 %v2167, 64
        %v2194 = vpop.permute.xlu0 %2193
        %2195 = vrot.lane.b32.xlu0 %v2168, 64
        %v2196 = vpop.permute.xlu0 %2195
        %2197 = vrot.lane.b32.xlu0 %v2169, 64
        %v2198 = vpop.permute.xlu0 %2197
        %2199 = vrot.lane.b32.xlu0 %v2170, 64
        %v2200 = vpop.permute.xlu0 %2199
        %2201 = vrot.lane.b32.xlu0 %v2171, 64
        %v2202 = vpop.permute.xlu0 %2201
        %2203 = vrot.lane.b32.xlu0 %v2172, 64
        %v2204 = vpop.permute.xlu0 %2203
        %2205 = vrot.lane.b32.xlu0 %v2173, 64
        %v2206 = vpop.permute.xlu0 %2205
        %2207 = vrot.lane.b32.xlu0 %v2174, 64
        %v2208 = vpop.permute.xlu0 %2207
        %2209 = vrot.lane.b32.xlu0 %v2175, 64
        %v2210 = vpop.permute.xlu0 %2209
        %2211 = vrot.lane.b32.xlu0 %v2176, 64
        %v2212 = vpop.permute.xlu0 %2211
        %2225 = vst.msk [vmem:[#allocation3] sm:$0xff] %vm1652, %v2190
        %2226 = vst.msk [vmem:[#allocation3 + $0x10] sm:$0xff] %vm1652, %v2192
        %2227 = vst.msk [vmem:[#allocation3 + $0x20] sm:$0xff] %vm1652, %v2194
        %2228 = vst.msk [vmem:[#allocation3 + $0x30] sm:$0xff] %vm1652, %v2196
        %2229 = vst.msk [vmem:[#allocation3 + $0x40] sm:$0xff] %vm1652, %v2198
        %2230 = vst.msk [vmem:[#allocation3 + $0x50] sm:$0xff] %vm1652, %v2200
        %2231 = vst.msk [vmem:[#allocation3 + $0x60] sm:$0xff] %vm1652, %v2202
        %2232 = vst.msk [vmem:[#allocation3 + $0x70] sm:$0xff] %vm1652, %v2204
        %2233 = vst.msk [vmem:[#allocation3 + $0x80] sm:$0xff] %vm1652, %v2206
        %2234 = vst.msk [vmem:[#allocation3 + $0x90] sm:$0xff] %vm1652, %v2208
        %2235 = vst.msk [vmem:[#allocation3 + $0xa0] sm:$0xff] %vm1652, %v2210
        %2236 = vst.msk [vmem:[#allocation3 + $0xb0] sm:$0xff] %vm1652, %v2212
        %v2237 = vld [vmem:[#allocation2] sm:$0xff]
        %v2238 = vld [vmem:[#allocation2 + $0x8] sm:$0xff]
        %v2239 = vld [vmem:[#allocation2 + $0x10] sm:$0x3f]
        %v2243 = vrot.slane %v2237, 6
        %v2244 = vrot.slane %v2238, 6
        %v2245 = vsel %vm1671, %v2243, %v2244
        %v2246 = vrot.slane %v2239, 6
        %v2247 = vsel %vm1671, %v2244, %v2246
        %2251 = vst.msk [vmem:[#allocation3] sm:$0xfc] %vm1680, %v2243
        %2252 = vst.msk [vmem:[#allocation3 + $0x10] sm:$0xff] %vm672, %v2245
        %2253 = vst.msk [vmem:[#allocation3 + $0x20] sm:$0xff] %vm672, %v2247
        %v2254 = vld [vmem:[#allocation2 + $0x18] sm:$0xff]
        %v2255 = vld [vmem:[#allocation2 + $0x20] sm:$0xff]
        %v2256 = vld [vmem:[#allocation2 + $0x28] sm:$0x3f]
        %v2260 = vrot.slane %v2254, 6
        %v2261 = vrot.slane %v2255, 6
        %v2262 = vsel %vm1671, %v2260, %v2261
        %v2263 = vrot.slane %v2256, 6
        %v2264 = vsel %vm1671, %v2261, %v2263
        %2268 = vst.msk [vmem:[#allocation3 + $0x30] sm:$0xfc] %vm1680, %v2260
        %2269 = vst.msk [vmem:[#allocation3 + $0x40] sm:$0xff] %vm672, %v2262
        %2270 = vst.msk [vmem:[#allocation3 + $0x50] sm:$0xff] %vm672, %v2264
        %v2271 = vld [vmem:[#allocation2 + $0x30] sm:$0xff]
        %v2272 = vld [vmem:[#allocation2 + $0x38] sm:$0xff]
        %v2273 = vld [vmem:[#allocation2 + $0x40] sm:$0x3f]
        %v2277 = vrot.slane %v2271, 6
        %v2278 = vrot.slane %v2272, 6
        %v2279 = vsel %vm1671, %v2277, %v2278
        %v2280 = vrot.slane %v2273, 6
        %v2281 = vsel %vm1671, %v2278, %v2280
        %2285 = vst.msk [vmem:[#allocation3 + $0x60] sm:$0xfc] %vm1680, %v2277
        %2286 = vst.msk [vmem:[#allocation3 + $0x70] sm:$0xff] %vm672, %v2279
        %2287 = vst.msk [vmem:[#allocation3 + $0x80] sm:$0xff] %vm672, %v2281
        %v2288 = vld [vmem:[#allocation2 + $0x48] sm:$0xff]
        %v2289 = vld [vmem:[#allocation2 + $0x50] sm:$0xff]
        %v2290 = vld [vmem:[#allocation2 + $0x58] sm:$0x3f]
        %v2294 = vrot.slane %v2288, 6
        %v2295 = vrot.slane %v2289, 6
        %v2296 = vsel %vm1671, %v2294, %v2295
        %v2297 = vrot.slane %v2290, 6
        %v2298 = vsel %vm1671, %v2295, %v2297
        %2302 = vst.msk [vmem:[#allocation3 + $0x90] sm:$0xfc] %vm1680, %v2294
        %2303 = vst.msk [vmem:[#allocation3 + $0xa0] sm:$0xff] %vm672, %v2296
        %2304 = vst.msk [vmem:[#allocation3 + $0xb0] sm:$0xff] %vm672, %v2298
        %v2305 = vld [vmem:[#allocation2] sm:$0xff]
        %v2306 = vld [vmem:[#allocation2 + $0x8] sm:$0xff]
        %v2307 = vld [vmem:[#allocation2 + $0x10] sm:$0x7f]
        %v2311 = vrot.slane %v2305, 7
        %v2312 = vrot.slane %v2306, 7
        %v2313 = vsel %vm1741, %v2311, %v2312
        %v2314 = vrot.slane %v2307, 7
        %v2315 = vsel %vm1741, %v2312, %v2314
        %2316 = vrot.lane.b32.xlu0 %v2311, 32
        %v2317 = vpop.permute.xlu0 %2316
        %2318 = vrot.lane.b32.xlu0 %v2313, 32
        %v2319 = vpop.permute.xlu0 %2318
        %2320 = vrot.lane.b32.xlu0 %v2315, 32
        %v2321 = vpop.permute.xlu0 %2320
        %2325 = vst.msk [vmem:[#allocation3] sm:$0xfe] %vm1756, %v2317
        %2326 = vst.msk [vmem:[#allocation3 + $0x10] sm:$0xff] %vm1758, %v2319
        %2327 = vst.msk [vmem:[#allocation3 + $0x20] sm:$0xff] %vm1758, %v2321
        %v2328 = vld [vmem:[#allocation2 + $0x18] sm:$0xff]
        %v2329 = vld [vmem:[#allocation2 + $0x20] sm:$0xff]
        %v2330 = vld [vmem:[#allocation2 + $0x28] sm:$0x7f]
        %v2334 = vrot.slane %v2328, 7
        %v2335 = vrot.slane %v2329, 7
        %v2336 = vsel %vm1741, %v2334, %v2335
        %v2337 = vrot.slane %v2330, 7
        %v2338 = vsel %vm1741, %v2335, %v2337
        %2339 = vrot.lane.b32.xlu0 %v2334, 32
        %v2340 = vpop.permute.xlu0 %2339
        %2341 = vrot.lane.b32.xlu0 %v2336, 32
        %v2342 = vpop.permute.xlu0 %2341
        %2343 = vrot.lane.b32.xlu0 %v2338, 32
        %v2344 = vpop.permute.xlu0 %2343
        %2348 = vst.msk [vmem:[#allocation3 + $0x30] sm:$0xfe] %vm1756, %v2340
        %2349 = vst.msk [vmem:[#allocation3 + $0x40] sm:$0xff] %vm1758, %v2342
        %2350 = vst.msk [vmem:[#allocation3 + $0x50] sm:$0xff] %vm1758, %v2344
        %v2351 = vld [vmem:[#allocation2 + $0x30] sm:$0xff]
        %v2352 = vld [vmem:[#allocation2 + $0x38] sm:$0xff]
        %v2353 = vld [vmem:[#allocation2 + $0x40] sm:$0x7f]
        %v2357 = vrot.slane %v2351, 7
        %v2358 = vrot.slane %v2352, 7
        %v2359 = vsel %vm1741, %v2357, %v2358
        %v2360 = vrot.slane %v2353, 7
        %v2361 = vsel %vm1741, %v2358, %v2360
        %2362 = vrot.lane.b32.xlu0 %v2357, 32
        %v2363 = vpop.permute.xlu0 %2362
        %2364 = vrot.lane.b32.xlu0 %v2359, 32
        %v2365 = vpop.permute.xlu0 %2364
        %2366 = vrot.lane.b32.xlu0 %v2361, 32
        %v2367 = vpop.permute.xlu0 %2366
        %2371 = vst.msk [vmem:[#allocation3 + $0x60] sm:$0xfe] %vm1756, %v2363
        %2372 = vst.msk [vmem:[#allocation3 + $0x70] sm:$0xff] %vm1758, %v2365
        %2373 = vst.msk [vmem:[#allocation3 + $0x80] sm:$0xff] %vm1758, %v2367
        %v2374 = vld [vmem:[#allocation2 + $0x48] sm:$0xff]
        %v2375 = vld [vmem:[#allocation2 + $0x50] sm:$0xff]
        %v2376 = vld [vmem:[#allocation2 + $0x58] sm:$0x7f]
        %v2380 = vrot.slane %v2374, 7
        %v2381 = vrot.slane %v2375, 7
        %v2382 = vsel %vm1741, %v2380, %v2381
        %v2383 = vrot.slane %v2376, 7
        %v2384 = vsel %vm1741, %v2381, %v2383
        %2385 = vrot.lane.b32.xlu0 %v2380, 32
        %v2386 = vpop.permute.xlu0 %2385
        %2387 = vrot.lane.b32.xlu0 %v2382, 32
        %v2388 = vpop.permute.xlu0 %2387
        %2389 = vrot.lane.b32.xlu0 %v2384, 32
        %v2390 = vpop.permute.xlu0 %2389
        %2394 = vst.msk [vmem:[#allocation3 + $0x90] sm:$0xfe] %vm1756, %v2386
        %2395 = vst.msk [vmem:[#allocation3 + $0xa0] sm:$0xff] %vm1758, %v2388
        %2396 = vst.msk [vmem:[#allocation3 + $0xb0] sm:$0xff] %vm1758, %v2390
        %v2397 = vld [vmem:[#allocation2 + $0x1] sm:$0xff]
        %v2398 = vld [vmem:[#allocation2 + $0x9] sm:$0xff]
        %v2399 = vld [vmem:[#allocation2 + $0x11] sm:$0x7f]
        %2403 = vrot.lane.b32.xlu0 %v2397, 96
        %v2404 = vpop.permute.xlu0 %2403
        %2405 = vrot.lane.b32.xlu0 %v2398, 96
        %v2406 = vpop.permute.xlu0 %2405
        %2407 = vrot.lane.b32.xlu0 %v2399, 96
        %v2408 = vpop.permute.xlu0 %2407
        %2412 = vst.msk [vmem:[#allocation3] sm:$0xff] %vm1845, %v2404
        %2413 = vst.msk [vmem:[#allocation3 + $0x10] sm:$0xff] %vm1845, %v2406
        %2414 = vst.msk [vmem:[#allocation3 + $0x20] sm:$0x7f] %vm1848, %v2408
        %v2415 = vld [vmem:[#allocation2 + $0x19] sm:$0xff]
        %v2416 = vld [vmem:[#allocation2 + $0x21] sm:$0xff]
        %v2417 = vld [vmem:[#allocation2 + $0x29] sm:$0x7f]
        %2421 = vrot.lane.b32.xlu0 %v2415, 96
        %v2422 = vpop.permute.xlu0 %2421
        %2423 = vrot.lane.b32.xlu0 %v2416, 96
        %v2424 = vpop.permute.xlu0 %2423
        %2425 = vrot.lane.b32.xlu0 %v2417, 96
        %v2426 = vpop.permute.xlu0 %2425
        %2430 = vst.msk [vmem:[#allocation3 + $0x30] sm:$0xff] %vm1845, %v2422
        %2431 = vst.msk [vmem:[#allocation3 + $0x40] sm:$0xff] %vm1845, %v2424
        %2432 = vst.msk [vmem:[#allocation3 + $0x50] sm:$0x7f] %vm1848, %v2426
        %v2433 = vld [vmem:[#allocation2 + $0x31] sm:$0xff]
        %v2434 = vld [vmem:[#allocation2 + $0x39] sm:$0xff]
        %v2435 = vld [vmem:[#allocation2 + $0x41] sm:$0x7f]
        %2439 = vrot.lane.b32.xlu0 %v2433, 96
        %v2440 = vpop.permute.xlu0 %2439
        %2441 = vrot.lane.b32.xlu0 %v2434, 96
        %v2442 = vpop.permute.xlu0 %2441
        %2443 = vrot.lane.b32.xlu0 %v2435, 96
        %v2444 = vpop.permute.xlu0 %2443
        %2448 = vst.msk [vmem:[#allocation3 + $0x60] sm:$0xff] %vm1845, %v2440
        %2449 = vst.msk [vmem:[#allocation3 + $0x70] sm:$0xff] %vm1845, %v2442
        %2450 = vst.msk [vmem:[#allocation3 + $0x80] sm:$0x7f] %vm1848, %v2444
        %v2451 = vld [vmem:[#allocation2 + $0x49] sm:$0xff]
        %v2452 = vld [vmem:[#allocation2 + $0x51] sm:$0xff]
        %v2453 = vld [vmem:[#allocation2 + $0x59] sm:$0x7f]
        %2457 = vrot.lane.b32.xlu0 %v2451, 96
        %v2458 = vpop.permute.xlu0 %2457
        %2459 = vrot.lane.b32.xlu0 %v2452, 96
        %v2460 = vpop.permute.xlu0 %2459
        %2461 = vrot.lane.b32.xlu0 %v2453, 96
        %v2462 = vpop.permute.xlu0 %2461
        %2466 = vst.msk [vmem:[#allocation3 + $0x90] sm:$0xff] %vm1845, %v2458
        %2467 = vst.msk [vmem:[#allocation3 + $0xa0] sm:$0xff] %vm1845, %v2460
        %2468 = vst.msk [vmem:[#allocation3 + $0xb0] sm:$0x7f] %vm1848, %v2462
        %v2469 = vld [vmem:[#allocation2 + $0x2] sm:$0xff]
        %v2470 = vld [vmem:[#allocation2 + $0xa] sm:$0xff]
        %v2471 = vld [vmem:[#allocation2 + $0x12] sm:$0x3f]
        %2472 = vst.msk [vmem:[#allocation3 + $0x8] sm:$0xff] %vm672, %v2469
        %2473 = vst.msk [vmem:[#allocation3 + $0x18] sm:$0xff] %vm672, %v2470
        %2474 = vst.msk [vmem:[#allocation3 + $0x28] sm:$0x3f] %vm1909, %v2471
        %v2475 = vld [vmem:[#allocation2 + $0x1a] sm:$0xff]
        %v2476 = vld [vmem:[#allocation2 + $0x22] sm:$0xff]
        %v2477 = vld [vmem:[#allocation2 + $0x2a] sm:$0x3f]
        %2478 = vst.msk [vmem:[#allocation3 + $0x38] sm:$0xff] %vm672, %v2475
        %2479 = vst.msk [vmem:[#allocation3 + $0x48] sm:$0xff] %vm672, %v2476
        %2480 = vst.msk [vmem:[#allocation3 + $0x58] sm:$0x3f] %vm1909, %v2477
        %v2481 = vld [vmem:[#allocation2 + $0x32] sm:$0xff]
        %v2482 = vld [vmem:[#allocation2 + $0x3a] sm:$0xff]
        %v2483 = vld [vmem:[#allocation2 + $0x42] sm:$0x3f]
        %2484 = vst.msk [vmem:[#allocation3 + $0x68] sm:$0xff] %vm672, %v2481
        %2485 = vst.msk [vmem:[#allocation3 + $0x78] sm:$0xff] %vm672, %v2482
        %2486 = vst.msk [vmem:[#allocation3 + $0x88] sm:$0x3f] %vm1909, %v2483
        %v2487 = vld [vmem:[#allocation2 + $0x4a] sm:$0xff]
        %v2488 = vld [vmem:[#allocation2 + $0x52] sm:$0xff]
        %v2489 = vld [vmem:[#allocation2 + $0x5a] sm:$0x3f]
        %2490 = vst.msk [vmem:[#allocation3 + $0x98] sm:$0xff] %vm672, %v2487
        %2491 = vst.msk [vmem:[#allocation3 + $0xa8] sm:$0xff] %vm672, %v2488
        %2492 = vst.msk [vmem:[#allocation3 + $0xb8] sm:$0x3f] %vm1909, %v2489
        %v2493 = vld [vmem:[#allocation3] sm:$0xff]
        %v2494 = vld [vmem:[#allocation3 + $0x8] sm:$0xff]
        %v2495 = vld [vmem:[#allocation3 + $0x10] sm:$0xff]
        %v2496 = vld [vmem:[#allocation3 + $0x18] sm:$0xff]
        %v2497 = vld [vmem:[#allocation3 + $0x20] sm:$0xff]
        %v2498 = vld [vmem:[#allocation3 + $0x28] sm:$0xff]
        %v2499 = vld [vmem:[#allocation3 + $0x30] sm:$0xff]
        %v2500 = vld [vmem:[#allocation3 + $0x38] sm:$0xff]
        %v2501 = vld [vmem:[#allocation3 + $0x40] sm:$0xff]
        %v2502 = vld [vmem:[#allocation3 + $0x48] sm:$0xff]
        %v2503 = vld [vmem:[#allocation3 + $0x50] sm:$0xff]
        %v2504 = vld [vmem:[#allocation3 + $0x58] sm:$0xff]
        %v2505 = vld [vmem:[#allocation3 + $0x60] sm:$0xff]
        %v2506 = vld [vmem:[#allocation3 + $0x68] sm:$0xff]
        %v2507 = vld [vmem:[#allocation3 + $0x70] sm:$0xff]
        %v2508 = vld [vmem:[#allocation3 + $0x78] sm:$0xff]
        %v2509 = vld [vmem:[#allocation3 + $0x80] sm:$0xff]
        %v2510 = vld [vmem:[#allocation3 + $0x88] sm:$0xff]
        %v2511 = vld [vmem:[#allocation3 + $0x90] sm:$0xff]
        %v2512 = vld [vmem:[#allocation3 + $0x98] sm:$0xff]
        %v2513 = vld [vmem:[#allocation3 + $0xa0] sm:$0xff]
        %v2514 = vld [vmem:[#allocation3 + $0xa8] sm:$0xff]
        %v2515 = vld [vmem:[#allocation3 + $0xb0] sm:$0xff]
        %v2516 = vld [vmem:[#allocation3 + $0xb8] sm:$0xff]
        %s2517 = scalar_lea.vmem %s5, 160
        %v2518 = vld [vmem:[%s2517] sm:$0xff]
        %v2519 = vld [vmem:[%s2517 + $0x8] sm:$0xff]
        %v2520 = vld [vmem:[%s2517 + $0x10] sm:$0xff]
        %v2521 = vld [vmem:[%s2517 + $0x18] sm:$0xff]
        %v2522 = vld [vmem:[%s2517 + $0x20] sm:$0xff]
        %v2523 = vld [vmem:[%s2517 + $0x28] sm:$0xff]
        %v2524 = vld [vmem:[%s2517 + $0x30] sm:$0xff]
        %v2525 = vld [vmem:[%s2517 + $0x38] sm:$0xff]
        %v2526 = vld [vmem:[%s2517 + $0x40] sm:$0xff]
        %v2527 = vld [vmem:[%s2517 + $0x48] sm:$0xff]
        %v2528 = vld [vmem:[%s2517 + $0x50] sm:$0xff]
        %v2529 = vld [vmem:[%s2517 + $0x58] sm:$0xff]
        %v2530 = vld [vmem:[%s2517 + $0x60] sm:$0xff]
        %v2531 = vld [vmem:[%s2517 + $0x68] sm:$0xff]
        %v2532 = vld [vmem:[%s2517 + $0x70] sm:$0xff]
        %v2533 = vld [vmem:[%s2517 + $0x78] sm:$0xff]
        %v2534 = vld [vmem:[%s2517 + $0x80] sm:$0xff]
        %v2535 = vld [vmem:[%s2517 + $0x88] sm:$0xff]
        %v2536 = vld [vmem:[%s2517 + $0x90] sm:$0xff]
        %v2537 = vld [vmem:[%s2517 + $0x98] sm:$0xff]
        %s2538 = scalar_lea.vmem %s6, 1
        %v2539 = vld [vmem:[%s2538] sm:$0x1]
        %v2541 = vlaneseq
        %v2542 = vshrl.u32 %v2541, 7
        %v2543 = vsub.s32 0, %v2542
        %v2544 = vrot.slane %v2539, %v2543
        %v2547 = vsel %vm672, %v2494, 0
        %v2550 = vsel %vm672, %v2496, 0
        %v2553 = vsel %vm672, %v2498, 0
        %v2556 = vsel %vm672, %v2500, 0
        %v2559 = vsel %vm672, %v2502, 0
        %v2562 = vsel %vm672, %v2504, 0
        %v2565 = vsel %vm672, %v2506, 0
        %v2568 = vsel %vm672, %v2508, 0
        %v2571 = vsel %vm672, %v2510, 0
        %v2574 = vsel %vm672, %v2512, 0
        %v2577 = vsel %vm672, %v2514, 0
        %v2580 = vsel %vm672, %v2516, 0
        %2582 = vmatprep.subr.mxu0 0.0
        %2583 = vmatpush1.msra.mxu0 %v2533
        %2584 = vmatprep.subr.mxu0 0.0
        %2585 = vmatpush1.msra.mxu0 %v2532
        %2586 = vmatprep.subr.mxu0 0.0
        %2587 = vmatpush1.msra.mxu0 %v2531
        %2588 = vmatprep.subr.mxu0 0.0
        %2589 = vmatpush1.msra.mxu0 %v2530
        %2590 = vmatprep.subr.mxu0 0.0
        %2591 = vmatpush1.msra.mxu0 %v2529
        %2592 = vmatprep.subr.mxu0 0.0
        %2593 = vmatpush1.msra.mxu0 %v2528
        %2594 = vmatprep.subr.mxu0 0.0
        %2595 = vmatpush1.msra.mxu0 %v2527
        %2596 = vmatprep.subr.mxu0 0.0
        %2597 = vmatpush1.msra.mxu0 %v2526
        %2598 = vmatprep.subr.mxu0 0.0
        %2599 = vmatpush1.msra.mxu0 %v2525
        %2600 = vmatprep.subr.mxu0 0.0
        %2601 = vmatpush1.msra.mxu0 %v2524
        %2602 = vmatprep.subr.mxu0 0.0
        %2603 = vmatpush1.msra.mxu0 %v2523
        %2604 = vmatprep.subr.mxu0 0.0
        %2605 = vmatpush1.msra.mxu0 %v2522
        %2606 = vmatprep.subr.mxu0 0.0
        %2607 = vmatpush1.msra.mxu0 %v2521
        %2608 = vmatprep.subr.mxu0 0.0
        %2609 = vmatpush1.msra.mxu0 %v2520
        %2610 = vmatprep.subr.mxu0 0.0
        %2611 = vmatpush1.msra.mxu0 %v2519
        %2612 = vmatprep.subr.mxu0 0.0
        %2613 = vmatpush1.msra.mxu0 %v2518
        %2614 = vmatprep.subr.mxu0 0.0
        %2615 = vmatpush2.msra.mxu0 0.0
        %2616 = vmatprep.subr.mxu0 0.0
        %2617 = vmatpush2.msra.mxu0 0.0
        %2618 = vmatprep.subr.mxu0 0.0
        %2619 = vmatpush2.msra.mxu0 0.0
        %2620 = vmatprep.subr.mxu0 0.0
        %2621 = vmatpush2.msra.mxu0 0.0
        %2622 = vmatprep.subr.mxu0 0.0
        %2623 = vmatpush2.msra.mxu0 0.0
        %2624 = vmatprep.subr.mxu0 0.0
        %2625 = vmatpush2.msra.mxu0 0.0
        %2626 = vmatprep.subr.mxu0 0.0
        %2627 = vmatpush2.msra.mxu0 0.0
        %2628 = vmatprep.subr.mxu0 0.0
        %2629 = vmatpush2.msra.mxu0 0.0
        %2630 = vmatprep.subr.mxu0 0.0
        %2631 = vmatpush2.msra.mxu0 0.0
        %2632 = vmatprep.subr.mxu0 0.0
        %2633 = vmatpush2.msra.mxu0 0.0
        %2634 = vmatprep.subr.mxu0 0.0
        %2635 = vmatpush2.msra.mxu0 0.0
        %2636 = vmatprep.subr.mxu0 0.0
        %2637 = vmatpush2.msra.mxu0 0.0
        %2638 = vmatprep.subr.mxu0 0.0
        %2639 = vmatpush2.msra.mxu0 %v2537
        %2640 = vmatprep.subr.mxu0 0.0
        %2641 = vmatpush2.msra.mxu0 %v2536
        %2642 = vmatprep.subr.mxu0 0.0
        %2643 = vmatpush2.msra.mxu0 %v2535
        %2644 = vmatprep.subr.mxu0 0.0
        %2645 = vmatpush2.msra.mxu0 %v2534
        %2646 = vmatprep.mubr.f32.mxu0 %v2547
        %2647 = vmatmul.mubr.f32.gmra.mxu0 %v2493
        %v2648 = vpop.f32.mrf.mxu0
        %v2649 = vadd.f32 %v2544, %v2648
        %v2650 = vpop.f32.mrf.mxu0
        %2651 = vmatprep.mubr.f32.mxu0 %v2550
        %2652 = vmatmul.mubr.f32.gmra.mxu0 %v2495
        %v2653 = vpop.f32.mrf.mxu0
        %v2654 = vadd.f32 %v2544, %v2653
        %v2655 = vpop.f32.mrf.mxu0
        %2656 = vmatprep.mubr.f32.mxu0 %v2553
        %2657 = vmatmul.mubr.f32.gmra.mxu0 %v2497
        %v2658 = vpop.f32.mrf.mxu0
        %v2659 = vadd.f32 %v2544, %v2658
        %v2660 = vpop.f32.mrf.mxu0
        %2661 = vmatprep.mubr.f32.mxu0 %v2556
        %2662 = vmatmul.mubr.f32.gmra.mxu0 %v2499
        %v2663 = vpop.f32.mrf.mxu0
        %v2664 = vadd.f32 %v2544, %v2663
        %v2665 = vpop.f32.mrf.mxu0
        %2666 = vmatprep.mubr.f32.mxu0 %v2559
        %2667 = vmatmul.mubr.f32.gmra.mxu0 %v2501
        %v2668 = vpop.f32.mrf.mxu0
        %v2669 = vadd.f32 %v2544, %v2668
        %v2670 = vpop.f32.mrf.mxu0
        %2671 = vmatprep.mubr.f32.mxu0 %v2562
        %2672 = vmatmul.mubr.f32.gmra.mxu0 %v2503
        %v2673 = vpop.f32.mrf.mxu0
        %v2674 = vadd.f32 %v2544, %v2673
        %v2675 = vpop.f32.mrf.mxu0
        %2676 = vmatprep.mubr.f32.mxu0 %v2565
        %2677 = vmatmul.mubr.f32.gmra.mxu0 %v2505
        %v2678 = vpop.f32.mrf.mxu0
        %v2679 = vadd.f32 %v2544, %v2678
        %v2680 = vpop.f32.mrf.mxu0
        %2681 = vmatprep.mubr.f32.mxu0 %v2568
        %2682 = vmatmul.mubr.f32.gmra.mxu0 %v2507
        %v2683 = vpop.f32.mrf.mxu0
        %v2684 = vadd.f32 %v2544, %v2683
        %v2685 = vpop.f32.mrf.mxu0
        %2686 = vmatprep.mubr.f32.mxu0 %v2571
        %2687 = vmatmul.mubr.f32.gmra.mxu0 %v2509
        %v2688 = vpop.f32.mrf.mxu0
        %v2689 = vadd.f32 %v2544, %v2688
        %v2690 = vpop.f32.mrf.mxu0
        %2691 = vmatprep.mubr.f32.mxu0 %v2574
        %2692 = vmatmul.mubr.f32.gmra.mxu0 %v2511
        %v2693 = vpop.f32.mrf.mxu0
        %v2694 = vadd.f32 %v2544, %v2693
        %v2695 = vpop.f32.mrf.mxu0
        %2696 = vmatprep.mubr.f32.mxu0 %v2577
        %2697 = vmatmul.mubr.f32.gmra.mxu0 %v2513
        %v2698 = vpop.f32.mrf.mxu0
        %v2699 = vadd.f32 %v2544, %v2698
        %v2700 = vpop.f32.mrf.mxu0
        %2701 = vmatprep.mubr.f32.mxu0 %v2580
        %2702 = vmatmul.mubr.f32.gmra.mxu0 %v2515
        %v2703 = vpop.f32.mrf.mxu0
        %v2704 = vadd.f32 %v2544, %v2703
        %v2705 = vpop.f32.mrf.mxu0
        %2706 = vdwg.mxu0
        %v2707 = vmax.f32 %v2649, 0.0
        %v2708 = vmax.f32 %v2654, 0.0
        %v2709 = vmax.f32 %v2659, 0.0
        %v2710 = vmax.f32 %v2664, 0.0
        %v2711 = vmax.f32 %v2669, 0.0
        %v2712 = vmax.f32 %v2674, 0.0
        %v2713 = vmax.f32 %v2679, 0.0
        %v2714 = vmax.f32 %v2684, 0.0
        %v2715 = vmax.f32 %v2689, 0.0
        %v2716 = vmax.f32 %v2694, 0.0
        %v2717 = vmax.f32 %v2699, 0.0
        %v2718 = vmax.f32 %v2704, 0.0
        %2719 = vst.msk [vmem:[#allocation2] sm:$0xff] %vm672, %v2707
        %2720 = vst.msk [vmem:[#allocation2 + $0x8] sm:$0xff] %vm672, %v2708
        %2721 = vst.msk [vmem:[#allocation2 + $0x10] sm:$0xff] %vm672, %v2709
        %2722 = vst.msk [vmem:[#allocation2 + $0x18] sm:$0xff] %vm672, %v2710
        %2723 = vst.msk [vmem:[#allocation2 + $0x20] sm:$0xff] %vm672, %v2711
        %2724 = vst.msk [vmem:[#allocation2 + $0x28] sm:$0xff] %vm672, %v2712
        %2725 = vst.msk [vmem:[#allocation2 + $0x30] sm:$0xff] %vm672, %v2713
        %2726 = vst.msk [vmem:[#allocation2 + $0x38] sm:$0xff] %vm672, %v2714
        %2727 = vst.msk [vmem:[#allocation2 + $0x40] sm:$0xff] %vm672, %v2715
        %2728 = vst.msk [vmem:[#allocation2 + $0x48] sm:$0xff] %vm672, %v2716
        %2729 = vst.msk [vmem:[#allocation2 + $0x50] sm:$0xff] %vm672, %v2717
        %2730 = vst.msk [vmem:[#allocation2 + $0x58] sm:$0xff] %vm672, %v2718
        %v2731 = vld [vmem:[#allocation2] sm:$0xff]
        %v2732 = vld [vmem:[#allocation2 + $0x8] sm:$0xff]
        %v2733 = vld [vmem:[#allocation2 + $0x10] sm:$0xff]
        %v2734 = vld [vmem:[#allocation2 + $0x18] sm:$0xff]
        %v2735 = vld [vmem:[#allocation2 + $0x20] sm:$0xff]
        %v2736 = vld [vmem:[#allocation2 + $0x28] sm:$0xff]
        %v2737 = vld [vmem:[#allocation2 + $0x30] sm:$0xff]
        %v2738 = vld [vmem:[#allocation2 + $0x38] sm:$0xff]
        %v2739 = vld [vmem:[#allocation2 + $0x40] sm:$0xff]
        %v2740 = vld [vmem:[#allocation2 + $0x48] sm:$0xff]
        %v2741 = vld [vmem:[#allocation2 + $0x50] sm:$0xff]
        %v2742 = vld [vmem:[#allocation2 + $0x58] sm:$0xff]
        %2755 = vrot.lane.b32.xlu0 %v2731, 64
        %v2756 = vpop.permute.xlu0 %2755
        %2757 = vrot.lane.b32.xlu0 %v2732, 64
        %v2758 = vpop.permute.xlu0 %2757
        %2759 = vrot.lane.b32.xlu0 %v2733, 64
        %v2760 = vpop.permute.xlu0 %2759
        %2761 = vrot.lane.b32.xlu0 %v2734, 64
        %v2762 = vpop.permute.xlu0 %2761
        %2763 = vrot.lane.b32.xlu0 %v2735, 64
        %v2764 = vpop.permute.xlu0 %2763
        %2765 = vrot.lane.b32.xlu0 %v2736, 64
        %v2766 = vpop.permute.xlu0 %2765
        %2767 = vrot.lane.b32.xlu0 %v2737, 64
        %v2768 = vpop.permute.xlu0 %2767
        %2769 = vrot.lane.b32.xlu0 %v2738, 64
        %v2770 = vpop.permute.xlu0 %2769
        %2771 = vrot.lane.b32.xlu0 %v2739, 64
        %v2772 = vpop.permute.xlu0 %2771
        %2773 = vrot.lane.b32.xlu0 %v2740, 64
        %v2774 = vpop.permute.xlu0 %2773
        %2775 = vrot.lane.b32.xlu0 %v2741, 64
        %v2776 = vpop.permute.xlu0 %2775
        %2777 = vrot.lane.b32.xlu0 %v2742, 64
        %v2778 = vpop.permute.xlu0 %2777
        %2791 = vst.msk [vmem:[#allocation3] sm:$0xff] %vm1652, %v2756
        %2792 = vst.msk [vmem:[#allocation3 + $0x10] sm:$0xff] %vm1652, %v2758
        %2793 = vst.msk [vmem:[#allocation3 + $0x20] sm:$0xff] %vm1652, %v2760
        %2794 = vst.msk [vmem:[#allocation3 + $0x30] sm:$0xff] %vm1652, %v2762
        %2795 = vst.msk [vmem:[#allocation3 + $0x40] sm:$0xff] %vm1652, %v2764
        %2796 = vst.msk [vmem:[#allocation3 + $0x50] sm:$0xff] %vm1652, %v2766
        %2797 = vst.msk [vmem:[#allocation3 + $0x60] sm:$0xff] %vm1652, %v2768
        %2798 = vst.msk [vmem:[#allocation3 + $0x70] sm:$0xff] %vm1652, %v2770
        %2799 = vst.msk [vmem:[#allocation3 + $0x80] sm:$0xff] %vm1652, %v2772
        %2800 = vst.msk [vmem:[#allocation3 + $0x90] sm:$0xff] %vm1652, %v2774
        %2801 = vst.msk [vmem:[#allocation3 + $0xa0] sm:$0xff] %vm1652, %v2776
        %2802 = vst.msk [vmem:[#allocation3 + $0xb0] sm:$0xff] %vm1652, %v2778
        %v2803 = vld [vmem:[#allocation2] sm:$0xff]
        %v2804 = vld [vmem:[#allocation2 + $0x8] sm:$0xff]
        %v2805 = vld [vmem:[#allocation2 + $0x10] sm:$0x3f]
        %v2809 = vrot.slane %v2803, 6
        %v2810 = vrot.slane %v2804, 6
        %v2811 = vsel %vm1671, %v2809, %v2810
        %v2812 = vrot.slane %v2805, 6
        %v2813 = vsel %vm1671, %v2810, %v2812
        %2817 = vst.msk [vmem:[#allocation3] sm:$0xfc] %vm1680, %v2809
        %2818 = vst.msk [vmem:[#allocation3 + $0x10] sm:$0xff] %vm672, %v2811
        %2819 = vst.msk [vmem:[#allocation3 + $0x20] sm:$0xff] %vm672, %v2813
        %v2820 = vld [vmem:[#allocation2 + $0x18] sm:$0xff]
        %v2821 = vld [vmem:[#allocation2 + $0x20] sm:$0xff]
        %v2822 = vld [vmem:[#allocation2 + $0x28] sm:$0x3f]
        %v2826 = vrot.slane %v2820, 6
        %v2827 = vrot.slane %v2821, 6
        %v2828 = vsel %vm1671, %v2826, %v2827
        %v2829 = vrot.slane %v2822, 6
        %v2830 = vsel %vm1671, %v2827, %v2829
        %2834 = vst.msk [vmem:[#allocation3 + $0x30] sm:$0xfc] %vm1680, %v2826
        %2835 = vst.msk [vmem:[#allocation3 + $0x40] sm:$0xff] %vm672, %v2828
        %2836 = vst.msk [vmem:[#allocation3 + $0x50] sm:$0xff] %vm672, %v2830
        %v2837 = vld [vmem:[#allocation2 + $0x30] sm:$0xff]
        %v2838 = vld [vmem:[#allocation2 + $0x38] sm:$0xff]
        %v2839 = vld [vmem:[#allocation2 + $0x40] sm:$0x3f]
        %v2843 = vrot.slane %v2837, 6
        %v2844 = vrot.slane %v2838, 6
        %v2845 = vsel %vm1671, %v2843, %v2844
        %v2846 = vrot.slane %v2839, 6
        %v2847 = vsel %vm1671, %v2844, %v2846
        %2851 = vst.msk [vmem:[#allocation3 + $0x60] sm:$0xfc] %vm1680, %v2843
        %2852 = vst.msk [vmem:[#allocation3 + $0x70] sm:$0xff] %vm672, %v2845
        %2853 = vst.msk [vmem:[#allocation3 + $0x80] sm:$0xff] %vm672, %v2847
        %v2854 = vld [vmem:[#allocation2 + $0x48] sm:$0xff]
        %v2855 = vld [vmem:[#allocation2 + $0x50] sm:$0xff]
        %v2856 = vld [vmem:[#allocation2 + $0x58] sm:$0x3f]
        %v2860 = vrot.slane %v2854, 6
        %v2861 = vrot.slane %v2855, 6
        %v2862 = vsel %vm1671, %v2860, %v2861
        %v2863 = vrot.slane %v2856, 6
        %v2864 = vsel %vm1671, %v2861, %v2863
        %2868 = vst.msk [vmem:[#allocation3 + $0x90] sm:$0xfc] %vm1680, %v2860
        %2869 = vst.msk [vmem:[#allocation3 + $0xa0] sm:$0xff] %vm672, %v2862
        %2870 = vst.msk [vmem:[#allocation3 + $0xb0] sm:$0xff] %vm672, %v2864
        %v2871 = vld [vmem:[#allocation2] sm:$0xff]
        %v2872 = vld [vmem:[#allocation2 + $0x8] sm:$0xff]
        %v2873 = vld [vmem:[#allocation2 + $0x10] sm:$0x7f]
        %v2877 = vrot.slane %v2871, 7
        %v2878 = vrot.slane %v2872, 7
        %v2879 = vsel %vm1741, %v2877, %v2878
        %v2880 = vrot.slane %v2873, 7
        %v2881 = vsel %vm1741, %v2878, %v2880
        %2882 = vrot.lane.b32.xlu0 %v2877, 32
        %v2883 = vpop.permute.xlu0 %2882
        %2884 = vrot.lane.b32.xlu0 %v2879, 32
        %v2885 = vpop.permute.xlu0 %2884
        %2886 = vrot.lane.b32.xlu0 %v2881, 32
        %v2887 = vpop.permute.xlu0 %2886
        %2891 = vst.msk [vmem:[#allocation3] sm:$0xfe] %vm1756, %v2883
        %2892 = vst.msk [vmem:[#allocation3 + $0x10] sm:$0xff] %vm1758, %v2885
        %2893 = vst.msk [vmem:[#allocation3 + $0x20] sm:$0xff] %vm1758, %v2887
        %v2894 = vld [vmem:[#allocation2 + $0x18] sm:$0xff]
        %v2895 = vld [vmem:[#allocation2 + $0x20] sm:$0xff]
        %v2896 = vld [vmem:[#allocation2 + $0x28] sm:$0x7f]
        %v2900 = vrot.slane %v2894, 7
        %v2901 = vrot.slane %v2895, 7
        %v2902 = vsel %vm1741, %v2900, %v2901
        %v2903 = vrot.slane %v2896, 7
        %v2904 = vsel %vm1741, %v2901, %v2903
        %2905 = vrot.lane.b32.xlu0 %v2900, 32
        %v2906 = vpop.permute.xlu0 %2905
        %2907 = vrot.lane.b32.xlu0 %v2902, 32
        %v2908 = vpop.permute.xlu0 %2907
        %2909 = vrot.lane.b32.xlu0 %v2904, 32
        %v2910 = vpop.permute.xlu0 %2909
        %2914 = vst.msk [vmem:[#allocation3 + $0x30] sm:$0xfe] %vm1756, %v2906
        %2915 = vst.msk [vmem:[#allocation3 + $0x40] sm:$0xff] %vm1758, %v2908
        %2916 = vst.msk [vmem:[#allocation3 + $0x50] sm:$0xff] %vm1758, %v2910
        %v2917 = vld [vmem:[#allocation2 + $0x30] sm:$0xff]
        %v2918 = vld [vmem:[#allocation2 + $0x38] sm:$0xff]
        %v2919 = vld [vmem:[#allocation2 + $0x40] sm:$0x7f]
        %v2923 = vrot.slane %v2917, 7
        %v2924 = vrot.slane %v2918, 7
        %v2925 = vsel %vm1741, %v2923, %v2924
        %v2926 = vrot.slane %v2919, 7
        %v2927 = vsel %vm1741, %v2924, %v2926
        %2928 = vrot.lane.b32.xlu0 %v2923, 32
        %v2929 = vpop.permute.xlu0 %2928
        %2930 = vrot.lane.b32.xlu0 %v2925, 32
        %v2931 = vpop.permute.xlu0 %2930
        %2932 = vrot.lane.b32.xlu0 %v2927, 32
        %v2933 = vpop.permute.xlu0 %2932
        %2937 = vst.msk [vmem:[#allocation3 + $0x60] sm:$0xfe] %vm1756, %v2929
        %2938 = vst.msk [vmem:[#allocation3 + $0x70] sm:$0xff] %vm1758, %v2931
        %2939 = vst.msk [vmem:[#allocation3 + $0x80] sm:$0xff] %vm1758, %v2933
        %v2940 = vld [vmem:[#allocation2 + $0x48] sm:$0xff]
        %v2941 = vld [vmem:[#allocation2 + $0x50] sm:$0xff]
        %v2942 = vld [vmem:[#allocation2 + $0x58] sm:$0x7f]
        %v2946 = vrot.slane %v2940, 7
        %v2947 = vrot.slane %v2941, 7
        %v2948 = vsel %vm1741, %v2946, %v2947
        %v2949 = vrot.slane %v2942, 7
        %v2950 = vsel %vm1741, %v2947, %v2949
        %2951 = vrot.lane.b32.xlu0 %v2946, 32
        %v2952 = vpop.permute.xlu0 %2951
        %2953 = vrot.lane.b32.xlu0 %v2948, 32
        %v2954 = vpop.permute.xlu0 %2953
        %2955 = vrot.lane.b32.xlu0 %v2950, 32
        %v2956 = vpop.permute.xlu0 %2955
        %2960 = vst.msk [vmem:[#allocation3 + $0x90] sm:$0xfe] %vm1756, %v2952
        %2961 = vst.msk [vmem:[#allocation3 + $0xa0] sm:$0xff] %vm1758, %v2954
        %2962 = vst.msk [vmem:[#allocation3 + $0xb0] sm:$0xff] %vm1758, %v2956
        %v2963 = vld [vmem:[#allocation2 + $0x1] sm:$0xff]
        %v2964 = vld [vmem:[#allocation2 + $0x9] sm:$0xff]
        %v2965 = vld [vmem:[#allocation2 + $0x11] sm:$0x7f]
        %2969 = vrot.lane.b32.xlu0 %v2963, 96
        %v2970 = vpop.permute.xlu0 %2969
        %2971 = vrot.lane.b32.xlu0 %v2964, 96
        %v2972 = vpop.permute.xlu0 %2971
        %2973 = vrot.lane.b32.xlu0 %v2965, 96
        %v2974 = vpop.permute.xlu0 %2973
        %2978 = vst.msk [vmem:[#allocation3] sm:$0xff] %vm1845, %v2970
        %2979 = vst.msk [vmem:[#allocation3 + $0x10] sm:$0xff] %vm1845, %v2972
        %2980 = vst.msk [vmem:[#allocation3 + $0x20] sm:$0x7f] %vm1848, %v2974
        %v2981 = vld [vmem:[#allocation2 + $0x19] sm:$0xff]
        %v2982 = vld [vmem:[#allocation2 + $0x21] sm:$0xff]
        %v2983 = vld [vmem:[#allocation2 + $0x29] sm:$0x7f]
        %2987 = vrot.lane.b32.xlu0 %v2981, 96
        %v2988 = vpop.permute.xlu0 %2987
        %2989 = vrot.lane.b32.xlu0 %v2982, 96
        %v2990 = vpop.permute.xlu0 %2989
        %2991 = vrot.lane.b32.xlu0 %v2983, 96
        %v2992 = vpop.permute.xlu0 %2991
        %2996 = vst.msk [vmem:[#allocation3 + $0x30] sm:$0xff] %vm1845, %v2988
        %2997 = vst.msk [vmem:[#allocation3 + $0x40] sm:$0xff] %vm1845, %v2990
        %2998 = vst.msk [vmem:[#allocation3 + $0x50] sm:$0x7f] %vm1848, %v2992
        %v2999 = vld [vmem:[#allocation2 + $0x31] sm:$0xff]
        %v3000 = vld [vmem:[#allocation2 + $0x39] sm:$0xff]
        %v3001 = vld [vmem:[#allocation2 + $0x41] sm:$0x7f]
        %3005 = vrot.lane.b32.xlu0 %v2999, 96
        %v3006 = vpop.permute.xlu0 %3005
        %3007 = vrot.lane.b32.xlu0 %v3000, 96
        %v3008 = vpop.permute.xlu0 %3007
        %3009 = vrot.lane.b32.xlu0 %v3001, 96
        %v3010 = vpop.permute.xlu0 %3009
        %3014 = vst.msk [vmem:[#allocation3 + $0x60] sm:$0xff] %vm1845, %v3006
        %3015 = vst.msk [vmem:[#allocation3 + $0x70] sm:$0xff] %vm1845, %v3008
        %3016 = vst.msk [vmem:[#allocation3 + $0x80] sm:$0x7f] %vm1848, %v3010
        %v3017 = vld [vmem:[#allocation2 + $0x49] sm:$0xff]
        %v3018 = vld [vmem:[#allocation2 + $0x51] sm:$0xff]
        %v3019 = vld [vmem:[#allocation2 + $0x59] sm:$0x7f]
        %3023 = vrot.lane.b32.xlu0 %v3017, 96
        %v3024 = vpop.permute.xlu0 %3023
        %3025 = vrot.lane.b32.xlu0 %v3018, 96
        %v3026 = vpop.permute.xlu0 %3025
        %3027 = vrot.lane.b32.xlu0 %v3019, 96
        %v3028 = vpop.permute.xlu0 %3027
        %3032 = vst.msk [vmem:[#allocation3 + $0x90] sm:$0xff] %vm1845, %v3024
        %3033 = vst.msk [vmem:[#allocation3 + $0xa0] sm:$0xff] %vm1845, %v3026
        %3034 = vst.msk [vmem:[#allocation3 + $0xb0] sm:$0x7f] %vm1848, %v3028
        %v3035 = vld [vmem:[#allocation2 + $0x2] sm:$0xff]
        %v3036 = vld [vmem:[#allocation2 + $0xa] sm:$0xff]
        %v3037 = vld [vmem:[#allocation2 + $0x12] sm:$0x3f]
        %3038 = vst.msk [vmem:[#allocation3 + $0x8] sm:$0xff] %vm672, %v3035
        %3039 = vst.msk [vmem:[#allocation3 + $0x18] sm:$0xff] %vm672, %v3036
        %3040 = vst.msk [vmem:[#allocation3 + $0x28] sm:$0x3f] %vm1909, %v3037
        %v3041 = vld [vmem:[#allocation2 + $0x1a] sm:$0xff]
        %v3042 = vld [vmem:[#allocation2 + $0x22] sm:$0xff]
        %v3043 = vld [vmem:[#allocation2 + $0x2a] sm:$0x3f]
        %3044 = vst.msk [vmem:[#allocation3 + $0x38] sm:$0xff] %vm672, %v3041
        %3045 = vst.msk [vmem:[#allocation3 + $0x48] sm:$0xff] %vm672, %v3042
        %3046 = vst.msk [vmem:[#allocation3 + $0x58] sm:$0x3f] %vm1909, %v3043
        %v3047 = vld [vmem:[#allocation2 + $0x32] sm:$0xff]
        %v3048 = vld [vmem:[#allocation2 + $0x3a] sm:$0xff]
        %v3049 = vld [vmem:[#allocation2 + $0x42] sm:$0x3f]
        %3050 = vst.msk [vmem:[#allocation3 + $0x68] sm:$0xff] %vm672, %v3047
        %3051 = vst.msk [vmem:[#allocation3 + $0x78] sm:$0xff] %vm672, %v3048
        %3052 = vst.msk [vmem:[#allocation3 + $0x88] sm:$0x3f] %vm1909, %v3049
        %v3053 = vld [vmem:[#allocation2 + $0x4a] sm:$0xff]
        %v3054 = vld [vmem:[#allocation2 + $0x52] sm:$0xff]
        %v3055 = vld [vmem:[#allocation2 + $0x5a] sm:$0x3f]
        %3056 = vst.msk [vmem:[#allocation3 + $0x98] sm:$0xff] %vm672, %v3053
        %3057 = vst.msk [vmem:[#allocation3 + $0xa8] sm:$0xff] %vm672, %v3054
        %3058 = vst.msk [vmem:[#allocation3 + $0xb8] sm:$0x3f] %vm1909, %v3055
        %v3059 = vld [vmem:[#allocation3] sm:$0xff]
        %v3060 = vld [vmem:[#allocation3 + $0x8] sm:$0xff]
        %v3061 = vld [vmem:[#allocation3 + $0x10] sm:$0xff]
        %v3062 = vld [vmem:[#allocation3 + $0x18] sm:$0xff]
        %v3063 = vld [vmem:[#allocation3 + $0x20] sm:$0xff]
        %v3064 = vld [vmem:[#allocation3 + $0x28] sm:$0xff]
        %v3065 = vld [vmem:[#allocation3 + $0x30] sm:$0xff]
        %v3066 = vld [vmem:[#allocation3 + $0x38] sm:$0xff]
        %v3067 = vld [vmem:[#allocation3 + $0x40] sm:$0xff]
        %v3068 = vld [vmem:[#allocation3 + $0x48] sm:$0xff]
        %v3069 = vld [vmem:[#allocation3 + $0x50] sm:$0xff]
        %v3070 = vld [vmem:[#allocation3 + $0x58] sm:$0xff]
        %v3071 = vld [vmem:[#allocation3 + $0x60] sm:$0xff]
        %v3072 = vld [vmem:[#allocation3 + $0x68] sm:$0xff]
        %v3073 = vld [vmem:[#allocation3 + $0x70] sm:$0xff]
        %v3074 = vld [vmem:[#allocation3 + $0x78] sm:$0xff]
        %v3075 = vld [vmem:[#allocation3 + $0x80] sm:$0xff]
        %v3076 = vld [vmem:[#allocation3 + $0x88] sm:$0xff]
        %v3077 = vld [vmem:[#allocation3 + $0x90] sm:$0xff]
        %v3078 = vld [vmem:[#allocation3 + $0x98] sm:$0xff]
        %v3079 = vld [vmem:[#allocation3 + $0xa0] sm:$0xff]
        %v3080 = vld [vmem:[#allocation3 + $0xa8] sm:$0xff]
        %v3081 = vld [vmem:[#allocation3 + $0xb0] sm:$0xff]
        %v3082 = vld [vmem:[#allocation3 + $0xb8] sm:$0xff]
        %s3083 = scalar_lea.vmem %s5, 320
        %v3084 = vld [vmem:[%s3083] sm:$0xff]
        %v3085 = vld [vmem:[%s3083 + $0x8] sm:$0xff]
        %v3086 = vld [vmem:[%s3083 + $0x10] sm:$0xff]
        %v3087 = vld [vmem:[%s3083 + $0x18] sm:$0xff]
        %v3088 = vld [vmem:[%s3083 + $0x20] sm:$0xff]
        %v3089 = vld [vmem:[%s3083 + $0x28] sm:$0xff]
        %v3090 = vld [vmem:[%s3083 + $0x30] sm:$0xff]
        %v3091 = vld [vmem:[%s3083 + $0x38] sm:$0xff]
        %v3092 = vld [vmem:[%s3083 + $0x40] sm:$0xff]
        %v3093 = vld [vmem:[%s3083 + $0x48] sm:$0xff]
        %v3094 = vld [vmem:[%s3083 + $0x50] sm:$0xff]
        %v3095 = vld [vmem:[%s3083 + $0x58] sm:$0xff]
        %v3096 = vld [vmem:[%s3083 + $0x60] sm:$0xff]
        %v3097 = vld [vmem:[%s3083 + $0x68] sm:$0xff]
        %v3098 = vld [vmem:[%s3083 + $0x70] sm:$0xff]
        %v3099 = vld [vmem:[%s3083 + $0x78] sm:$0xff]
        %v3100 = vld [vmem:[%s3083 + $0x80] sm:$0xff]
        %v3101 = vld [vmem:[%s3083 + $0x88] sm:$0xff]
        %v3102 = vld [vmem:[%s3083 + $0x90] sm:$0xff]
        %v3103 = vld [vmem:[%s3083 + $0x98] sm:$0xff]
        %s3104 = scalar_lea.vmem %s6, 2
        %v3105 = vld [vmem:[%s3104] sm:$0x1]
        %v3107 = vlaneseq
        %v3108 = vshrl.u32 %v3107, 7
        %v3109 = vsub.s32 0, %v3108
        %v3110 = vrot.slane %v3105, %v3109
        %v3113 = vsel %vm672, %v3060, 0
        %v3116 = vsel %vm672, %v3062, 0
        %v3119 = vsel %vm672, %v3064, 0
        %v3122 = vsel %vm672, %v3066, 0
        %v3125 = vsel %vm672, %v3068, 0
        %v3128 = vsel %vm672, %v3070, 0
        %v3131 = vsel %vm672, %v3072, 0
        %v3134 = vsel %vm672, %v3074, 0
        %v3137 = vsel %vm672, %v3076, 0
        %v3140 = vsel %vm672, %v3078, 0
        %v3143 = vsel %vm672, %v3080, 0
        %v3146 = vsel %vm672, %v3082, 0
        %3148 = vmatprep.subr.mxu0 0.0
        %3149 = vmatpush1.msra.mxu0 %v3099
        %3150 = vmatprep.subr.mxu0 0.0
        %3151 = vmatpush1.msra.mxu0 %v3098
        %3152 = vmatprep.subr.mxu0 0.0
        %3153 = vmatpush1.msra.mxu0 %v3097
        %3154 = vmatprep.subr.mxu0 0.0
        %3155 = vmatpush1.msra.mxu0 %v3096
        %3156 = vmatprep.subr.mxu0 0.0
        %3157 = vmatpush1.msra.mxu0 %v3095
        %3158 = vmatprep.subr.mxu0 0.0
        %3159 = vmatpush1.msra.mxu0 %v3094
        %3160 = vmatprep.subr.mxu0 0.0
        %3161 = vmatpush1.msra.mxu0 %v3093
        %3162 = vmatprep.subr.mxu0 0.0
        %3163 = vmatpush1.msra.mxu0 %v3092
        %3164 = vmatprep.subr.mxu0 0.0
        %3165 = vmatpush1.msra.mxu0 %v3091
        %3166 = vmatprep.subr.mxu0 0.0
        %3167 = vmatpush1.msra.mxu0 %v3090
        %3168 = vmatprep.subr.mxu0 0.0
        %3169 = vmatpush1.msra.mxu0 %v3089
        %3170 = vmatprep.subr.mxu0 0.0
        %3171 = vmatpush1.msra.mxu0 %v3088
        %3172 = vmatprep.subr.mxu0 0.0
        %3173 = vmatpush1.msra.mxu0 %v3087
        %3174 = vmatprep.subr.mxu0 0.0
        %3175 = vmatpush1.msra.mxu0 %v3086
        %3176 = vmatprep.subr.mxu0 0.0
        %3177 = vmatpush1.msra.mxu0 %v3085
        %3178 = vmatprep.subr.mxu0 0.0
        %3179 = vmatpush1.msra.mxu0 %v3084
        %3180 = vmatprep.subr.mxu0 0.0
        %3181 = vmatpush2.msra.mxu0 0.0
        %3182 = vmatprep.subr.mxu0 0.0
        %3183 = vmatpush2.msra.mxu0 0.0
        %3184 = vmatprep.subr.mxu0 0.0
        %3185 = vmatpush2.msra.mxu0 0.0
        %3186 = vmatprep.subr.mxu0 0.0
        %3187 = vmatpush2.msra.mxu0 0.0
        %3188 = vmatprep.subr.mxu0 0.0
        %3189 = vmatpush2.msra.mxu0 0.0
        %3190 = vmatprep.subr.mxu0 0.0
        %3191 = vmatpush2.msra.mxu0 0.0
        %3192 = vmatprep.subr.mxu0 0.0
        %3193 = vmatpush2.msra.mxu0 0.0
        %3194 = vmatprep.subr.mxu0 0.0
        %3195 = vmatpush2.msra.mxu0 0.0
        %3196 = vmatprep.subr.mxu0 0.0
        %3197 = vmatpush2.msra.mxu0 0.0
        %3198 = vmatprep.subr.mxu0 0.0
        %3199 = vmatpush2.msra.mxu0 0.0
        %3200 = vmatprep.subr.mxu0 0.0
        %3201 = vmatpush2.msra.mxu0 0.0
        %3202 = vmatprep.subr.mxu0 0.0
        %3203 = vmatpush2.msra.mxu0 0.0
        %3204 = vmatprep.subr.mxu0 0.0
        %3205 = vmatpush2.msra.mxu0 %v3103
        %3206 = vmatprep.subr.mxu0 0.0
        %3207 = vmatpush2.msra.mxu0 %v3102
        %3208 = vmatprep.subr.mxu0 0.0
        %3209 = vmatpush2.msra.mxu0 %v3101
        %3210 = vmatprep.subr.mxu0 0.0
        %3211 = vmatpush2.msra.mxu0 %v3100
        %3212 = vmatprep.mubr.f32.mxu0 %v3113
        %3213 = vmatmul.mubr.f32.gmra.mxu0 %v3059
        %v3214 = vpop.f32.mrf.mxu0
        %v3215 = vadd.f32 %v3110, %v3214
        %v3216 = vpop.f32.mrf.mxu0
        %3217 = vmatprep.mubr.f32.mxu0 %v3116
        %3218 = vmatmul.mubr.f32.gmra.mxu0 %v3061
        %v3219 = vpop.f32.mrf.mxu0
        %v3220 = vadd.f32 %v3110, %v3219
        %v3221 = vpop.f32.mrf.mxu0
        %3222 = vmatprep.mubr.f32.mxu0 %v3119
        %3223 = vmatmul.mubr.f32.gmra.mxu0 %v3063
        %v3224 = vpop.f32.mrf.mxu0
        %v3225 = vadd.f32 %v3110, %v3224
        %v3226 = vpop.f32.mrf.mxu0
        %3227 = vmatprep.mubr.f32.mxu0 %v3122
        %3228 = vmatmul.mubr.f32.gmra.mxu0 %v3065
        %v3229 = vpop.f32.mrf.mxu0
        %v3230 = vadd.f32 %v3110, %v3229
        %v3231 = vpop.f32.mrf.mxu0
        %3232 = vmatprep.mubr.f32.mxu0 %v3125
        %3233 = vmatmul.mubr.f32.gmra.mxu0 %v3067
        %v3234 = vpop.f32.mrf.mxu0
        %v3235 = vadd.f32 %v3110, %v3234
        %v3236 = vpop.f32.mrf.mxu0
        %3237 = vmatprep.mubr.f32.mxu0 %v3128
        %3238 = vmatmul.mubr.f32.gmra.mxu0 %v3069
        %v3239 = vpop.f32.mrf.mxu0
        %v3240 = vadd.f32 %v3110, %v3239
        %v3241 = vpop.f32.mrf.mxu0
        %3242 = vmatprep.mubr.f32.mxu0 %v3131
        %3243 = vmatmul.mubr.f32.gmra.mxu0 %v3071
        %v3244 = vpop.f32.mrf.mxu0
        %v3245 = vadd.f32 %v3110, %v3244
        %v3246 = vpop.f32.mrf.mxu0
        %3247 = vmatprep.mubr.f32.mxu0 %v3134
        %3248 = vmatmul.mubr.f32.gmra.mxu0 %v3073
        %v3249 = vpop.f32.mrf.mxu0
        %v3250 = vadd.f32 %v3110, %v3249
        %v3251 = vpop.f32.mrf.mxu0
        %3252 = vmatprep.mubr.f32.mxu0 %v3137
        %3253 = vmatmul.mubr.f32.gmra.mxu0 %v3075
        %v3254 = vpop.f32.mrf.mxu0
        %v3255 = vadd.f32 %v3110, %v3254
        %v3256 = vpop.f32.mrf.mxu0
        %3257 = vmatprep.mubr.f32.mxu0 %v3140
        %3258 = vmatmul.mubr.f32.gmra.mxu0 %v3077
        %v3259 = vpop.f32.mrf.mxu0
        %v3260 = vadd.f32 %v3110, %v3259
        %v3261 = vpop.f32.mrf.mxu0
        %3262 = vmatprep.mubr.f32.mxu0 %v3143
        %3263 = vmatmul.mubr.f32.gmra.mxu0 %v3079
        %v3264 = vpop.f32.mrf.mxu0
        %v3265 = vadd.f32 %v3110, %v3264
        %v3266 = vpop.f32.mrf.mxu0
        %3267 = vmatprep.mubr.f32.mxu0 %v3146
        %3268 = vmatmul.mubr.f32.gmra.mxu0 %v3081
        %v3269 = vpop.f32.mrf.mxu0
        %v3270 = vadd.f32 %v3110, %v3269
        %v3271 = vpop.f32.mrf.mxu0
        %3272 = vdwg.mxu0
        %v3273 = vmax.f32 %v3215, 0.0
        %v3274 = vmax.f32 %v3220, 0.0
        %v3275 = vmax.f32 %v3225, 0.0
        %v3276 = vmax.f32 %v3230, 0.0
        %v3277 = vmax.f32 %v3235, 0.0
        %v3278 = vmax.f32 %v3240, 0.0
        %v3279 = vmax.f32 %v3245, 0.0
        %v3280 = vmax.f32 %v3250, 0.0
        %v3281 = vmax.f32 %v3255, 0.0
        %v3282 = vmax.f32 %v3260, 0.0
        %v3283 = vmax.f32 %v3265, 0.0
        %v3284 = vmax.f32 %v3270, 0.0
        %3285 = vst.msk [vmem:[#allocation2] sm:$0xff] %vm672, %v3273
        %3286 = vst.msk [vmem:[#allocation2 + $0x8] sm:$0xff] %vm672, %v3274
        %3287 = vst.msk [vmem:[#allocation2 + $0x10] sm:$0xff] %vm672, %v3275
        %3288 = vst.msk [vmem:[#allocation2 + $0x18] sm:$0xff] %vm672, %v3276
        %3289 = vst.msk [vmem:[#allocation2 + $0x20] sm:$0xff] %vm672, %v3277
        %3290 = vst.msk [vmem:[#allocation2 + $0x28] sm:$0xff] %vm672, %v3278
        %3291 = vst.msk [vmem:[#allocation2 + $0x30] sm:$0xff] %vm672, %v3279
        %3292 = vst.msk [vmem:[#allocation2 + $0x38] sm:$0xff] %vm672, %v3280
        %3293 = vst.msk [vmem:[#allocation2 + $0x40] sm:$0xff] %vm672, %v3281
        %3294 = vst.msk [vmem:[#allocation2 + $0x48] sm:$0xff] %vm672, %v3282
        %3295 = vst.msk [vmem:[#allocation2 + $0x50] sm:$0xff] %vm672, %v3283
        %3296 = vst.msk [vmem:[#allocation2 + $0x58] sm:$0xff] %vm672, %v3284
        %v3297 = vld [vmem:[#allocation2] sm:$0xff]
        %v3298 = vld [vmem:[#allocation2 + $0x8] sm:$0xff]
        %v3299 = vld [vmem:[#allocation2 + $0x10] sm:$0xff]
        %v3300 = vld [vmem:[#allocation2 + $0x18] sm:$0xff]
        %v3301 = vld [vmem:[#allocation2 + $0x20] sm:$0xff]
        %v3302 = vld [vmem:[#allocation2 + $0x28] sm:$0xff]
        %v3303 = vld [vmem:[#allocation2 + $0x30] sm:$0xff]
        %v3304 = vld [vmem:[#allocation2 + $0x38] sm:$0xff]
        %v3305 = vld [vmem:[#allocation2 + $0x40] sm:$0xff]
        %v3306 = vld [vmem:[#allocation2 + $0x48] sm:$0xff]
        %v3307 = vld [vmem:[#allocation2 + $0x50] sm:$0xff]
        %v3308 = vld [vmem:[#allocation2 + $0x58] sm:$0xff]
        %v3309 = vld [vmem:[%s7] sm:$0xff]
        %v3310 = vld [vmem:[%s7 + $0x8] sm:$0xff]
        %v3311 = vld [vmem:[%s7 + $0x10] sm:$0xff]
        %v3312 = vld [vmem:[%s7 + $0x18] sm:$0xff]
        %v3313 = vld [vmem:[%s8] sm:$0x1]
        %v3315 = vlaneseq
        %v3316 = vshrl.u32 %v3315, 7
        %v3317 = vsub.s32 0, %v3316
        %v3318 = vrot.slane %v3313, %v3317
        %v3321 = vsel %vm672, %v3297, 0
        %v3324 = vsel %vm672, %v3298, 0
        %v3327 = vsel %vm672, %v3299, 0
        %v3330 = vsel %vm672, %v3300, 0
        %v3333 = vsel %vm672, %v3301, 0
        %v3336 = vsel %vm672, %v3302, 0
        %v3339 = vsel %vm672, %v3303, 0
        %v3342 = vsel %vm672, %v3304, 0
        %v3345 = vsel %vm672, %v3305, 0
        %v3348 = vsel %vm672, %v3306, 0
        %v3351 = vsel %vm672, %v3307, 0
        %v3354 = vsel %vm672, %v3308, 0
        %3356 = vmatprep.subr.mxu0 0.0
        %3357 = vmatpush1.msra.mxu0 0.0
        %3358 = vmatprep.subr.mxu0 0.0
        %3359 = vmatpush1.msra.mxu0 0.0
        %3360 = vmatprep.subr.mxu0 0.0
        %3361 = vmatpush1.msra.mxu0 0.0
        %3362 = vmatprep.subr.mxu0 0.0
        %3363 = vmatpush1.msra.mxu0 0.0
        %3364 = vmatprep.subr.mxu0 0.0
        %3365 = vmatpush1.msra.mxu0 0.0
        %3366 = vmatprep.subr.mxu0 0.0
        %3367 = vmatpush1.msra.mxu0 0.0
        %3368 = vmatprep.subr.mxu0 0.0
        %3369 = vmatpush1.msra.mxu0 0.0
        %3370 = vmatprep.subr.mxu0 0.0
        %3371 = vmatpush1.msra.mxu0 0.0
        %3372 = vmatprep.subr.mxu0 0.0
        %3373 = vmatpush1.msra.mxu0 0.0
        %3374 = vmatprep.subr.mxu0 0.0
        %3375 = vmatpush1.msra.mxu0 0.0
        %3376 = vmatprep.subr.mxu0 0.0
        %3377 = vmatpush1.msra.mxu0 0.0
        %3378 = vmatprep.subr.mxu0 0.0
        %3379 = vmatpush1.msra.mxu0 0.0
        %3380 = vmatprep.subr.mxu0 0.0
        %3381 = vmatpush1.msra.mxu0 %v3312
        %3382 = vmatprep.subr.mxu0 0.0
        %3383 = vmatpush1.msra.mxu0 %v3311
        %3384 = vmatprep.subr.mxu0 0.0
        %3385 = vmatpush1.msra.mxu0 %v3310
        %3386 = vmatprep.subr.mxu0 0.0
        %3387 = vmatpush1.msra.mxu0 %v3309
        %3388 = vmatprep.subr.mxu0 0.0
        %3389 = vmatpush2.msra.mxu0 0.0
        %3390 = vmatprep.subr.mxu0 0.0
        %3391 = vmatpush2.msra.mxu0 0.0
        %3392 = vmatprep.subr.mxu0 0.0
        %3393 = vmatpush2.msra.mxu0 0.0
        %3394 = vmatprep.subr.mxu0 0.0
        %3395 = vmatpush2.msra.mxu0 0.0
        %3396 = vmatprep.subr.mxu0 0.0
        %3397 = vmatpush2.msra.mxu0 0.0
        %3398 = vmatprep.subr.mxu0 0.0
        %3399 = vmatpush2.msra.mxu0 0.0
        %3400 = vmatprep.subr.mxu0 0.0
        %3401 = vmatpush2.msra.mxu0 0.0
        %3402 = vmatprep.subr.mxu0 0.0
        %3403 = vmatpush2.msra.mxu0 0.0
        %3404 = vmatprep.subr.mxu0 0.0
        %3405 = vmatpush2.msra.mxu0 0.0
        %3406 = vmatprep.subr.mxu0 0.0
        %3407 = vmatpush2.msra.mxu0 0.0
        %3408 = vmatprep.subr.mxu0 0.0
        %3409 = vmatpush2.msra.mxu0 0.0
        %3410 = vmatprep.subr.mxu0 0.0
        %3411 = vmatpush2.msra.mxu0 0.0
        %3412 = vmatprep.subr.mxu0 0.0
        %3413 = vmatpush2.msra.mxu0 0.0
        %3414 = vmatprep.subr.mxu0 0.0
        %3415 = vmatpush2.msra.mxu0 0.0
        %3416 = vmatprep.subr.mxu0 0.0
        %3417 = vmatpush2.msra.mxu0 0.0
        %3418 = vmatprep.subr.mxu0 0.0
        %3419 = vmatpush2.msra.mxu0 0.0
        %3420 = vmatprep.mubr.f32.mxu0 0.0
        %3421 = vmatmul.mubr.f32.gmra.mxu0 %v3321
        %v3422 = vpop.f32.mrf.mxu0
        %v3423 = vadd.f32 %v3318, %v3422
        %v3424 = vpop.f32.mrf.mxu0
        %3425 = vmatprep.mubr.f32.mxu0 0.0
        %3426 = vmatmul.mubr.f32.gmra.mxu0 %v3324
        %v3427 = vpop.f32.mrf.mxu0
        %v3428 = vadd.f32 %v3318, %v3427
        %v3429 = vpop.f32.mrf.mxu0
        %3430 = vmatprep.mubr.f32.mxu0 0.0
        %3431 = vmatmul.mubr.f32.gmra.mxu0 %v3327
        %v3432 = vpop.f32.mrf.mxu0
        %v3433 = vadd.f32 %v3318, %v3432
        %v3434 = vpop.f32.mrf.mxu0
        %3435 = vmatprep.mubr.f32.mxu0 0.0
        %3436 = vmatmul.mubr.f32.gmra.mxu0 %v3330
        %v3437 = vpop.f32.mrf.mxu0
        %v3438 = vadd.f32 %v3318, %v3437
        %v3439 = vpop.f32.mrf.mxu0
        %3440 = vmatprep.mubr.f32.mxu0 0.0
        %3441 = vmatmul.mubr.f32.gmra.mxu0 %v3333
        %v3442 = vpop.f32.mrf.mxu0
        %v3443 = vadd.f32 %v3318, %v3442
        %v3444 = vpop.f32.mrf.mxu0
        %3445 = vmatprep.mubr.f32.mxu0 0.0
        %3446 = vmatmul.mubr.f32.gmra.mxu0 %v3336
        %v3447 = vpop.f32.mrf.mxu0
        %v3448 = vadd.f32 %v3318, %v3447
        %v3449 = vpop.f32.mrf.mxu0
        %3450 = vmatprep.mubr.f32.mxu0 0.0
        %3451 = vmatmul.mubr.f32.gmra.mxu0 %v3339
        %v3452 = vpop.f32.mrf.mxu0
        %v3453 = vadd.f32 %v3318, %v3452
        %v3454 = vpop.f32.mrf.mxu0
        %3455 = vmatprep.mubr.f32.mxu0 0.0
        %3456 = vmatmul.mubr.f32.gmra.mxu0 %v3342
        %v3457 = vpop.f32.mrf.mxu0
        %v3458 = vadd.f32 %v3318, %v3457
        %v3459 = vpop.f32.mrf.mxu0
        %3460 = vmatprep.mubr.f32.mxu0 0.0
        %3461 = vmatmul.mubr.f32.gmra.mxu0 %v3345
        %v3462 = vpop.f32.mrf.mxu0
        %v3463 = vadd.f32 %v3318, %v3462
        %v3464 = vpop.f32.mrf.mxu0
        %3465 = vmatprep.mubr.f32.mxu0 0.0
        %3466 = vmatmul.mubr.f32.gmra.mxu0 %v3348
        %v3467 = vpop.f32.mrf.mxu0
        %v3468 = vadd.f32 %v3318, %v3467
        %v3469 = vpop.f32.mrf.mxu0
        %3470 = vmatprep.mubr.f32.mxu0 0.0
        %3471 = vmatmul.mubr.f32.gmra.mxu0 %v3351
        %v3472 = vpop.f32.mrf.mxu0
        %v3473 = vadd.f32 %v3318, %v3472
        %v3474 = vpop.f32.mrf.mxu0
        %3475 = vmatprep.mubr.f32.mxu0 0.0
        %3476 = vmatmul.mubr.f32.gmra.mxu0 %v3354
        %v3477 = vpop.f32.mrf.mxu0
        %v3478 = vadd.f32 %v3318, %v3477
        %v3479 = vpop.f32.mrf.mxu0
        %3480 = vdwg.mxu0
        %v3481 = vmax.f32 %v3423, 0.0
        %v3482 = vmax.f32 %v3428, 0.0
        %v3483 = vmax.f32 %v3433, 0.0
        %v3484 = vmax.f32 %v3438, 0.0
        %v3485 = vmax.f32 %v3443, 0.0
        %v3486 = vmax.f32 %v3448, 0.0
        %v3487 = vmax.f32 %v3453, 0.0
        %v3488 = vmax.f32 %v3458, 0.0
        %v3489 = vmax.f32 %v3463, 0.0
        %v3490 = vmax.f32 %v3468, 0.0
        %v3491 = vmax.f32 %v3473, 0.0
        %v3492 = vmax.f32 %v3478, 0.0
        %v3494 = vsel %vm672, %v1545, 0
        %3496 = vmatprep.subr.mxu0 0.0
        %3497 = vmatpush1.msra.mxu0 0.0
        %3498 = vmatprep.subr.mxu0 0.0
        %3499 = vmatpush1.msra.mxu0 0.0
        %3500 = vmatprep.subr.mxu0 0.0
        %3501 = vmatpush1.msra.mxu0 0.0
        %3502 = vmatprep.subr.mxu0 0.0
        %3503 = vmatpush1.msra.mxu0 0.0
        %3504 = vmatprep.subr.mxu0 0.0
        %3505 = vmatpush1.msra.mxu0 0.0
        %3506 = vmatprep.subr.mxu0 0.0
        %3507 = vmatpush1.msra.mxu0 0.0
        %3508 = vmatprep.subr.mxu0 0.0
        %3509 = vmatpush1.msra.mxu0 0.0
        %3510 = vmatprep.subr.mxu0 0.0
        %3511 = vmatpush1.msra.mxu0 0.0
        %3512 = vmatprep.subr.mxu0 0.0
        %3513 = vmatpush1.msra.mxu0 0.0
        %3514 = vmatprep.subr.mxu0 0.0
        %3515 = vmatpush1.msra.mxu0 0.0
        %3516 = vmatprep.subr.mxu0 0.0
        %3517 = vmatpush1.msra.mxu0 0.0
        %3518 = vmatprep.subr.mxu0 0.0
        %3519 = vmatpush1.msra.mxu0 0.0
        %3520 = vmatprep.subr.mxu0 0.0
        %3521 = vmatpush1.msra.mxu0 %v3312
        %3522 = vmatprep.subr.mxu0 0.0
        %3523 = vmatpush1.msra.mxu0 %v3311
        %3524 = vmatprep.subr.mxu0 0.0
        %3525 = vmatpush1.msra.mxu0 %v3310
        %3526 = vmatprep.subr.mxu0 0.0
        %3527 = vmatpush1.msra.mxu0 %v3309
        %3528 = vmatprep.subr.mxu0 0.0
        %3529 = vmatpush2.msra.mxu0 0.0
        %3530 = vmatprep.subr.mxu0 0.0
        %3531 = vmatpush2.msra.mxu0 0.0
        %3532 = vmatprep.subr.mxu0 0.0
        %3533 = vmatpush2.msra.mxu0 0.0
        %3534 = vmatprep.subr.mxu0 0.0
        %3535 = vmatpush2.msra.mxu0 0.0
        %3536 = vmatprep.subr.mxu0 0.0
        %3537 = vmatpush2.msra.mxu0 0.0
        %3538 = vmatprep.subr.mxu0 0.0
        %3539 = vmatpush2.msra.mxu0 0.0
        %3540 = vmatprep.subr.mxu0 0.0
        %3541 = vmatpush2.msra.mxu0 0.0
        %3542 = vmatprep.subr.mxu0 0.0
        %3543 = vmatpush2.msra.mxu0 0.0
        %3544 = vmatprep.subr.mxu0 0.0
        %3545 = vmatpush2.msra.mxu0 0.0
        %3546 = vmatprep.subr.mxu0 0.0
        %3547 = vmatpush2.msra.mxu0 0.0
        %3548 = vmatprep.subr.mxu0 0.0
        %3549 = vmatpush2.msra.mxu0 0.0
        %3550 = vmatprep.subr.mxu0 0.0
        %3551 = vmatpush2.msra.mxu0 0.0
        %3552 = vmatprep.subr.mxu0 0.0
        %3553 = vmatpush2.msra.mxu0 0.0
        %3554 = vmatprep.subr.mxu0 0.0
        %3555 = vmatpush2.msra.mxu0 0.0
        %3556 = vmatprep.subr.mxu0 0.0
        %3557 = vmatpush2.msra.mxu0 0.0
        %3558 = vmatprep.subr.mxu0 0.0
        %3559 = vmatpush2.msra.mxu0 0.0
        %3560 = vmatprep.mubr.f32.mxu0 0.0
        %3561 = vmatmul.mubr.f32.gmra.mxu0 %v3494
        %v3562 = vpop.f32.mrf.mxu0
        %v3563 = vadd.f32 %v3318, %v3562
        %v3564 = vpop.f32.mrf.mxu0
        %3565 = vdwg.mxu0
        %v3566 = vmax.f32 %v3563, 0.0
        %v3567 = vld [vmem:[%s9] sm:$0xff]
        %v3568 = vld [vmem:[%s9 + $0x8] sm:$0xff]
        %v3569 = vld [vmem:[%s9 + $0x10] sm:$0xff]
        %v3570 = vld [vmem:[%s9 + $0x18] sm:$0xff]
        %v3571 = vld [vmem:[%s9 + $0x20] sm:$0xff]
        %v3572 = vld [vmem:[%s9 + $0x28] sm:$0xff]
        %v3573 = vld [vmem:[%s9 + $0x30] sm:$0xff]
        %v3574 = vld [vmem:[%s9 + $0x38] sm:$0xff]
        %v3575 = vld [vmem:[%s9 + $0x40] sm:$0xff]
        %v3576 = vld [vmem:[%s9 + $0x48] sm:$0xff]
        %v3577 = vld [vmem:[%s9 + $0x50] sm:$0xff]
        %v3578 = vld [vmem:[%s9 + $0x58] sm:$0xff]
        %vm3579 = vcmask 64512
        %v3581 = vsel %vm3579, %v3567, 0
        %v3584 = vsel %vm3579, %v3568, 0
        %v3587 = vsel %vm3579, %v3569, 0
        %v3590 = vsel %vm3579, %v3570, 0
        %v3593 = vsel %vm3579, %v3571, 0
        %v3596 = vsel %vm3579, %v3572, 0
        %v3599 = vsel %vm3579, %v3573, 0
        %v3602 = vsel %vm3579, %v3574, 0
        %v3605 = vsel %vm3579, %v3575, 0
        %v3608 = vsel %vm3579, %v3576, 0
        %v3611 = vsel %vm3579, %v3577, 0
        %v3614 = vsel %vm3579, %v3578, 0
        %3616 = vmatprep.subr.mxu0 0.0
        %3617 = vmatpush1.msra.mxu0 0.0
        %3618 = vmatprep.subr.mxu0 0.0
        %3619 = vmatpush1.msra.mxu0 0.0
        %3620 = vmatprep.subr.mxu0 0.0
        %3621 = vmatpush1.msra.mxu0 0.0
        %3622 = vmatprep.subr.mxu0 0.0
        %3623 = vmatpush1.msra.mxu0 0.0
        %3624 = vmatprep.subr.mxu0 0.0
        %3625 = vmatpush1.msra.mxu0 0.0
        %3626 = vmatprep.subr.mxu0 0.0
        %3627 = vmatpush1.msra.mxu0 0.0
        %3628 = vmatprep.subr.mxu0 0.0
        %3629 = vmatpush1.msra.mxu0 0.0
        %3630 = vmatprep.subr.mxu0 0.0
        %3631 = vmatpush1.msra.mxu0 0.0
        %3632 = vmatprep.subr.mxu0 0.0
        %3633 = vmatpush1.msra.mxu0 0.0
        %3634 = vmatprep.subr.mxu0 0.0
        %3635 = vmatpush1.msra.mxu0 0.0
        %3636 = vmatprep.subr.mxu0 0.0
        %3637 = vmatpush1.msra.mxu0 0.0
        %3638 = vmatprep.subr.mxu0 0.0
        %3639 = vmatpush1.msra.mxu0 0.0
        %3640 = vmatprep.subr.mxu0 0.0
        %3641 = vmatpush1.msra.mxu0 0.0
        %3642 = vmatprep.subr.mxu0 0.0
        %3643 = vmatpush1.msra.mxu0 0.0
        %3644 = vmatprep.subr.mxu0 0.0
        %3645 = vmatpush1.msra.mxu0 0.0
        %3646 = vmatprep.subr.mxu0 0.0
        %3647 = vmatpush1.msra.mxu0 %v3566
        %3648 = vmatprep.subr.mxu0 0.0
        %3649 = vmatpush2.msra.mxu0 0.0
        %3650 = vmatprep.subr.mxu0 0.0
        %3651 = vmatpush2.msra.mxu0 0.0
        %3652 = vmatprep.subr.mxu0 0.0
        %3653 = vmatpush2.msra.mxu0 0.0
        %3654 = vmatprep.subr.mxu0 0.0
        %3655 = vmatpush2.msra.mxu0 0.0
        %3656 = vmatprep.subr.mxu0 0.0
        %3657 = vmatpush2.msra.mxu0 0.0
        %3658 = vmatprep.subr.mxu0 0.0
        %3659 = vmatpush2.msra.mxu0 0.0
        %3660 = vmatprep.subr.mxu0 0.0
        %3661 = vmatpush2.msra.mxu0 0.0
        %3662 = vmatprep.subr.mxu0 0.0
        %3663 = vmatpush2.msra.mxu0 0.0
        %3664 = vmatprep.subr.mxu0 0.0
        %3665 = vmatpush2.msra.mxu0 0.0
        %3666 = vmatprep.subr.mxu0 0.0
        %3667 = vmatpush2.msra.mxu0 0.0
        %3668 = vmatprep.subr.mxu0 0.0
        %3669 = vmatpush2.msra.mxu0 0.0
        %3670 = vmatprep.subr.mxu0 0.0
        %3671 = vmatpush2.msra.mxu0 0.0
        %3672 = vmatprep.subr.mxu0 0.0
        %3673 = vmatpush2.msra.mxu0 0.0
        %3674 = vmatprep.subr.mxu0 0.0
        %3675 = vmatpush2.msra.mxu0 0.0
        %3676 = vmatprep.subr.mxu0 0.0
        %3677 = vmatpush2.msra.mxu0 0.0
        %3678 = vmatprep.subr.mxu0 0.0
        %3679 = vmatpush2.msra.mxu0 0.0
        %3680 = vmatprep.mubr.f32.mxu0 0.0
        %3681 = vmatmul.mubr.f32.gmra.mxu0 %v3581
        %v3682 = vpop.f32.mrf.mxu0
        %v3683 = vadd.f32 0.0, %v3682
        %v3684 = vpop.f32.mrf.mxu0
        %3685 = vmatprep.mubr.f32.mxu0 0.0
        %3686 = vmatmul.mubr.f32.gmra.mxu0 %v3584
        %v3687 = vpop.f32.mrf.mxu0
        %v3688 = vadd.f32 0.0, %v3687
        %v3689 = vpop.f32.mrf.mxu0
        %3690 = vmatprep.mubr.f32.mxu0 0.0
        %3691 = vmatmul.mubr.f32.gmra.mxu0 %v3587
        %v3692 = vpop.f32.mrf.mxu0
        %v3693 = vadd.f32 0.0, %v3692
        %v3694 = vpop.f32.mrf.mxu0
        %3695 = vmatprep.mubr.f32.mxu0 0.0
        %3696 = vmatmul.mubr.f32.gmra.mxu0 %v3590
        %v3697 = vpop.f32.mrf.mxu0
        %v3698 = vadd.f32 0.0, %v3697
        %v3699 = vpop.f32.mrf.mxu0
        %3700 = vmatprep.mubr.f32.mxu0 0.0
        %3701 = vmatmul.mubr.f32.gmra.mxu0 %v3593
        %v3702 = vpop.f32.mrf.mxu0
        %v3703 = vadd.f32 0.0, %v3702
        %v3704 = vpop.f32.mrf.mxu0
        %3705 = vmatprep.mubr.f32.mxu0 0.0
        %3706 = vmatmul.mubr.f32.gmra.mxu0 %v3596
        %v3707 = vpop.f32.mrf.mxu0
        %v3708 = vadd.f32 0.0, %v3707
        %v3709 = vpop.f32.mrf.mxu0
        %3710 = vmatprep.mubr.f32.mxu0 0.0
        %3711 = vmatmul.mubr.f32.gmra.mxu0 %v3599
        %v3712 = vpop.f32.mrf.mxu0
        %v3713 = vadd.f32 0.0, %v3712
        %v3714 = vpop.f32.mrf.mxu0
        %3715 = vmatprep.mubr.f32.mxu0 0.0
        %3716 = vmatmul.mubr.f32.gmra.mxu0 %v3602
        %v3717 = vpop.f32.mrf.mxu0
        %v3718 = vadd.f32 0.0, %v3717
        %v3719 = vpop.f32.mrf.mxu0
        %3720 = vmatprep.mubr.f32.mxu0 0.0
        %3721 = vmatmul.mubr.f32.gmra.mxu0 %v3605
        %v3722 = vpop.f32.mrf.mxu0
        %v3723 = vadd.f32 0.0, %v3722
        %v3724 = vpop.f32.mrf.mxu0
        %3725 = vmatprep.mubr.f32.mxu0 0.0
        %3726 = vmatmul.mubr.f32.gmra.mxu0 %v3608
        %v3727 = vpop.f32.mrf.mxu0
        %v3728 = vadd.f32 0.0, %v3727
        %v3729 = vpop.f32.mrf.mxu0
        %3730 = vmatprep.mubr.f32.mxu0 0.0
        %3731 = vmatmul.mubr.f32.gmra.mxu0 %v3611
        %v3732 = vpop.f32.mrf.mxu0
        %v3733 = vadd.f32 0.0, %v3732
        %v3734 = vpop.f32.mrf.mxu0
        %3735 = vmatprep.mubr.f32.mxu0 0.0
        %3736 = vmatmul.mubr.f32.gmra.mxu0 %v3614
        %v3737 = vpop.f32.mrf.mxu0
        %v3738 = vadd.f32 0.0, %v3737
        %v3739 = vpop.f32.mrf.mxu0
        %3740 = vdwg.mxu0
        %v3741 = vmul.f32 %v3481, %v3683
        %v3742 = vmul.f32 %v3482, %v3688
        %v3743 = vmul.f32 %v3483, %v3693
        %v3744 = vmul.f32 %v3484, %v3698
        %v3745 = vmul.f32 %v3485, %v3703
        %v3746 = vmul.f32 %v3486, %v3708
        %v3747 = vmul.f32 %v3487, %v3713
        %v3748 = vmul.f32 %v3488, %v3718
        %v3749 = vmul.f32 %v3489, %v3723
        %v3750 = vmul.f32 %v3490, %v3728
        %v3751 = vmul.f32 %v3491, %v3733
        %v3752 = vmul.f32 %v3492, %v3738
        %v3753 = vsel %vm672, %v3741, 0.0
        %3754 = vadd.xlane.f32.xlu0 %v3753
        %v3755 = vpop.xlane.xlu0 %3754
        %v3756 = vsel %vm672, %v3742, 0.0
        %3757 = vadd.xlane.f32.xlu0 %v3756
        %v3758 = vpop.xlane.xlu0 %3757
        %v3759 = vsel %vm672, %v3743, 0.0
        %3760 = vadd.xlane.f32.xlu0 %v3759
        %v3761 = vpop.xlane.xlu0 %3760
        %v3762 = vsel %vm672, %v3744, 0.0
        %3763 = vadd.xlane.f32.xlu0 %v3762
        %v3764 = vpop.xlane.xlu0 %3763
        %v3765 = vsel %vm672, %v3745, 0.0
        %3766 = vadd.xlane.f32.xlu0 %v3765
        %v3767 = vpop.xlane.xlu0 %3766
        %v3768 = vsel %vm672, %v3746, 0.0
        %3769 = vadd.xlane.f32.xlu0 %v3768
        %v3770 = vpop.xlane.xlu0 %3769
        %v3771 = vsel %vm672, %v3747, 0.0
        %3772 = vadd.xlane.f32.xlu0 %v3771
        %v3773 = vpop.xlane.xlu0 %3772
        %v3774 = vsel %vm672, %v3748, 0.0
        %3775 = vadd.xlane.f32.xlu0 %v3774
        %v3776 = vpop.xlane.xlu0 %3775
        %v3777 = vsel %vm672, %v3749, 0.0
        %3778 = vadd.xlane.f32.xlu0 %v3777
        %v3779 = vpop.xlane.xlu0 %3778
        %v3780 = vsel %vm672, %v3750, 0.0
        %3781 = vadd.xlane.f32.xlu0 %v3780
        %v3782 = vpop.xlane.xlu0 %3781
        %v3783 = vsel %vm672, %v3751, 0.0
        %3784 = vadd.xlane.f32.xlu0 %v3783
        %v3785 = vpop.xlane.xlu0 %3784
        %v3786 = vsel %vm672, %v3752, 0.0
        %3787 = vadd.xlane.f32.xlu0 %v3786
        %v3788 = vpop.xlane.xlu0 %3787
        %v3789 = vtanh.pop %v3755
        %v3790 = vtanh.pop %v3758
        %v3791 = vtanh.pop %v3761
        %v3792 = vtanh.pop %v3764
        %v3793 = vtanh.pop %v3767
        %v3794 = vtanh.pop %v3770
        %v3795 = vtanh.pop %v3773
        %v3796 = vtanh.pop %v3776
        %v3797 = vtanh.pop %v3779
        %v3798 = vtanh.pop %v3782
        %v3799 = vtanh.pop %v3785
        %v3800 = vtanh.pop %v3788
        %v3801 = vld [vmem:[%s10] sm:$0xff]
        %v3802 = vmul.f32 %v3789, %v3481
        %v3803 = vmul.f32 %v3790, %v3482
        %v3804 = vmul.f32 %v3791, %v3483
        %v3805 = vmul.f32 %v3792, %v3484
        %v3806 = vmul.f32 %v3793, %v3485
        %v3807 = vmul.f32 %v3794, %v3486
        %v3808 = vmul.f32 %v3795, %v3487
        %v3809 = vmul.f32 %v3796, %v3488
        %v3810 = vmul.f32 %v3797, %v3489
        %v3811 = vmul.f32 %v3798, %v3490
        %v3812 = vmul.f32 %v3799, %v3491
        %v3813 = vmul.f32 %v3800, %v3492
        %vm3814 = vcmask 785408
        %v3816 = vsel %vm3814, %v3801, 0
        %3818 = vmatprep.subr.mxu0 0.0
        %3819 = vmatpush1.msra.mxu0 0.0
        %3820 = vmatprep.subr.mxu0 0.0
        %3821 = vmatpush1.msra.mxu0 0.0
        %3822 = vmatprep.subr.mxu0 0.0
        %3823 = vmatpush1.msra.mxu0 0.0
        %3824 = vmatprep.subr.mxu0 0.0
        %3825 = vmatpush1.msra.mxu0 0.0
        %3826 = vmatprep.subr.mxu0 0.0
        %3827 = vmatpush1.msra.mxu0 %v3813
        %3828 = vmatprep.subr.mxu0 0.0
        %3829 = vmatpush1.msra.mxu0 %v3812
        %3830 = vmatprep.subr.mxu0 0.0
        %3831 = vmatpush1.msra.mxu0 %v3811
        %3832 = vmatprep.subr.mxu0 0.0
        %3833 = vmatpush1.msra.mxu0 %v3810
        %3834 = vmatprep.subr.mxu0 0.0
        %3835 = vmatpush1.msra.mxu0 %v3809
        %3836 = vmatprep.subr.mxu0 0.0
        %3837 = vmatpush1.msra.mxu0 %v3808
        %3838 = vmatprep.subr.mxu0 0.0
        %3839 = vmatpush1.msra.mxu0 %v3807
        %3840 = vmatprep.subr.mxu0 0.0
        %3841 = vmatpush1.msra.mxu0 %v3806
        %3842 = vmatprep.subr.mxu0 0.0
        %3843 = vmatpush1.msra.mxu0 %v3805
        %3844 = vmatprep.subr.mxu0 0.0
        %3845 = vmatpush1.msra.mxu0 %v3804
        %3846 = vmatprep.subr.mxu0 0.0
        %3847 = vmatpush1.msra.mxu0 %v3803
        %3848 = vmatprep.subr.mxu0 0.0
        %3849 = vmatpush1.msra.mxu0 %v3802
        %3850 = vmatprep.subr.mxu0 0.0
        %3851 = vmatpush2.msra.mxu0 0.0
        %3852 = vmatprep.subr.mxu0 0.0
        %3853 = vmatpush2.msra.mxu0 0.0
        %3854 = vmatprep.subr.mxu0 0.0
        %3855 = vmatpush2.msra.mxu0 0.0
        %3856 = vmatprep.subr.mxu0 0.0
        %3857 = vmatpush2.msra.mxu0 0.0
        %3858 = vmatprep.subr.mxu0 0.0
        %3859 = vmatpush2.msra.mxu0 0.0
        %3860 = vmatprep.subr.mxu0 0.0
        %3861 = vmatpush2.msra.mxu0 0.0
        %3862 = vmatprep.subr.mxu0 0.0
        %3863 = vmatpush2.msra.mxu0 0.0
        %3864 = vmatprep.subr.mxu0 0.0
        %3865 = vmatpush2.msra.mxu0 0.0
        %3866 = vmatprep.subr.mxu0 0.0
        %3867 = vmatpush2.msra.mxu0 0.0
        %3868 = vmatprep.subr.mxu0 0.0
        %3869 = vmatpush2.msra.mxu0 0.0
        %3870 = vmatprep.subr.mxu0 0.0
        %3871 = vmatpush2.msra.mxu0 0.0
        %3872 = vmatprep.subr.mxu0 0.0
        %3873 = vmatpush2.msra.mxu0 0.0
        %3874 = vmatprep.subr.mxu0 0.0
        %3875 = vmatpush2.msra.mxu0 0.0
        %3876 = vmatprep.subr.mxu0 0.0
        %3877 = vmatpush2.msra.mxu0 0.0
        %3878 = vmatprep.subr.mxu0 0.0
        %3879 = vmatpush2.msra.mxu0 0.0
        %3880 = vmatprep.subr.mxu0 0.0
        %3881 = vmatpush2.msra.mxu0 0.0
        %3882 = vmatprep.mubr.f32.mxu0 0.0
        %3883 = vmatmul.mubr.f32.gmra.mxu0 %v3816
        %v3884 = vpop.f32.mrf.mxu0
        %v3885 = vadd.f32 0.0, %v3884
        %v3886 = vpop.f32.mrf.mxu0
        %3887 = vdwg.mxu0
        %v3888 = vld [vmem:[%s12] sm:$0xff]
        %v3889 = vld [vmem:[%s12 + $0x8] sm:$0xff]
        %v3890 = vld [vmem:[%s12 + $0x10] sm:$0xff]
        %v3891 = vld [vmem:[%s12 + $0x18] sm:$0xff]
        %v3892 = vld [vmem:[%s13] sm:$0xff]
        %v3893 = vld [vmem:[%s13 + $0x8] sm:$0xff]
        %v3894 = vld [vmem:[%s13 + $0x10] sm:$0xff]
        %v3895 = vld [vmem:[%s13 + $0x18] sm:$0xff]
        %v3897 = vsel %vm672, %v3885, 0
        %3899 = vmatprep.subr.mxu0 0.0
        %3900 = vmatpush1.msra.mxu0 0.0
        %3901 = vmatprep.subr.mxu0 0.0
        %3902 = vmatpush1.msra.mxu0 0.0
        %3903 = vmatprep.subr.mxu0 0.0
        %3904 = vmatpush1.msra.mxu0 0.0
        %3905 = vmatprep.subr.mxu0 0.0
        %3906 = vmatpush1.msra.mxu0 0.0
        %3907 = vmatprep.subr.mxu0 0.0
        %3908 = vmatpush1.msra.mxu0 0.0
        %3909 = vmatprep.subr.mxu0 0.0
        %3910 = vmatpush1.msra.mxu0 0.0
        %3911 = vmatprep.subr.mxu0 0.0
        %3912 = vmatpush1.msra.mxu0 0.0
        %3913 = vmatprep.subr.mxu0 0.0
        %3914 = vmatpush1.msra.mxu0 0.0
        %3915 = vmatprep.subr.mxu0 0.0
        %3916 = vmatpush1.msra.mxu0 0.0
        %3917 = vmatprep.subr.mxu0 0.0
        %3918 = vmatpush1.msra.mxu0 0.0
        %3919 = vmatprep.subr.mxu0 0.0
        %3920 = vmatpush1.msra.mxu0 0.0
        %3921 = vmatprep.subr.mxu0 0.0
        %3922 = vmatpush1.msra.mxu0 0.0
        %3923 = vmatprep.subr.mxu0 0.0
        %3924 = vmatpush1.msra.mxu0 %v3895
        %3925 = vmatprep.subr.mxu0 0.0
        %3926 = vmatpush1.msra.mxu0 %v3894
        %3927 = vmatprep.subr.mxu0 0.0
        %3928 = vmatpush1.msra.mxu0 %v3893
        %3929 = vmatprep.subr.mxu0 0.0
        %3930 = vmatpush1.msra.mxu0 %v3892
        %3931 = vmatprep.subr.mxu0 0.0
        %3932 = vmatpush2.msra.mxu0 0.0
        %3933 = vmatprep.subr.mxu0 0.0
        %3934 = vmatpush2.msra.mxu0 0.0
        %3935 = vmatprep.subr.mxu0 0.0
        %3936 = vmatpush2.msra.mxu0 0.0
        %3937 = vmatprep.subr.mxu0 0.0
        %3938 = vmatpush2.msra.mxu0 0.0
        %3939 = vmatprep.subr.mxu0 0.0
        %3940 = vmatpush2.msra.mxu0 0.0
        %3941 = vmatprep.subr.mxu0 0.0
        %3942 = vmatpush2.msra.mxu0 0.0
        %3943 = vmatprep.subr.mxu0 0.0
        %3944 = vmatpush2.msra.mxu0 0.0
        %3945 = vmatprep.subr.mxu0 0.0
        %3946 = vmatpush2.msra.mxu0 0.0
        %3947 = vmatprep.subr.mxu0 0.0
        %3948 = vmatpush2.msra.mxu0 0.0
        %3949 = vmatprep.subr.mxu0 0.0
        %3950 = vmatpush2.msra.mxu0 0.0
        %3951 = vmatprep.subr.mxu0 0.0
        %3952 = vmatpush2.msra.mxu0 0.0
        %3953 = vmatprep.subr.mxu0 0.0
        %3954 = vmatpush2.msra.mxu0 0.0
        %3955 = vmatprep.subr.mxu0 0.0
        %3956 = vmatpush2.msra.mxu0 0.0
        %3957 = vmatprep.subr.mxu0 0.0
        %3958 = vmatpush2.msra.mxu0 0.0
        %3959 = vmatprep.subr.mxu0 0.0
        %3960 = vmatpush2.msra.mxu0 0.0
        %3961 = vmatprep.subr.mxu0 0.0
        %3962 = vmatpush2.msra.mxu0 0.0
        %3963 = vmatprep.mubr.f32.mxu0 0.0
        %3964 = vmatmul.mubr.f32.gmra.mxu0 %v3897
        %v3965 = vpop.f32.mrf.mxu0
        %v3966 = vadd.f32 0.0, %v3965
        %v3967 = vpop.f32.mrf.mxu0
        %3968 = vdwg.mxu0
        %3969 = vmatprep.subr.mxu0 0.0
        %3970 = vmatpush1.msra.mxu0 0.0
        %3971 = vmatprep.subr.mxu0 0.0
        %3972 = vmatpush1.msra.mxu0 0.0
        %3973 = vmatprep.subr.mxu0 0.0
        %3974 = vmatpush1.msra.mxu0 0.0
        %3975 = vmatprep.subr.mxu0 0.0
        %3976 = vmatpush1.msra.mxu0 0.0
        %3977 = vmatprep.subr.mxu0 0.0
        %3978 = vmatpush1.msra.mxu0 0.0
        %3979 = vmatprep.subr.mxu0 0.0
        %3980 = vmatpush1.msra.mxu0 0.0
        %3981 = vmatprep.subr.mxu0 0.0
        %3982 = vmatpush1.msra.mxu0 0.0
        %3983 = vmatprep.subr.mxu0 0.0
        %3984 = vmatpush1.msra.mxu0 0.0
        %3985 = vmatprep.subr.mxu0 0.0
        %3986 = vmatpush1.msra.mxu0 0.0
        %3987 = vmatprep.subr.mxu0 0.0
        %3988 = vmatpush1.msra.mxu0 0.0
        %3989 = vmatprep.subr.mxu0 0.0
        %3990 = vmatpush1.msra.mxu0 0.0
        %3991 = vmatprep.subr.mxu0 0.0
        %3992 = vmatpush1.msra.mxu0 0.0
        %3993 = vmatprep.subr.mxu0 0.0
        %3994 = vmatpush1.msra.mxu0 %v3891
        %3995 = vmatprep.subr.mxu0 0.0
        %3996 = vmatpush1.msra.mxu0 %v3890
        %3997 = vmatprep.subr.mxu0 0.0
        %3998 = vmatpush1.msra.mxu0 %v3889
        %3999 = vmatprep.subr.mxu0 0.0
        %4000 = vmatpush1.msra.mxu0 %v3888
        %4001 = vmatprep.subr.mxu0 0.0
        %4002 = vmatpush2.msra.mxu0 0.0
        %4003 = vmatprep.subr.mxu0 0.0
        %4004 = vmatpush2.msra.mxu0 0.0
        %4005 = vmatprep.subr.mxu0 0.0
        %4006 = vmatpush2.msra.mxu0 0.0
        %4007 = vmatprep.subr.mxu0 0.0
        %4008 = vmatpush2.msra.mxu0 0.0
        %4009 = vmatprep.subr.mxu0 0.0
        %4010 = vmatpush2.msra.mxu0 0.0
        %4011 = vmatprep.subr.mxu0 0.0
        %4012 = vmatpush2.msra.mxu0 0.0
        %4013 = vmatprep.subr.mxu0 0.0
        %4014 = vmatpush2.msra.mxu0 0.0
        %4015 = vmatprep.subr.mxu0 0.0
        %4016 = vmatpush2.msra.mxu0 0.0
        %4017 = vmatprep.subr.mxu0 0.0
        %4018 = vmatpush2.msra.mxu0 0.0
        %4019 = vmatprep.subr.mxu0 0.0
        %4020 = vmatpush2.msra.mxu0 0.0
        %4021 = vmatprep.subr.mxu0 0.0
        %4022 = vmatpush2.msra.mxu0 0.0
        %4023 = vmatprep.subr.mxu0 0.0
        %4024 = vmatpush2.msra.mxu0 0.0
        %4025 = vmatprep.subr.mxu0 0.0
        %4026 = vmatpush2.msra.mxu0 0.0
        %4027 = vmatprep.subr.mxu0 0.0
        %4028 = vmatpush2.msra.mxu0 0.0
        %4029 = vmatprep.subr.mxu0 0.0
        %4030 = vmatpush2.msra.mxu0 0.0
        %4031 = vmatprep.subr.mxu0 0.0
        %4032 = vmatpush2.msra.mxu0 0.0
        %4033 = vmatprep.mubr.f32.mxu0 0.0
        %4034 = vmatmul.mubr.f32.gmra.mxu0 %v3494
        %v4035 = vpop.f32.mrf.mxu0
        %v4036 = vadd.f32 %v3966, %v4035
        %v4037 = vpop.f32.mrf.mxu0
        %4038 = vdwg.mxu0
        %v4039 = vld [vmem:[%s14] sm:$0x1]
        %v4041 = vlaneseq
        %v4042 = vshrl.u32 %v4041, 7
        %v4043 = vsub.s32 0, %v4042
        %v4044 = vrot.slane %v4039, %v4043
        %v4046 = vadd.f32 %v4036, %v4044
        %v4047 = vmax.f32 %v4046, 0.0
        %v4048 = vld [vmem:[%s15] sm:$0xff]
        %v4049 = vld [vmem:[%s15 + $0x8] sm:$0xff]
        %v4050 = vld [vmem:[%s15 + $0x10] sm:$0xff]
        %v4051 = vld [vmem:[%s15 + $0x18] sm:$0xff]
        %v4052 = vld [vmem:[%s15 + $0x20] sm:$0xff]
        %v4053 = vld [vmem:[%s15 + $0x28] sm:$0xff]
        %v4054 = vld [vmem:[%s15 + $0x30] sm:$0xff]
        %v4055 = vld [vmem:[%s15 + $0x38] sm:$0xff]
        %v4056 = vld [vmem:[%s16] sm:$0x1]
        %v4058 = vlaneseq
        %v4059 = vshrl.u32 %v4058, 7
        %v4060 = vsub.s32 0, %v4059
        %v4061 = vrot.slane %v4056, %v4060
        %v4064 = vsel %vm810, %v4047, 0
        %4066 = vmatprep.subr.mxu0 0.0
        %4067 = vmatpush1.msra.mxu0 0.0
        %4068 = vmatprep.subr.mxu0 0.0
        %4069 = vmatpush1.msra.mxu0 0.0
        %4070 = vmatprep.subr.mxu0 0.0
        %4071 = vmatpush1.msra.mxu0 0.0
        %4072 = vmatprep.subr.mxu0 0.0
        %4073 = vmatpush1.msra.mxu0 0.0
        %4074 = vmatprep.subr.mxu0 0.0
        %4075 = vmatpush1.msra.mxu0 0.0
        %4076 = vmatprep.subr.mxu0 0.0
        %4077 = vmatpush1.msra.mxu0 0.0
        %4078 = vmatprep.subr.mxu0 0.0
        %4079 = vmatpush1.msra.mxu0 0.0
        %4080 = vmatprep.subr.mxu0 0.0
        %4081 = vmatpush1.msra.mxu0 0.0
        %4082 = vmatprep.subr.mxu0 0.0
        %4083 = vmatpush1.msra.mxu0 %v4055
        %4084 = vmatprep.subr.mxu0 0.0
        %4085 = vmatpush1.msra.mxu0 %v4054
        %4086 = vmatprep.subr.mxu0 0.0
        %4087 = vmatpush1.msra.mxu0 %v4053
        %4088 = vmatprep.subr.mxu0 0.0
        %4089 = vmatpush1.msra.mxu0 %v4052
        %4090 = vmatprep.subr.mxu0 0.0
        %4091 = vmatpush1.msra.mxu0 %v4051
        %4092 = vmatprep.subr.mxu0 0.0
        %4093 = vmatpush1.msra.mxu0 %v4050
        %4094 = vmatprep.subr.mxu0 0.0
        %4095 = vmatpush1.msra.mxu0 %v4049
        %4096 = vmatprep.subr.mxu0 0.0
        %4097 = vmatpush1.msra.mxu0 %v4048
        %4098 = vmatprep.subr.mxu0 0.0
        %4099 = vmatpush2.msra.mxu0 0.0
        %4100 = vmatprep.subr.mxu0 0.0
        %4101 = vmatpush2.msra.mxu0 0.0
        %4102 = vmatprep.subr.mxu0 0.0
        %4103 = vmatpush2.msra.mxu0 0.0
        %4104 = vmatprep.subr.mxu0 0.0
        %4105 = vmatpush2.msra.mxu0 0.0
        %4106 = vmatprep.subr.mxu0 0.0
        %4107 = vmatpush2.msra.mxu0 0.0
        %4108 = vmatprep.subr.mxu0 0.0
        %4109 = vmatpush2.msra.mxu0 0.0
        %4110 = vmatprep.subr.mxu0 0.0
        %4111 = vmatpush2.msra.mxu0 0.0
        %4112 = vmatprep.subr.mxu0 0.0
        %4113 = vmatpush2.msra.mxu0 0.0
        %4114 = vmatprep.subr.mxu0 0.0
        %4115 = vmatpush2.msra.mxu0 0.0
        %4116 = vmatprep.subr.mxu0 0.0
        %4117 = vmatpush2.msra.mxu0 0.0
        %4118 = vmatprep.subr.mxu0 0.0
        %4119 = vmatpush2.msra.mxu0 0.0
        %4120 = vmatprep.subr.mxu0 0.0
        %4121 = vmatpush2.msra.mxu0 0.0
        %4122 = vmatprep.subr.mxu0 0.0
        %4123 = vmatpush2.msra.mxu0 0.0
        %4124 = vmatprep.subr.mxu0 0.0
        %4125 = vmatpush2.msra.mxu0 0.0
        %4126 = vmatprep.subr.mxu0 0.0
        %4127 = vmatpush2.msra.mxu0 0.0
        %4128 = vmatprep.subr.mxu0 0.0
        %4129 = vmatpush2.msra.mxu0 0.0
        %4130 = vmatprep.mubr.f32.mxu0 0.0
        %4131 = vmatmul.mubr.f32.gmra.mxu0 %v4064
        %v4132 = vpop.f32.mrf.mxu0
        %v4133 = vadd.f32 %v4061, %v4132
        %v4134 = vpop.f32.mrf.mxu0
        %4135 = vdwg.mxu0
        %v4136 = vmax.f32 %v4133, 0.0
        %v4137 = vld [vmem:[%s17] sm:$0xff]
        %v4138 = vld [vmem:[%s17 + $0x8] sm:$0xff]
        %v4139 = vld [vmem:[%s17 + $0x10] sm:$0xff]
        %v4140 = vld [vmem:[%s17 + $0x18] sm:$0xff]
        %v4141 = vld [vmem:[%s17 + $0x20] sm:$0xff]
        %v4142 = vld [vmem:[%s17 + $0x28] sm:$0xff]
        %v4143 = vld [vmem:[%s17 + $0x30] sm:$0xff]
        %v4144 = vld [vmem:[%s17 + $0x38] sm:$0xff]
        %v4145 = vld [vmem:[%s18] sm:$0x1]
        %v4147 = vlaneseq
        %v4148 = vshrl.u32 %v4147, 7
        %v4149 = vsub.s32 0, %v4148
        %v4150 = vrot.slane %v4145, %v4149
        %v4153 = vsel %vm810, %v4136, 0
        %4155 = vmatprep.subr.mxu0 0.0
        %4156 = vmatpush1.msra.mxu0 0.0
        %4157 = vmatprep.subr.mxu0 0.0
        %4158 = vmatpush1.msra.mxu0 0.0
        %4159 = vmatprep.subr.mxu0 0.0
        %4160 = vmatpush1.msra.mxu0 0.0
        %4161 = vmatprep.subr.mxu0 0.0
        %4162 = vmatpush1.msra.mxu0 0.0
        %4163 = vmatprep.subr.mxu0 0.0
        %4164 = vmatpush1.msra.mxu0 0.0
        %4165 = vmatprep.subr.mxu0 0.0
        %4166 = vmatpush1.msra.mxu0 0.0
        %4167 = vmatprep.subr.mxu0 0.0
        %4168 = vmatpush1.msra.mxu0 0.0
        %4169 = vmatprep.subr.mxu0 0.0
        %4170 = vmatpush1.msra.mxu0 0.0
        %4171 = vmatprep.subr.mxu0 0.0
        %4172 = vmatpush1.msra.mxu0 %v4144
        %4173 = vmatprep.subr.mxu0 0.0
        %4174 = vmatpush1.msra.mxu0 %v4143
        %4175 = vmatprep.subr.mxu0 0.0
        %4176 = vmatpush1.msra.mxu0 %v4142
        %4177 = vmatprep.subr.mxu0 0.0
        %4178 = vmatpush1.msra.mxu0 %v4141
        %4179 = vmatprep.subr.mxu0 0.0
        %4180 = vmatpush1.msra.mxu0 %v4140
        %4181 = vmatprep.subr.mxu0 0.0
        %4182 = vmatpush1.msra.mxu0 %v4139
        %4183 = vmatprep.subr.mxu0 0.0
        %4184 = vmatpush1.msra.mxu0 %v4138
        %4185 = vmatprep.subr.mxu0 0.0
        %4186 = vmatpush1.msra.mxu0 %v4137
        %4187 = vmatprep.subr.mxu0 0.0
        %4188 = vmatpush2.msra.mxu0 0.0
        %4189 = vmatprep.subr.mxu0 0.0
        %4190 = vmatpush2.msra.mxu0 0.0
        %4191 = vmatprep.subr.mxu0 0.0
        %4192 = vmatpush2.msra.mxu0 0.0
        %4193 = vmatprep.subr.mxu0 0.0
        %4194 = vmatpush2.msra.mxu0 0.0
        %4195 = vmatprep.subr.mxu0 0.0
        %4196 = vmatpush2.msra.mxu0 0.0
        %4197 = vmatprep.subr.mxu0 0.0
        %4198 = vmatpush2.msra.mxu0 0.0
        %4199 = vmatprep.subr.mxu0 0.0
        %4200 = vmatpush2.msra.mxu0 0.0
        %4201 = vmatprep.subr.mxu0 0.0
        %4202 = vmatpush2.msra.mxu0 0.0
        %4203 = vmatprep.subr.mxu0 0.0
        %4204 = vmatpush2.msra.mxu0 0.0
        %4205 = vmatprep.subr.mxu0 0.0
        %4206 = vmatpush2.msra.mxu0 0.0
        %4207 = vmatprep.subr.mxu0 0.0
        %4208 = vmatpush2.msra.mxu0 0.0
        %4209 = vmatprep.subr.mxu0 0.0
        %4210 = vmatpush2.msra.mxu0 0.0
        %4211 = vmatprep.subr.mxu0 0.0
        %4212 = vmatpush2.msra.mxu0 0.0
        %4213 = vmatprep.subr.mxu0 0.0
        %4214 = vmatpush2.msra.mxu0 0.0
        %4215 = vmatprep.subr.mxu0 0.0
        %4216 = vmatpush2.msra.mxu0 0.0
        %4217 = vmatprep.subr.mxu0 0.0
        %4218 = vmatpush2.msra.mxu0 0.0
        %4219 = vmatprep.mubr.f32.mxu0 0.0
        %4220 = vmatmul.mubr.f32.gmra.mxu0 %v4153
        %v4221 = vpop.f32.mrf.mxu0
        %v4222 = vadd.f32 %v4150, %v4221
        %v4223 = vpop.f32.mrf.mxu0
        %4224 = vdwg.mxu0
        %4225 = vst [vmem:[%s627] sm:$0xff] %v4222
        %s4226 = sand.u32 %s455, 1
        %s4227 = scalar_lea.sflag [#allocation5], %s4226
        %s4228 = sand.u32 %s455, 1
        %s4229 = smul.addr %s4228, 8
        %s4230 = scalar_lea.vmem [#allocation4], %s4229
        // Predicated region
        $region97: #{tpu_custom_call.1} parent=95 // pred_check
          %p4231 = pneg %p465
        $region98: #{tpu_custom_call.1} parent=95 // pred_check_branch
          %4233 = sbr.rel (%p4231) target = $region100
        $region99: #{tpu_custom_call.1} parent=95 // pred_region
          %s4235 = ssub.s32 128, 128
          %4236 = vsyncadd %s4227, %s4235
          %s4237 = smul.addr %s33, 128
          %s4238 = scalar_lea.hbm %s19, %s4237
          %s4240 = sshll.u32 %s4230, 4
          %s4241 = int_to_ptr.vmem [resolvable:$true] %s4240
          %4243 = dma.vmem_to_hbm [thread:$0]  %s4241, 128, %s4238, %s4227
        $region100: #{tpu_custom_call.1} parent=95 // pred_fallthru
          _
      $region96: #{tpu_custom_call.1} parent=5 // pred_fallthru
        _
      %p4244 = scmp.le.s32.totalorder 2, %s28
      // Predicated region
      $region101: #{tpu_custom_call.1} parent=5 // pred_check
        %p4245 = pneg %p4244
      $region102: #{tpu_custom_call.1} parent=5 // pred_check_branch
        %4247 = sbr.rel (%p4245) target = $region104
      $region103: #{tpu_custom_call.1} parent=5 // pred_region
        %s4248 = ssub.s32 %s28, 2
        // Predicated region
        $region105: #{tpu_custom_call.1} parent=103 // pred_check
          %p4249 = pneg %p471
        $region106: #{tpu_custom_call.1} parent=103 // pred_check_branch
          %4251 = sbr.rel (%p4249) target = $region108
        $region107: #{tpu_custom_call.1} parent=103 // pred_region
          %s4252 = sand.u32 %s456, 1
          %s4253 = scalar_lea.sflag [#allocation5], %s4252
          %s4254 = sand.u32 %s456, 1
          %s4255 = smul.addr %s4254, 8
          %s4256 = scalar_lea.vmem [#allocation4], %s4255
          %4257 = dma.done %s4253, 128
        $region108: #{tpu_custom_call.1} parent=103 // pred_fallthru
          _
      $region104: #{tpu_custom_call.1} parent=5 // pred_fallthru
        _
    $region6: #{tpu_custom_call.1} parent=1 // loop_footer
      %s32 = sadd.s32 1, %s28
    $region7: #{tpu_custom_call.1} parent=1 // loop_footer_branch
      %27 = sbr.rel target = $region3
    $region8: #{tpu_custom_call.1} parent=1 // loop_exit
      _
    %4258 = vsyncpa [#allocation5], 1
    %s4259 = scalar_lea.sflag [#allocation5], 1
    %4260 = vsyncpa %s4259, 1

</llo_original>
